<compile_context>
chip_gen: v7x
topology: tpu7x:2x2x1
jax: 0.10.0
libtpu: 0.0.40
codegen_flags: <defaults>
</compile_context>

<pallas_src>
import functools
import math

import jax
import jax.numpy as jnp
from jax.experimental import pallas as pl
from jax.experimental.pallas import tpu as pltpu


def _round_up(x, m):
    return ((x + m - 1) // m) * m


# ---------------------------------------------------------------------------
# Fused Pallas kernel: 4 conv blocks (as dense matmuls) + both heads
# ---------------------------------------------------------------------------
def _fused_kernel(x_ref, *refs, n_cls):
    """refs = [W1,b1,s1,t1, W2,b2,s2,t2, W3,b3,s3,t3, W4,b4,s4,t4, Wh,bh, out]."""
    o_ref = refs[-1]
    it = iter(refs[:-1])

    a = x_ref[...]                                  # (TB, F0) f32
    for _ in range(4):
        w_ref = next(it)
        b_ref = next(it)
        s_ref = next(it)
        t_ref = next(it)
        z = jnp.dot(a.astype(jnp.bfloat16), w_ref[...],
                    preferred_element_type=jnp.float32)
        z = z + b_ref[...]                          # conv bias
        z = jnp.where(z >= 0.0, z, 0.2 * z)         # LeakyReLU(0.2); Dropout2d eval = id
        a = z * s_ref[...] + t_ref[...]             # eval BatchNorm (identity layer 1)

    wh_ref = next(it)
    bh_ref = next(it)
    z = jnp.dot(a.astype(jnp.bfloat16), wh_ref[...],
                preferred_element_type=jnp.float32) + bh_ref[...]

    col = jax.lax.broadcasted_iota(jnp.int32, z.shape, 1)
    aux_mask = (col >= 1) & (col <= n_cls)
    logits = jnp.where(aux_mask, z, -jnp.inf)       # mask BEFORE exp
    m = jnp.max(logits, axis=-1, keepdims=True)
    e = jnp.exp(logits - m)                         # exp(-inf) = 0 on masked/pad cols
    aux = e / jnp.sum(e, axis=-1, keepdims=True)    # softmax(dim=1)
    adv = 1.0 / (1.0 + jnp.exp(-z))                 # sigmoid
    o_ref[...] = jnp.where(col == 0, adv, aux)      # lane-dense (TB, 128) store


# ---------------------------------------------------------------------------
# Wrapper
# ---------------------------------------------------------------------------
def ac_discriminator_forward(img_nchw, kparams, class_num):
    N = img_nchw.shape[0]
    flat = img_nchw.reshape(N, -1).astype(jnp.float32)   # NCHW flatten == CHW per image
    F0 = flat.shape[1]

    TB = min(256, _round_up(N, 8))
    Np = _round_up(N, TB)
    if Np != N:                                     # tiny one-time pad of the net input
        flat = jnp.pad(flat, ((0, Np - N), (0, 0)))

    inputs = [flat]
    in_specs = [pl.BlockSpec((TB, F0), lambda i: (i, 0))]
    for (w, b, s, t) in kparams["layers"]:
        inputs += [w, b, s, t]
        in_specs += [pl.BlockSpec(w.shape, lambda i: (0, 0)),
                     pl.BlockSpec(b.shape, lambda i: (0, 0)),
                     pl.BlockSpec(s.shape, lambda i: (0, 0)),
                     pl.BlockSpec(t.shape, lambda i: (0, 0))]
    inputs += [kparams["head_w"], kparams["head_b"]]
    in_specs += [pl.BlockSpec(kparams["head_w"].shape, lambda i: (0, 0)),
                 pl.BlockSpec(kparams["head_b"].shape, lambda i: (0, 0))]
    P = kparams["head_w"].shape[1]

    out = pl.pallas_call(
        functools.partial(_fused_kernel, n_cls=class_num),
        grid=(Np // TB,),
        in_specs=in_specs,
        out_specs=pl.BlockSpec((TB, P), lambda i: (i, 0)),
        out_shape=jax.ShapeDtypeStruct((Np, P), jnp.float32),
        compiler_params=pltpu.CompilerParams(
            dimension_semantics=("parallel",),       # batch sharded across v7x TCs
            vmem_limit_bytes=32 * 1024 * 1024),      # ~7 MiB actual footprint
    )(*inputs)

    return out[:N, 0:1], out[:N, 1:1 + class_num]


# ---------------------------------------------------------------------------
# Parameters (PyTorch layout) and kernel-ready conversion
# ---------------------------------------------------------------------------
def make_params(key, channels, img_size, class_num):
    """Random parameters in PyTorch layout (reference parameterization)."""
    filt = [channels, 16, 32, 64, 128]
    bn_flags = [False, True, True, True]
    conv = []
    for i in range(4):
        cin, cout = filt[i], filt[i + 1]
        key, kw, kb = jax.random.split(key, 3)
        w = jax.random.normal(kw, (cout, cin, 3, 3), jnp.float32) / math.sqrt(9 * cin)
        b = jax.random.normal(kb, (cout,), jnp.float32) * 0.01
        if bn_flags[i]:
            gamma = jnp.ones((cout,), jnp.float32)
            beta = jnp.zeros((cout,), jnp.float32)
            r_mean = jnp.zeros((cout,), jnp.float32)
            r_var = jnp.ones((cout,), jnp.float32)
            eps = 0.8                       # nn.BatchNorm2d(out, 0.8) -> eps=0.8
            scale = gamma / jnp.sqrt(r_var + eps)
            shift = beta - r_mean * scale
        else:
            scale = jnp.ones((cout,), jnp.float32)
            shift = jnp.zeros((cout,), jnp.float32)
        conv.append(dict(w=w, b=b, scale=scale, shift=shift))

    ds = math.ceil(img_size / 2 ** 4)
    feat = 128 * ds * ds
    key, k1, k2, k3, k4 = jax.random.split(key, 5)
    wa = jax.random.normal(k1, (feat, 1), jnp.float32) / math.sqrt(feat)
    ba = jax.random.normal(k2, (1, 1), jnp.float32) * 0.01
    wx = jax.random.normal(k3, (feat, class_num), jnp.float32) / math.sqrt(feat)
    bx = jax.random.normal(k4, (1, class_num), jnp.float32) * 0.01
    return dict(conv=conv, wa=wa, ba=ba, wx=wx, bx=bx)


def _conv_as_matrix(w_oihw, H, W):
    """Dense matrix M with flat_out = flat_in @ M (CHW flatten on both sides)
    for a 3x3 / stride-2 / pad-1 conv.  Exact (built by conv of an identity)."""
    cout, cin, _, _ = w_oihw.shape
    f_in = cin * H * W
    eye = jnp.eye(f_in, dtype=jnp.float32).reshape(f_in, cin, H, W)
    y = jax.lax.conv_general_dilated(
        eye, w_oihw, window_strides=(2, 2), padding=((1, 1), (1, 1)),
        dimension_numbers=("NCHW", "OIHW", "NCHW"),
        precision=jax.lax.Precision.HIGHEST)
    Ho, Wo = y.shape[2], y.shape[3]
    return y.reshape(f_in, cout * Ho * Wo), Ho, Wo


def prepare_params(raw, channels, img_size, class_num):
    """One-time conversion into kernel-ready params (bf16 matmul weights)."""
    layers = []
    H = W = img_size
    for layer in raw["conv"]:
        cout = layer["w"].shape[0]
        mat, Ho, Wo = _conv_as_matrix(layer["w"], H, W)
        hw = Ho * Wo
        layers.append((
            mat.astype(jnp.bfloat16),                                  # (F_in, F_out)
            jnp.repeat(layer["b"], hw).reshape(1, cout * hw),          # CHW-order bias
            jnp.repeat(layer["scale"], hw).reshape(1, cout * hw),      # BN scale (post-act)
            jnp.repeat(layer["shift"], hw).reshape(1, cout * hw),      # BN shift
        ))
        H, W = Ho, Wo

    feat = 128 * H * W          # PyTorch CHW flatten == our CHW flatten -> no permute
    P = _round_up(1 + class_num, 128)                 # lane-dense fused heads
    w_h = jnp.zeros((feat, P), jnp.float32)
    w_h = w_h.at[:, 0:1].set(raw["wa"]).at[:, 1:1 + class_num].set(raw["wx"])
    b_h = jnp.zeros((1, P), jnp.float32)
    b_h = b_h.at[:, 0:1].set(raw["ba"]).at[:, 1:1 + class_num].set(raw["bx"])
    return dict(layers=layers, head_w=w_h.astype(jnp.bfloat16), head_b=b_h)


# ---------------------------------------------------------------------------
# Pure-JAX reference (XLA conv) with identical eval-mode semantics
# ---------------------------------------------------------------------------
def _reference_forward(img_nchw, raw):
    hi = jax.lax.Precision.HIGHEST
    x = img_nchw.astype(jnp.float32)
    for layer in raw["conv"]:
        x = jax.lax.conv_general_dilated(
            x, layer["w"], window_strides=(2, 2), padding=((1, 1), (1, 1)),
            dimension_numbers=("NCHW", "OIHW", "NCHW"), precision=hi)
        x = x + layer["b"][None, :, None, None]
        x = jnp.where(x >= 0.0, x, 0.2 * x)
        x = x * layer["scale"][None, :, None, None] + layer["shift"][None, :, None, None]
    flat = x.reshape(x.shape[0], -1)                  # CHW flatten (PyTorch .view)
    adv = jax.nn.sigmoid(jnp.dot(flat, raw["wa"], precision=hi) + raw["ba"])
    aux = jax.nn.softmax(jnp.dot(flat, raw["wx"], precision=hi) + raw["bx"], axis=-1)
    return adv, aux


# ---------------------------------------------------------------------------
if __name__ == "__main__":
    CHANNELS, IMG_SIZE, CLASS_NUM, N = 4, 16, 10, 2

    key = jax.random.PRNGKey(0)
    key, k_img, k_par = jax.random.split(key, 3)
    img = jax.random.normal(k_img, (N, CHANNELS, IMG_SIZE, IMG_SIZE), jnp.float32)

    raw = make_params(k_par, CHANNELS, IMG_SIZE, CLASS_NUM)
    kparams = prepare_params(raw, CHANNELS, IMG_SIZE, CLASS_NUM)

    fwd = jax.jit(functools.partial(ac_discriminator_forward, class_num=CLASS_NUM))
    validity, label = fwd(img, kparams)
    jax.block_until_ready((validity, label))

    assert validity.shape == (N, 1)
    assert label.shape == (N, CLASS_NUM)

    ref_v, ref_l = _reference_forward(img, raw)
    assert bool(jnp.allclose(validity, ref_v, rtol=2e-2, atol=2e-2)), "validity mismatch"
    assert bool(jnp.allclose(label, ref_l, rtol=2e-2, atol=2e-2)), "label mismatch"

    print("KERNEL_OK")
</pallas_src>

<mosaic_0001>
module attributes {stable_mosaic.version = 11 : i64} {
  func.func @_fused_kernel(%arg0: i32, %arg1: memref<8x1024xf32, #tpu.memory_space<vmem>>, %arg2: memref<1024x1024xbf16, #tpu.memory_space<vmem>>, %arg3: memref<1x1024xf32, #tpu.memory_space<vmem>>, %arg4: memref<1x1024xf32, #tpu.memory_space<vmem>>, %arg5: memref<1x1024xf32, #tpu.memory_space<vmem>>, %arg6: memref<1024x512xbf16, #tpu.memory_space<vmem>>, %arg7: memref<1x512xf32, #tpu.memory_space<vmem>>, %arg8: memref<1x512xf32, #tpu.memory_space<vmem>>, %arg9: memref<1x512xf32, #tpu.memory_space<vmem>>, %arg10: memref<512x256xbf16, #tpu.memory_space<vmem>>, %arg11: memref<1x256xf32, #tpu.memory_space<vmem>>, %arg12: memref<1x256xf32, #tpu.memory_space<vmem>>, %arg13: memref<1x256xf32, #tpu.memory_space<vmem>>, %arg14: memref<256x128xbf16, #tpu.memory_space<vmem>>, %arg15: memref<1x128xf32, #tpu.memory_space<vmem>>, %arg16: memref<1x128xf32, #tpu.memory_space<vmem>>, %arg17: memref<1x128xf32, #tpu.memory_space<vmem>>, %arg18: memref<128x128xbf16, #tpu.memory_space<vmem>>, %arg19: memref<1x128xf32, #tpu.memory_space<vmem>>, %arg20: memref<8x128xf32, #tpu.memory_space<vmem>>) attributes {dimension_semantics = [#tpu.dimension_semantics<parallel>], iteration_bounds = array<i64: 1>, scalar_prefetch = 0 : i64, scratch_operands = 0 : i64, tpu.core_type = #tpu.core_type<tc>, window_params = [{transform_indices = @transform_0, window_bounds = array<i64: 8, 1024>}, {pipeline_mode = #tpu.pipeline_mode<synchronous>, transform_indices = @transform_1, window_bounds = array<i64: 1024, 1024>}, {pipeline_mode = #tpu.pipeline_mode<synchronous>, transform_indices = @transform_2, window_bounds = array<i64: 1, 1024>}, {pipeline_mode = #tpu.pipeline_mode<synchronous>, transform_indices = @transform_3, window_bounds = array<i64: 1, 1024>}, {pipeline_mode = #tpu.pipeline_mode<synchronous>, transform_indices = @transform_4, window_bounds = array<i64: 1, 1024>}, {pipeline_mode = #tpu.pipeline_mode<synchronous>, transform_indices = @transform_5, window_bounds = array<i64: 1024, 512>}, {pipeline_mode = #tpu.pipeline_mode<synchronous>, transform_indices = @transform_6, window_bounds = array<i64: 1, 512>}, {pipeline_mode = #tpu.pipeline_mode<synchronous>, transform_indices = @transform_7, window_bounds = array<i64: 1, 512>}, {pipeline_mode = #tpu.pipeline_mode<synchronous>, transform_indices = @transform_8, window_bounds = array<i64: 1, 512>}, {pipeline_mode = #tpu.pipeline_mode<synchronous>, transform_indices = @transform_9, window_bounds = array<i64: 512, 256>}, {pipeline_mode = #tpu.pipeline_mode<synchronous>, transform_indices = @transform_10, window_bounds = array<i64: 1, 256>}, {pipeline_mode = #tpu.pipeline_mode<synchronous>, transform_indices = @transform_11, window_bounds = array<i64: 1, 256>}, {pipeline_mode = #tpu.pipeline_mode<synchronous>, transform_indices = @transform_12, window_bounds = array<i64: 1, 256>}, {pipeline_mode = #tpu.pipeline_mode<synchronous>, transform_indices = @transform_13, window_bounds = array<i64: 256, 128>}, {pipeline_mode = #tpu.pipeline_mode<synchronous>, transform_indices = @transform_14, window_bounds = array<i64: 1, 128>}, {pipeline_mode = #tpu.pipeline_mode<synchronous>, transform_indices = @transform_15, window_bounds = array<i64: 1, 128>}, {pipeline_mode = #tpu.pipeline_mode<synchronous>, transform_indices = @transform_16, window_bounds = array<i64: 1, 128>}, {pipeline_mode = #tpu.pipeline_mode<synchronous>, transform_indices = @transform_17, window_bounds = array<i64: 128, 128>}, {pipeline_mode = #tpu.pipeline_mode<synchronous>, transform_indices = @transform_18, window_bounds = array<i64: 1, 128>}, {transform_indices = @transform_19, window_bounds = array<i64: 8, 128>}]} {
    %c0 = arith.constant 0 : index
    %c0_0 = arith.constant 0 : index
    %0 = vector.load %arg1[%c0, %c0_0] : memref<8x1024xf32, #tpu.memory_space<vmem>>, vector<8x1024xf32>
    %1 = arith.truncf %0 : vector<8x1024xf32> to vector<8x1024xbf16>
    %c0_1 = arith.constant 0 : index
    %c0_2 = arith.constant 0 : index
    %2 = vector.load %arg2[%c0_1, %c0_2] : memref<1024x1024xbf16, #tpu.memory_space<vmem>>, vector<1024x1024xbf16>
    %cst = arith.constant dense<0.000000e+00> : vector<8x1024xf32>
    %3 = tpu.matmul %1, %2, %cst {dimension_numbers = #tpu.dot_dimension_numbers<[1], [0], [0], [1], [0, 0, 1, 1], [], []>} : vector<8x1024xbf16>, vector<1024x1024xbf16>, vector<8x1024xf32> -> vector<8x1024xf32>
    %c0_3 = arith.constant 0 : index
    %c0_4 = arith.constant 0 : index
    %4 = vector.load %arg3[%c0_3, %c0_4] : memref<1x1024xf32, #tpu.memory_space<vmem>>, vector<1x1024xf32>
    %5 = vector.broadcast %4 : vector<1x1024xf32> to vector<8x1024xf32>
    %6 = arith.addf %3, %5 : vector<8x1024xf32>
    %cst_5 = arith.constant 0.000000e+00 : f32
    %7 = vector.broadcast %cst_5 : f32 to vector<8x1024xf32>
    %8 = arith.cmpf oge, %6, %7 : vector<8x1024xf32>
    %cst_6 = arith.constant 2.000000e-01 : f32
    %9 = vector.broadcast %cst_6 : f32 to vector<8x1024xf32>
    %10 = arith.mulf %9, %6 : vector<8x1024xf32>
    %11 = arith.select %8, %6, %10 : vector<8x1024xi1>, vector<8x1024xf32>
    %c0_7 = arith.constant 0 : index
    %c0_8 = arith.constant 0 : index
    %12 = vector.load %arg4[%c0_7, %c0_8] : memref<1x1024xf32, #tpu.memory_space<vmem>>, vector<1x1024xf32>
    %13 = vector.broadcast %12 : vector<1x1024xf32> to vector<8x1024xf32>
    %14 = arith.mulf %11, %13 : vector<8x1024xf32>
    %c0_9 = arith.constant 0 : index
    %c0_10 = arith.constant 0 : index
    %15 = vector.load %arg5[%c0_9, %c0_10] : memref<1x1024xf32, #tpu.memory_space<vmem>>, vector<1x1024xf32>
    %16 = vector.broadcast %15 : vector<1x1024xf32> to vector<8x1024xf32>
    %17 = arith.addf %14, %16 : vector<8x1024xf32>
    %18 = arith.truncf %17 : vector<8x1024xf32> to vector<8x1024xbf16>
    %c0_11 = arith.constant 0 : index
    %c0_12 = arith.constant 0 : index
    %19 = vector.load %arg6[%c0_11, %c0_12] : memref<1024x512xbf16, #tpu.memory_space<vmem>>, vector<1024x512xbf16>
    %cst_13 = arith.constant dense<0.000000e+00> : vector<8x512xf32>
    %20 = tpu.matmul %18, %19, %cst_13 {dimension_numbers = #tpu.dot_dimension_numbers<[1], [0], [0], [1], [0, 0, 1, 1], [], []>} : vector<8x1024xbf16>, vector<1024x512xbf16>, vector<8x512xf32> -> vector<8x512xf32>
    %c0_14 = arith.constant 0 : index
    %c0_15 = arith.constant 0 : index
    %21 = vector.load %arg7[%c0_14, %c0_15] : memref<1x512xf32, #tpu.memory_space<vmem>>, vector<1x512xf32>
    %22 = vector.broadcast %21 : vector<1x512xf32> to vector<8x512xf32>
    %23 = arith.addf %20, %22 : vector<8x512xf32>
    %cst_16 = arith.constant 0.000000e+00 : f32
    %24 = vector.broadcast %cst_16 : f32 to vector<8x512xf32>
    %25 = arith.cmpf oge, %23, %24 : vector<8x512xf32>
    %cst_17 = arith.constant 2.000000e-01 : f32
    %26 = vector.broadcast %cst_17 : f32 to vector<8x512xf32>
    %27 = arith.mulf %26, %23 : vector<8x512xf32>
    %28 = arith.select %25, %23, %27 : vector<8x512xi1>, vector<8x512xf32>
    %c0_18 = arith.constant 0 : index
    %c0_19 = arith.constant 0 : index
    %29 = vector.load %arg8[%c0_18, %c0_19] : memref<1x512xf32, #tpu.memory_space<vmem>>, vector<1x512xf32>
    %30 = vector.broadcast %29 : vector<1x512xf32> to vector<8x512xf32>
    %31 = arith.mulf %28, %30 : vector<8x512xf32>
    %c0_20 = arith.constant 0 : index
    %c0_21 = arith.constant 0 : index
    %32 = vector.load %arg9[%c0_20, %c0_21] : memref<1x512xf32, #tpu.memory_space<vmem>>, vector<1x512xf32>
    %33 = vector.broadcast %32 : vector<1x512xf32> to vector<8x512xf32>
    %34 = arith.addf %31, %33 : vector<8x512xf32>
    %35 = arith.truncf %34 : vector<8x512xf32> to vector<8x512xbf16>
    %c0_22 = arith.constant 0 : index
    %c0_23 = arith.constant 0 : index
    %36 = vector.load %arg10[%c0_22, %c0_23] : memref<512x256xbf16, #tpu.memory_space<vmem>>, vector<512x256xbf16>
    %cst_24 = arith.constant dense<0.000000e+00> : vector<8x256xf32>
    %37 = tpu.matmul %35, %36, %cst_24 {dimension_numbers = #tpu.dot_dimension_numbers<[1], [0], [0], [1], [0, 0, 1, 1], [], []>} : vector<8x512xbf16>, vector<512x256xbf16>, vector<8x256xf32> -> vector<8x256xf32>
    %c0_25 = arith.constant 0 : index
    %c0_26 = arith.constant 0 : index
    %38 = vector.load %arg11[%c0_25, %c0_26] : memref<1x256xf32, #tpu.memory_space<vmem>>, vector<1x256xf32>
    %39 = vector.broadcast %38 : vector<1x256xf32> to vector<8x256xf32>
    %40 = arith.addf %37, %39 : vector<8x256xf32>
    %cst_27 = arith.constant 0.000000e+00 : f32
    %41 = vector.broadcast %cst_27 : f32 to vector<8x256xf32>
    %42 = arith.cmpf oge, %40, %41 : vector<8x256xf32>
    %cst_28 = arith.constant 2.000000e-01 : f32
    %43 = vector.broadcast %cst_28 : f32 to vector<8x256xf32>
    %44 = arith.mulf %43, %40 : vector<8x256xf32>
    %45 = arith.select %42, %40, %44 : vector<8x256xi1>, vector<8x256xf32>
    %c0_29 = arith.constant 0 : index
    %c0_30 = arith.constant 0 : index
    %46 = vector.load %arg12[%c0_29, %c0_30] : memref<1x256xf32, #tpu.memory_space<vmem>>, vector<1x256xf32>
    %47 = vector.broadcast %46 : vector<1x256xf32> to vector<8x256xf32>
    %48 = arith.mulf %45, %47 : vector<8x256xf32>
    %c0_31 = arith.constant 0 : index
    %c0_32 = arith.constant 0 : index
    %49 = vector.load %arg13[%c0_31, %c0_32] : memref<1x256xf32, #tpu.memory_space<vmem>>, vector<1x256xf32>
    %50 = vector.broadcast %49 : vector<1x256xf32> to vector<8x256xf32>
    %51 = arith.addf %48, %50 : vector<8x256xf32>
    %52 = arith.truncf %51 : vector<8x256xf32> to vector<8x256xbf16>
    %c0_33 = arith.constant 0 : index
    %c0_34 = arith.constant 0 : index
    %53 = vector.load %arg14[%c0_33, %c0_34] : memref<256x128xbf16, #tpu.memory_space<vmem>>, vector<256x128xbf16>
    %cst_35 = arith.constant dense<0.000000e+00> : vector<8x128xf32>
    %54 = tpu.matmul %52, %53, %cst_35 {dimension_numbers = #tpu.dot_dimension_numbers<[1], [0], [0], [1], [0, 0, 1, 1], [], []>} : vector<8x256xbf16>, vector<256x128xbf16>, vector<8x128xf32> -> vector<8x128xf32>
    %c0_36 = arith.constant 0 : index
    %c0_37 = arith.constant 0 : index
    %55 = vector.load %arg15[%c0_36, %c0_37] : memref<1x128xf32, #tpu.memory_space<vmem>>, vector<1x128xf32>
    %56 = vector.broadcast %55 : vector<1x128xf32> to vector<8x128xf32>
    %57 = arith.addf %54, %56 : vector<8x128xf32>
    %cst_38 = arith.constant 0.000000e+00 : f32
    %58 = vector.broadcast %cst_38 : f32 to vector<8x128xf32>
    %59 = arith.cmpf oge, %57, %58 : vector<8x128xf32>
    %cst_39 = arith.constant 2.000000e-01 : f32
    %60 = vector.broadcast %cst_39 : f32 to vector<8x128xf32>
    %61 = arith.mulf %60, %57 : vector<8x128xf32>
    %62 = arith.select %59, %57, %61 : vector<8x128xi1>, vector<8x128xf32>
    %c0_40 = arith.constant 0 : index
    %c0_41 = arith.constant 0 : index
    %63 = vector.load %arg16[%c0_40, %c0_41] : memref<1x128xf32, #tpu.memory_space<vmem>>, vector<1x128xf32>
    %64 = vector.broadcast %63 : vector<1x128xf32> to vector<8x128xf32>
    %65 = arith.mulf %62, %64 : vector<8x128xf32>
    %c0_42 = arith.constant 0 : index
    %c0_43 = arith.constant 0 : index
    %66 = vector.load %arg17[%c0_42, %c0_43] : memref<1x128xf32, #tpu.memory_space<vmem>>, vector<1x128xf32>
    %67 = vector.broadcast %66 : vector<1x128xf32> to vector<8x128xf32>
    %68 = arith.addf %65, %67 : vector<8x128xf32>
    %69 = arith.truncf %68 : vector<8x128xf32> to vector<8x128xbf16>
    %c0_44 = arith.constant 0 : index
    %c0_45 = arith.constant 0 : index
    %70 = vector.load %arg18[%c0_44, %c0_45] : memref<128x128xbf16, #tpu.memory_space<vmem>>, vector<128x128xbf16>
    %cst_46 = arith.constant dense<0.000000e+00> : vector<8x128xf32>
    %71 = tpu.matmul %69, %70, %cst_46 {dimension_numbers = #tpu.dot_dimension_numbers<[1], [0], [0], [1], [0, 0, 1, 1], [], []>} : vector<8x128xbf16>, vector<128x128xbf16>, vector<8x128xf32> -> vector<8x128xf32>
    %c0_47 = arith.constant 0 : index
    %c0_48 = arith.constant 0 : index
    %72 = vector.load %arg19[%c0_47, %c0_48] : memref<1x128xf32, #tpu.memory_space<vmem>>, vector<1x128xf32>
    %73 = vector.broadcast %72 : vector<1x128xf32> to vector<8x128xf32>
    %74 = arith.addf %71, %73 : vector<8x128xf32>
    %75 = tpu.iota {dimensions = array<i32: 1>} : vector<8x128xi32>
    %c1_i32 = arith.constant 1 : i32
    %76 = vector.broadcast %c1_i32 : i32 to vector<8x128xi32>
    %77 = arith.cmpi sge, %75, %76 : vector<8x128xi32>
    %c10_i32 = arith.constant 10 : i32
    %78 = vector.broadcast %c10_i32 : i32 to vector<8x128xi32>
    %79 = arith.cmpi sle, %75, %78 : vector<8x128xi32>
    %80 = arith.andi %77, %79 : vector<8x128xi1>
    %cst_49 = arith.constant 0xFF800000 : f32
    %81 = vector.broadcast %cst_49 : f32 to vector<8x128xf32>
    %82 = arith.select %80, %74, %81 : vector<8x128xi1>, vector<8x128xf32>
    %cst_50 = arith.constant dense<0xFF800000> : vector<8xf32>
    %83 = vector.multi_reduction <maximumf>, %82, %cst_50 [1] : vector<8x128xf32> to vector<8xf32>
    %84 = vector.shape_cast %83 : vector<8xf32> to vector<8x1xf32>
    %85 = vector.broadcast %84 : vector<8x1xf32> to vector<8x128xf32>
    %86 = arith.subf %82, %85 : vector<8x128xf32>
    %87 = math.exp %86 : vector<8x128xf32>
    %cst_51 = arith.constant dense<0.000000e+00> : vector<8xf32>
    %88 = vector.multi_reduction <add>, %87, %cst_51 [1] : vector<8x128xf32> to vector<8xf32>
    %89 = vector.shape_cast %88 : vector<8xf32> to vector<8x1xf32>
    %90 = vector.broadcast %89 : vector<8x1xf32> to vector<8x128xf32>
    %91 = arith.divf %87, %90 : vector<8x128xf32>
    %cst_52 = arith.constant 0.000000e+00 : f32
    %92 = vector.broadcast %cst_52 : f32 to vector<8x128xf32>
    %93 = arith.subf %92, %74 : vector<8x128xf32>
    %94 = math.exp %93 : vector<8x128xf32>
    %cst_53 = arith.constant 1.000000e+00 : f32
    %95 = vector.broadcast %cst_53 : f32 to vector<8x128xf32>
    %96 = arith.addf %95, %94 : vector<8x128xf32>
    %cst_54 = arith.constant 1.000000e+00 : f32
    %97 = vector.broadcast %cst_54 : f32 to vector<8x128xf32>
    %98 = arith.divf %97, %96 : vector<8x128xf32>
    %c0_i32 = arith.constant 0 : i32
    %99 = vector.broadcast %c0_i32 : i32 to vector<8x128xi32>
    %100 = arith.cmpi eq, %75, %99 : vector<8x128xi32>
    %101 = arith.select %100, %98, %91 : vector<8x128xi1>, vector<8x128xf32>
    %c0_55 = arith.constant 0 : index
    %c0_56 = arith.constant 0 : index
    %102 = vector.load %arg20[%c0_55, %c0_56] : memref<8x128xf32, #tpu.memory_space<vmem>>, vector<8x128xf32>
    tpu.vector_store %arg20[%c0_55, %c0_56], %101 {strides = array<i32>} : memref<8x128xf32, #tpu.memory_space<vmem>>, vector<8x128xf32>,
    return
  }
  func.func @transform_0(%arg0: i32) -> (i32, i32) {
    %c0_i32 = arith.constant 0 : i32
    %c0_i32_0 = arith.constant 0 : i32
    return %arg0, %c0_i32 : i32, i32
  }
  func.func @transform_1(%arg0: i32) -> (i32, i32) {
    %c0_i32 = arith.constant 0 : i32
    %c0_i32_0 = arith.constant 0 : i32
    %c0_i32_1 = arith.constant 0 : i32
    return %c0_i32, %c0_i32_0 : i32, i32
  }
  func.func @transform_2(%arg0: i32) -> (i32, i32) {
    %c0_i32 = arith.constant 0 : i32
    %c0_i32_0 = arith.constant 0 : i32
    %c0_i32_1 = arith.constant 0 : i32
    return %c0_i32, %c0_i32_0 : i32, i32
  }
  func.func @transform_3(%arg0: i32) -> (i32, i32) {
    %c0_i32 = arith.constant 0 : i32
    %c0_i32_0 = arith.constant 0 : i32
    %c0_i32_1 = arith.constant 0 : i32
    return %c0_i32, %c0_i32_0 : i32, i32
  }
  func.func @transform_4(%arg0: i32) -> (i32, i32) {
    %c0_i32 = arith.constant 0 : i32
    %c0_i32_0 = arith.constant 0 : i32
    %c0_i32_1 = arith.constant 0 : i32
    return %c0_i32, %c0_i32_0 : i32, i32
  }
  func.func @transform_5(%arg0: i32) -> (i32, i32) {
    %c0_i32 = arith.constant 0 : i32
    %c0_i32_0 = arith.constant 0 : i32
    %c0_i32_1 = arith.constant 0 : i32
    return %c0_i32, %c0_i32_0 : i32, i32
  }
  func.func @transform_6(%arg0: i32) -> (i32, i32) {
    %c0_i32 = arith.constant 0 : i32
    %c0_i32_0 = arith.constant 0 : i32
    %c0_i32_1 = arith.constant 0 : i32
    return %c0_i32, %c0_i32_0 : i32, i32
  }
  func.func @transform_7(%arg0: i32) -> (i32, i32) {
    %c0_i32 = arith.constant 0 : i32
    %c0_i32_0 = arith.constant 0 : i32
    %c0_i32_1 = arith.constant 0 : i32
    return %c0_i32, %c0_i32_0 : i32, i32
  }
  func.func @transform_8(%arg0: i32) -> (i32, i32) {
    %c0_i32 = arith.constant 0 : i32
    %c0_i32_0 = arith.constant 0 : i32
    %c0_i32_1 = arith.constant 0 : i32
    return %c0_i32, %c0_i32_0 : i32, i32
  }
  func.func @transform_9(%arg0: i32) -> (i32, i32) {
    %c0_i32 = arith.constant 0 : i32
    %c0_i32_0 = arith.constant 0 : i32
    %c0_i32_1 = arith.constant 0 : i32
    return %c0_i32, %c0_i32_0 : i32, i32
  }
  func.func @transform_10(%arg0: i32) -> (i32, i32) {
    %c0_i32 = arith.constant 0 : i32
    %c0_i32_0 = arith.constant 0 : i32
    %c0_i32_1 = arith.constant 0 : i32
    return %c0_i32, %c0_i32_0 : i32, i32
  }
  func.func @transform_11(%arg0: i32) -> (i32, i32) {
    %c0_i32 = arith.constant 0 : i32
    %c0_i32_0 = arith.constant 0 : i32
    %c0_i32_1 = arith.constant 0 : i32
    return %c0_i32, %c0_i32_0 : i32, i32
  }
  func.func @transform_12(%arg0: i32) -> (i32, i32) {
    %c0_i32 = arith.constant 0 : i32
    %c0_i32_0 = arith.constant 0 : i32
    %c0_i32_1 = arith.constant 0 : i32
    return %c0_i32, %c0_i32_0 : i32, i32
  }
  func.func @transform_13(%arg0: i32) -> (i32, i32) {
    %c0_i32 = arith.constant 0 : i32
    %c0_i32_0 = arith.constant 0 : i32
    %c0_i32_1 = arith.constant 0 : i32
    return %c0_i32, %c0_i32_0 : i32, i32
  }
  func.func @transform_14(%arg0: i32) -> (i32, i32) {
    %c0_i32 = arith.constant 0 : i32
    %c0_i32_0 = arith.constant 0 : i32
    %c0_i32_1 = arith.constant 0 : i32
    return %c0_i32, %c0_i32_0 : i32, i32
  }
  func.func @transform_15(%arg0: i32) -> (i32, i32) {
    %c0_i32 = arith.constant 0 : i32
    %c0_i32_0 = arith.constant 0 : i32
    %c0_i32_1 = arith.constant 0 : i32
    return %c0_i32, %c0_i32_0 : i32, i32
  }
  func.func @transform_16(%arg0: i32) -> (i32, i32) {
    %c0_i32 = arith.constant 0 : i32
    %c0_i32_0 = arith.constant 0 : i32
    %c0_i32_1 = arith.constant 0 : i32
    return %c0_i32, %c0_i32_0 : i32, i32
  }
  func.func @transform_17(%arg0: i32) -> (i32, i32) {
    %c0_i32 = arith.constant 0 : i32
    %c0_i32_0 = arith.constant 0 : i32
    %c0_i32_1 = arith.constant 0 : i32
    return %c0_i32, %c0_i32_0 : i32, i32
  }
  func.func @transform_18(%arg0: i32) -> (i32, i32) {
    %c0_i32 = arith.constant 0 : i32
    %c0_i32_0 = arith.constant 0 : i32
    %c0_i32_1 = arith.constant 0 : i32
    return %c0_i32, %c0_i32_0 : i32, i32
  }
  func.func @transform_19(%arg0: i32) -> (i32, i32) {
    %c0_i32 = arith.constant 0 : i32
    %c0_i32_0 = arith.constant 0 : i32
    return %arg0, %c0_i32 : i32, i32
  }
}

</mosaic_0001>

<llo_original>
// kernel: ac_discriminator_forward.1
$region0: #{ac_discriminator_forward.1}
  #allocation0 [shape = 'u32[]', space=smem, size = 0x4, offset = 0x4, fixed_abs, tag = 'smem constant byte address 0x4 - core index']
  #allocation1 [shape = 'u32[144,128]{1,0:T(1,128)}', space=vmem, size = 0x12000, scoped, tag = 'internal scratch']
  %s0 = inlined_call_operand.vmem [shape: f32[8,1024], index: 0, kind: input, shape index: {}]
  %s1 = inlined_call_operand.hbm [shape: bf16[1024,1024], index: 1, kind: input, shape index: {}]
  %s2 = inlined_call_operand.hbm [shape: f32[1,1024], index: 2, kind: input, shape index: {}]
  %s3 = inlined_call_operand.hbm [shape: f32[1,1024], index: 3, kind: input, shape index: {}]
  %s4 = inlined_call_operand.hbm [shape: f32[1,1024], index: 4, kind: input, shape index: {}]
  %s5 = inlined_call_operand.hbm [shape: bf16[1024,512], index: 5, kind: input, shape index: {}]
  %s6 = inlined_call_operand.hbm [shape: f32[1,512], index: 6, kind: input, shape index: {}]
  %s7 = inlined_call_operand.hbm [shape: f32[1,512], index: 7, kind: input, shape index: {}]
  %s8 = inlined_call_operand.hbm [shape: f32[1,512], index: 8, kind: input, shape index: {}]
  %s9 = inlined_call_operand.hbm [shape: bf16[512,256], index: 9, kind: input, shape index: {}]
  %s10 = inlined_call_operand.hbm [shape: f32[1,256], index: 10, kind: input, shape index: {}]
  %s11 = inlined_call_operand.hbm [shape: f32[1,256], index: 11, kind: input, shape index: {}]
  %s12 = inlined_call_operand.hbm [shape: f32[1,256], index: 12, kind: input, shape index: {}]
  %s13 = inlined_call_operand.hbm [shape: bf16[256,128], index: 13, kind: input, shape index: {}]
  %s14 = inlined_call_operand.hbm [shape: f32[1,128], index: 14, kind: input, shape index: {}]
  %s15 = inlined_call_operand.hbm [shape: f32[1,128], index: 15, kind: input, shape index: {}]
  %s16 = inlined_call_operand.hbm [shape: f32[1,128], index: 16, kind: input, shape index: {}]
  %s17 = inlined_call_operand.hbm [shape: bf16[128,128], index: 17, kind: input, shape index: {}]
  %s18 = inlined_call_operand.hbm [shape: f32[1,128], index: 18, kind: input, shape index: {}]
  %s19 = inlined_call_operand.vmem [shape: f32[8,128], index: 19, kind: output, shape index: {}]
  %s20 = sld [smem:[#allocation0]]
  $region158: #{ac_discriminator_forward.1} parent=0
    _
  %s22 = ssub.s32 1, %s20
  %s23 = scalar_select 0, %s22, %s20
  $region1: #{ac_discriminator_forward.1} parent=0
    #allocation2 [shape = 'u8[2097152]{0}', space=vmem, size = 0x200000, scoped, tag = 'input window, operand 1, single buffered']
    #allocation3 [shape = 's32[1]{0}', space=sflag, size = 0x4, scoped, tag = 'scoped memory for ac_discriminator_forward.1']
    #allocation4 [shape = 'u8[4096]{0}', space=vmem, size = 0x1000, scoped, tag = 'input window, operand 2, single buffered']
    #allocation5 [shape = 's32[1]{0}', space=sflag, size = 0x4, scoped, tag = 'scoped memory for ac_discriminator_forward.1']
    #allocation6 [shape = 'u8[4096]{0}', space=vmem, size = 0x1000, scoped, tag = 'input window, operand 3, single buffered']
    #allocation7 [shape = 'u8[4096]{0}', space=vmem, size = 0x1000, scoped, tag = 'input window, operand 4, single buffered']
    #allocation8 [shape = 's32[1]{0}', space=sflag, size = 0x4, scoped, tag = 'scoped memory for ac_discriminator_forward.1']
    #allocation9 [shape = 'u8[1048576]{0}', space=vmem, size = 0x100000, scoped, tag = 'input window, operand 5, single buffered']
    #allocation10 [shape = 'u8[2048]{0}', space=vmem, size = 0x800, scoped, tag = 'input window, operand 6, single buffered']
    #allocation11 [shape = 's32[1]{0}', space=sflag, size = 0x4, scoped, tag = 'scoped memory for ac_discriminator_forward.1']
    #allocation12 [shape = 'u8[2048]{0}', space=vmem, size = 0x800, scoped, tag = 'input window, operand 7, single buffered']
    #allocation13 [shape = 'u8[2048]{0}', space=vmem, size = 0x800, scoped, tag = 'input window, operand 8, single buffered']
    #allocation14 [shape = 's32[1]{0}', space=sflag, size = 0x4, scoped, tag = 'scoped memory for ac_discriminator_forward.1']
    #allocation15 [shape = 'u8[262144]{0}', space=vmem, size = 0x40000, scoped, tag = 'input window, operand 9, single buffered']
    #allocation16 [shape = 'u8[1024]{0}', space=vmem, size = 0x400, scoped, tag = 'input window, operand 10, single buffered']
    #allocation17 [shape = 's32[1]{0}', space=sflag, size = 0x4, scoped, tag = 'scoped memory for ac_discriminator_forward.1']
    #allocation18 [shape = 'u8[1024]{0}', space=vmem, size = 0x400, scoped, tag = 'input window, operand 11, single buffered']
    #allocation19 [shape = 'u8[1024]{0}', space=vmem, size = 0x400, scoped, tag = 'input window, operand 12, single buffered']
    #allocation20 [shape = 's32[1]{0}', space=sflag, size = 0x4, scoped, tag = 'scoped memory for ac_discriminator_forward.1']
    #allocation21 [shape = 'u8[65536]{0}', space=vmem, size = 0x10000, scoped, tag = 'input window, operand 13, single buffered']
    #allocation22 [shape = 'u8[512]{0}', space=vmem, size = 0x400, scoped, tag = 'input window, operand 14, single buffered']
    #allocation23 [shape = 's32[1]{0}', space=sflag, size = 0x4, scoped, tag = 'scoped memory for ac_discriminator_forward.1']
    #allocation24 [shape = 'u8[512]{0}', space=vmem, size = 0x400, scoped, tag = 'input window, operand 15, single buffered']
    #allocation25 [shape = 'u8[512]{0}', space=vmem, size = 0x400, scoped, tag = 'input window, operand 16, single buffered']
    #allocation26 [shape = 's32[1]{0}', space=sflag, size = 0x4, scoped, tag = 'scoped memory for ac_discriminator_forward.1']
    #allocation27 [shape = 'u8[32768]{0}', space=vmem, size = 0x8000, scoped, tag = 'input window, operand 17, single buffered']
    #allocation28 [shape = 'u8[512]{0}', space=vmem, size = 0x400, scoped, tag = 'input window, operand 18, single buffered']
    #allocation29 [shape = 's32[1]{0}', space=sflag, size = 0x4, scoped, tag = 'scoped memory for ac_discriminator_forward.1']
    %24 = vsyncpa [#allocation3], 0
    %25 = vsyncpa [#allocation5], 0
    %26 = vsyncpa [#allocation8], 0
    %27 = vsyncpa [#allocation11], 0
    %28 = vsyncpa [#allocation14], 0
    %29 = vsyncpa [#allocation17], 0
    %30 = vsyncpa [#allocation20], 0
    %31 = vsyncpa [#allocation23], 0
    %32 = vsyncpa [#allocation26], 0
    %33 = vsyncpa [#allocation29], 0
    // Predicated region
    $region2: #{ac_discriminator_forward.1} parent=1 // pred_check
      _
    $region3: #{ac_discriminator_forward.1} parent=1 // pred_check_branch
      %35 = sbr.rel (0) target = $region5
    $region4: #{ac_discriminator_forward.1} parent=1 // pred_region
      _
    $region5: #{ac_discriminator_forward.1} parent=1 // pred_fallthru
      _
    // Predicated region
    $region6: #{ac_discriminator_forward.1} parent=1 // pred_check
      _
    $region7: #{ac_discriminator_forward.1} parent=1 // pred_check_branch
      %37 = sbr.rel (0) target = $region9
    $region8: #{ac_discriminator_forward.1} parent=1 // pred_region
      %s39 = ssub.s32 65536, 65536
      %40 = vsyncadd [#allocation3], %s39
      %s41 = sshll.u32 [#allocation2], 4
      %s42 = int_to_ptr.vmem [resolvable:$true] %s41
      %47 = dma.hbm_to_vmem [thread:$0]  %s1, 65536, %s42, [#allocation3], 512, 512, 32
    $region9: #{ac_discriminator_forward.1} parent=1 // pred_fallthru
      _
    // Predicated region
    $region10: #{ac_discriminator_forward.1} parent=1 // pred_check
      _
    $region11: #{ac_discriminator_forward.1} parent=1 // pred_check_branch
      %49 = sbr.rel (0) target = $region13
    $region12: #{ac_discriminator_forward.1} parent=1 // pred_region
      %s51 = ssub.s32 128, 128
      %52 = vsyncadd [#allocation5], %s51
      %s54 = sshll.u32 [#allocation4], 4
      %s55 = int_to_ptr.vmem [resolvable:$true] %s54
      %57 = dma.hbm_to_vmem [thread:$0]  %s2, 128, %s55, [#allocation5]
    $region13: #{ac_discriminator_forward.1} parent=1 // pred_fallthru
      _
    // Predicated region
    $region14: #{ac_discriminator_forward.1} parent=1 // pred_check
      _
    $region15: #{ac_discriminator_forward.1} parent=1 // pred_check_branch
      %59 = sbr.rel (0) target = $region17
    $region16: #{ac_discriminator_forward.1} parent=1 // pred_region
      %s61 = ssub.s32 128, 128
      %62 = vsyncadd [#allocation5], %s61
      %s64 = sshll.u32 [#allocation6], 4
      %s65 = int_to_ptr.vmem [resolvable:$true] %s64
      %67 = dma.hbm_to_vmem [thread:$0]  %s3, 128, %s65, [#allocation5]
    $region17: #{ac_discriminator_forward.1} parent=1 // pred_fallthru
      _
    // Predicated region
    $region18: #{ac_discriminator_forward.1} parent=1 // pred_check
      _
    $region19: #{ac_discriminator_forward.1} parent=1 // pred_check_branch
      %69 = sbr.rel (0) target = $region21
    $region20: #{ac_discriminator_forward.1} parent=1 // pred_region
      %s71 = ssub.s32 128, 128
      %72 = vsyncadd [#allocation8], %s71
      %s74 = sshll.u32 [#allocation7], 4
      %s75 = int_to_ptr.vmem [resolvable:$true] %s74
      %77 = dma.hbm_to_vmem [thread:$0]  %s4, 128, %s75, [#allocation8]
    $region21: #{ac_discriminator_forward.1} parent=1 // pred_fallthru
      _
    // Predicated region
    $region22: #{ac_discriminator_forward.1} parent=1 // pred_check
      _
    $region23: #{ac_discriminator_forward.1} parent=1 // pred_check_branch
      %79 = sbr.rel (0) target = $region25
    $region24: #{ac_discriminator_forward.1} parent=1 // pred_region
      %s81 = ssub.s32 32768, 32768
      %82 = vsyncadd [#allocation8], %s81
      %s83 = sshll.u32 [#allocation9], 4
      %s84 = int_to_ptr.vmem [resolvable:$true] %s83
      %89 = dma.hbm_to_vmem [thread:$0]  %s5, 32768, %s84, [#allocation8], 256, 256, 16
    $region25: #{ac_discriminator_forward.1} parent=1 // pred_fallthru
      _
    // Predicated region
    $region26: #{ac_discriminator_forward.1} parent=1 // pred_check
      _
    $region27: #{ac_discriminator_forward.1} parent=1 // pred_check_branch
      %91 = sbr.rel (0) target = $region29
    $region28: #{ac_discriminator_forward.1} parent=1 // pred_region
      %s93 = ssub.s32 64, 64
      %94 = vsyncadd [#allocation11], %s93
      %s96 = sshll.u32 [#allocation10], 4
      %s97 = int_to_ptr.vmem [resolvable:$true] %s96
      %99 = dma.hbm_to_vmem [thread:$0]  %s6, 64, %s97, [#allocation11]
    $region29: #{ac_discriminator_forward.1} parent=1 // pred_fallthru
      _
    // Predicated region
    $region30: #{ac_discriminator_forward.1} parent=1 // pred_check
      _
    $region31: #{ac_discriminator_forward.1} parent=1 // pred_check_branch
      %101 = sbr.rel (0) target = $region33
    $region32: #{ac_discriminator_forward.1} parent=1 // pred_region
      %s103 = ssub.s32 64, 64
      %104 = vsyncadd [#allocation11], %s103
      %s106 = sshll.u32 [#allocation12], 4
      %s107 = int_to_ptr.vmem [resolvable:$true] %s106
      %109 = dma.hbm_to_vmem [thread:$0]  %s7, 64, %s107, [#allocation11]
    $region33: #{ac_discriminator_forward.1} parent=1 // pred_fallthru
      _
    // Predicated region
    $region34: #{ac_discriminator_forward.1} parent=1 // pred_check
      _
    $region35: #{ac_discriminator_forward.1} parent=1 // pred_check_branch
      %111 = sbr.rel (0) target = $region37
    $region36: #{ac_discriminator_forward.1} parent=1 // pred_region
      %s113 = ssub.s32 64, 64
      %114 = vsyncadd [#allocation14], %s113
      %s116 = sshll.u32 [#allocation13], 4
      %s117 = int_to_ptr.vmem [resolvable:$true] %s116
      %119 = dma.hbm_to_vmem [thread:$0]  %s8, 64, %s117, [#allocation14]
    $region37: #{ac_discriminator_forward.1} parent=1 // pred_fallthru
      _
    // Predicated region
    $region38: #{ac_discriminator_forward.1} parent=1 // pred_check
      _
    $region39: #{ac_discriminator_forward.1} parent=1 // pred_check_branch
      %121 = sbr.rel (0) target = $region41
    $region40: #{ac_discriminator_forward.1} parent=1 // pred_region
      %s123 = ssub.s32 8192, 8192
      %124 = vsyncadd [#allocation14], %s123
      %s125 = sshll.u32 [#allocation15], 4
      %s126 = int_to_ptr.vmem [resolvable:$true] %s125
      %131 = dma.hbm_to_vmem [thread:$0]  %s9, 8192, %s126, [#allocation14], 128, 128, 8
    $region41: #{ac_discriminator_forward.1} parent=1 // pred_fallthru
      _
    // Predicated region
    $region42: #{ac_discriminator_forward.1} parent=1 // pred_check
      _
    $region43: #{ac_discriminator_forward.1} parent=1 // pred_check_branch
      %133 = sbr.rel (0) target = $region45
    $region44: #{ac_discriminator_forward.1} parent=1 // pred_region
      %s135 = ssub.s32 32, 32
      %136 = vsyncadd [#allocation17], %s135
      %s138 = sshll.u32 [#allocation16], 4
      %s139 = int_to_ptr.vmem [resolvable:$true] %s138
      %141 = dma.hbm_to_vmem [thread:$0]  %s10, 32, %s139, [#allocation17]
    $region45: #{ac_discriminator_forward.1} parent=1 // pred_fallthru
      _
    // Predicated region
    $region46: #{ac_discriminator_forward.1} parent=1 // pred_check
      _
    $region47: #{ac_discriminator_forward.1} parent=1 // pred_check_branch
      %143 = sbr.rel (0) target = $region49
    $region48: #{ac_discriminator_forward.1} parent=1 // pred_region
      %s145 = ssub.s32 32, 32
      %146 = vsyncadd [#allocation17], %s145
      %s148 = sshll.u32 [#allocation18], 4
      %s149 = int_to_ptr.vmem [resolvable:$true] %s148
      %151 = dma.hbm_to_vmem [thread:$0]  %s11, 32, %s149, [#allocation17]
    $region49: #{ac_discriminator_forward.1} parent=1 // pred_fallthru
      _
    // Predicated region
    $region50: #{ac_discriminator_forward.1} parent=1 // pred_check
      _
    $region51: #{ac_discriminator_forward.1} parent=1 // pred_check_branch
      %153 = sbr.rel (0) target = $region53
    $region52: #{ac_discriminator_forward.1} parent=1 // pred_region
      %s155 = ssub.s32 32, 32
      %156 = vsyncadd [#allocation20], %s155
      %s158 = sshll.u32 [#allocation19], 4
      %s159 = int_to_ptr.vmem [resolvable:$true] %s158
      %161 = dma.hbm_to_vmem [thread:$0]  %s12, 32, %s159, [#allocation20]
    $region53: #{ac_discriminator_forward.1} parent=1 // pred_fallthru
      _
    // Predicated region
    $region54: #{ac_discriminator_forward.1} parent=1 // pred_check
      _
    $region55: #{ac_discriminator_forward.1} parent=1 // pred_check_branch
      %163 = sbr.rel (0) target = $region57
    $region56: #{ac_discriminator_forward.1} parent=1 // pred_region
      %s165 = ssub.s32 2048, 2048
      %166 = vsyncadd [#allocation20], %s165
      %s167 = sshll.u32 [#allocation21], 4
      %s168 = int_to_ptr.vmem [resolvable:$true] %s167
      %173 = dma.hbm_to_vmem [thread:$0]  %s13, 2048, %s168, [#allocation20], 64, 64, 4
    $region57: #{ac_discriminator_forward.1} parent=1 // pred_fallthru
      _
    // Predicated region
    $region58: #{ac_discriminator_forward.1} parent=1 // pred_check
      _
    $region59: #{ac_discriminator_forward.1} parent=1 // pred_check_branch
      %175 = sbr.rel (0) target = $region61
    $region60: #{ac_discriminator_forward.1} parent=1 // pred_region
      %s177 = ssub.s32 16, 16
      %178 = vsyncadd [#allocation23], %s177
      %s180 = sshll.u32 [#allocation22], 4
      %s181 = int_to_ptr.vmem [resolvable:$true] %s180
      %183 = dma.hbm_to_vmem [thread:$0]  %s14, 16, %s181, [#allocation23]
    $region61: #{ac_discriminator_forward.1} parent=1 // pred_fallthru
      _
    // Predicated region
    $region62: #{ac_discriminator_forward.1} parent=1 // pred_check
      _
    $region63: #{ac_discriminator_forward.1} parent=1 // pred_check_branch
      %185 = sbr.rel (0) target = $region65
    $region64: #{ac_discriminator_forward.1} parent=1 // pred_region
      %s187 = ssub.s32 16, 16
      %188 = vsyncadd [#allocation23], %s187
      %s190 = sshll.u32 [#allocation24], 4
      %s191 = int_to_ptr.vmem [resolvable:$true] %s190
      %193 = dma.hbm_to_vmem [thread:$0]  %s15, 16, %s191, [#allocation23]
    $region65: #{ac_discriminator_forward.1} parent=1 // pred_fallthru
      _
    // Predicated region
    $region66: #{ac_discriminator_forward.1} parent=1 // pred_check
      _
    $region67: #{ac_discriminator_forward.1} parent=1 // pred_check_branch
      %195 = sbr.rel (0) target = $region69
    $region68: #{ac_discriminator_forward.1} parent=1 // pred_region
      %s197 = ssub.s32 16, 16
      %198 = vsyncadd [#allocation26], %s197
      %s200 = sshll.u32 [#allocation25], 4
      %s201 = int_to_ptr.vmem [resolvable:$true] %s200
      %203 = dma.hbm_to_vmem [thread:$0]  %s16, 16, %s201, [#allocation26]
    $region69: #{ac_discriminator_forward.1} parent=1 // pred_fallthru
      _
    // Predicated region
    $region70: #{ac_discriminator_forward.1} parent=1 // pred_check
      _
    $region71: #{ac_discriminator_forward.1} parent=1 // pred_check_branch
      %205 = sbr.rel (0) target = $region73
    $region72: #{ac_discriminator_forward.1} parent=1 // pred_region
      %s207 = ssub.s32 1024, 1024
      %208 = vsyncadd [#allocation26], %s207
      %s209 = sshll.u32 [#allocation27], 4
      %s210 = int_to_ptr.vmem [resolvable:$true] %s209
      %215 = dma.hbm_to_vmem [thread:$0]  %s17, 1024, %s210, [#allocation26], 64, 64, 4
    $region73: #{ac_discriminator_forward.1} parent=1 // pred_fallthru
      _
    // Predicated region
    $region74: #{ac_discriminator_forward.1} parent=1 // pred_check
      _
    $region75: #{ac_discriminator_forward.1} parent=1 // pred_check_branch
      %217 = sbr.rel (0) target = $region77
    $region76: #{ac_discriminator_forward.1} parent=1 // pred_region
      %s219 = ssub.s32 16, 16
      %220 = vsyncadd [#allocation29], %s219
      %s222 = sshll.u32 [#allocation28], 4
      %s223 = int_to_ptr.vmem [resolvable:$true] %s222
      %225 = dma.hbm_to_vmem [thread:$0]  %s18, 16, %s223, [#allocation29]
    $region77: #{ac_discriminator_forward.1} parent=1 // pred_fallthru
      _
    // Predicated region
    $region78: #{ac_discriminator_forward.1} parent=1 // pred_check
      _
    $region79: #{ac_discriminator_forward.1} parent=1 // pred_check_branch
      %227 = sbr.rel (0) target = $region81
    $region80: #{ac_discriminator_forward.1} parent=1 // pred_region
      %228 = dma.done [#allocation3], 65536
    $region81: #{ac_discriminator_forward.1} parent=1 // pred_fallthru
      _
    // Predicated region
    $region82: #{ac_discriminator_forward.1} parent=1 // pred_check
      _
    $region83: #{ac_discriminator_forward.1} parent=1 // pred_check_branch
      %230 = sbr.rel (0) target = $region85
    $region84: #{ac_discriminator_forward.1} parent=1 // pred_region
      %231 = dma.done [#allocation5], 128
    $region85: #{ac_discriminator_forward.1} parent=1 // pred_fallthru
      _
    // Predicated region
    $region86: #{ac_discriminator_forward.1} parent=1 // pred_check
      _
    $region87: #{ac_discriminator_forward.1} parent=1 // pred_check_branch
      %233 = sbr.rel (0) target = $region89
    $region88: #{ac_discriminator_forward.1} parent=1 // pred_region
      %234 = dma.done [#allocation5], 128
    $region89: #{ac_discriminator_forward.1} parent=1 // pred_fallthru
      _
    // Predicated region
    $region90: #{ac_discriminator_forward.1} parent=1 // pred_check
      _
    $region91: #{ac_discriminator_forward.1} parent=1 // pred_check_branch
      %236 = sbr.rel (0) target = $region93
    $region92: #{ac_discriminator_forward.1} parent=1 // pred_region
      %237 = dma.done [#allocation8], 128
    $region93: #{ac_discriminator_forward.1} parent=1 // pred_fallthru
      _
    // Predicated region
    $region94: #{ac_discriminator_forward.1} parent=1 // pred_check
      _
    $region95: #{ac_discriminator_forward.1} parent=1 // pred_check_branch
      %239 = sbr.rel (0) target = $region97
    $region96: #{ac_discriminator_forward.1} parent=1 // pred_region
      %240 = dma.done [#allocation8], 32768
    $region97: #{ac_discriminator_forward.1} parent=1 // pred_fallthru
      _
    // Predicated region
    $region98: #{ac_discriminator_forward.1} parent=1 // pred_check
      _
    $region99: #{ac_discriminator_forward.1} parent=1 // pred_check_branch
      %242 = sbr.rel (0) target = $region101
    $region100: #{ac_discriminator_forward.1} parent=1 // pred_region
      %243 = dma.done [#allocation11], 64
    $region101: #{ac_discriminator_forward.1} parent=1 // pred_fallthru
      _
    // Predicated region
    $region102: #{ac_discriminator_forward.1} parent=1 // pred_check
      _
    $region103: #{ac_discriminator_forward.1} parent=1 // pred_check_branch
      %245 = sbr.rel (0) target = $region105
    $region104: #{ac_discriminator_forward.1} parent=1 // pred_region
      %246 = dma.done [#allocation11], 64
    $region105: #{ac_discriminator_forward.1} parent=1 // pred_fallthru
      _
    // Predicated region
    $region106: #{ac_discriminator_forward.1} parent=1 // pred_check
      _
    $region107: #{ac_discriminator_forward.1} parent=1 // pred_check_branch
      %248 = sbr.rel (0) target = $region109
    $region108: #{ac_discriminator_forward.1} parent=1 // pred_region
      %249 = dma.done [#allocation14], 64
    $region109: #{ac_discriminator_forward.1} parent=1 // pred_fallthru
      _
    // Predicated region
    $region110: #{ac_discriminator_forward.1} parent=1 // pred_check
      _
    $region111: #{ac_discriminator_forward.1} parent=1 // pred_check_branch
      %251 = sbr.rel (0) target = $region113
    $region112: #{ac_discriminator_forward.1} parent=1 // pred_region
      %252 = dma.done [#allocation14], 8192
    $region113: #{ac_discriminator_forward.1} parent=1 // pred_fallthru
      _
    // Predicated region
    $region114: #{ac_discriminator_forward.1} parent=1 // pred_check
      _
    $region115: #{ac_discriminator_forward.1} parent=1 // pred_check_branch
      %254 = sbr.rel (0) target = $region117
    $region116: #{ac_discriminator_forward.1} parent=1 // pred_region
      %255 = dma.done [#allocation17], 32
    $region117: #{ac_discriminator_forward.1} parent=1 // pred_fallthru
      _
    // Predicated region
    $region118: #{ac_discriminator_forward.1} parent=1 // pred_check
      _
    $region119: #{ac_discriminator_forward.1} parent=1 // pred_check_branch
      %257 = sbr.rel (0) target = $region121
    $region120: #{ac_discriminator_forward.1} parent=1 // pred_region
      %258 = dma.done [#allocation17], 32
    $region121: #{ac_discriminator_forward.1} parent=1 // pred_fallthru
      _
    // Predicated region
    $region122: #{ac_discriminator_forward.1} parent=1 // pred_check
      _
    $region123: #{ac_discriminator_forward.1} parent=1 // pred_check_branch
      %260 = sbr.rel (0) target = $region125
    $region124: #{ac_discriminator_forward.1} parent=1 // pred_region
      %261 = dma.done [#allocation20], 32
    $region125: #{ac_discriminator_forward.1} parent=1 // pred_fallthru
      _
    // Predicated region
    $region126: #{ac_discriminator_forward.1} parent=1 // pred_check
      _
    $region127: #{ac_discriminator_forward.1} parent=1 // pred_check_branch
      %263 = sbr.rel (0) target = $region129
    $region128: #{ac_discriminator_forward.1} parent=1 // pred_region
      %264 = dma.done [#allocation20], 2048
    $region129: #{ac_discriminator_forward.1} parent=1 // pred_fallthru
      _
    // Predicated region
    $region130: #{ac_discriminator_forward.1} parent=1 // pred_check
      _
    $region131: #{ac_discriminator_forward.1} parent=1 // pred_check_branch
      %266 = sbr.rel (0) target = $region133
    $region132: #{ac_discriminator_forward.1} parent=1 // pred_region
      %267 = dma.done [#allocation23], 16
    $region133: #{ac_discriminator_forward.1} parent=1 // pred_fallthru
      _
    // Predicated region
    $region134: #{ac_discriminator_forward.1} parent=1 // pred_check
      _
    $region135: #{ac_discriminator_forward.1} parent=1 // pred_check_branch
      %269 = sbr.rel (0) target = $region137
    $region136: #{ac_discriminator_forward.1} parent=1 // pred_region
      %270 = dma.done [#allocation23], 16
    $region137: #{ac_discriminator_forward.1} parent=1 // pred_fallthru
      _
    // Predicated region
    $region138: #{ac_discriminator_forward.1} parent=1 // pred_check
      _
    $region139: #{ac_discriminator_forward.1} parent=1 // pred_check_branch
      %272 = sbr.rel (0) target = $region141
    $region140: #{ac_discriminator_forward.1} parent=1 // pred_region
      %273 = dma.done [#allocation26], 16
    $region141: #{ac_discriminator_forward.1} parent=1 // pred_fallthru
      _
    // Predicated region
    $region142: #{ac_discriminator_forward.1} parent=1 // pred_check
      _
    $region143: #{ac_discriminator_forward.1} parent=1 // pred_check_branch
      %275 = sbr.rel (0) target = $region145
    $region144: #{ac_discriminator_forward.1} parent=1 // pred_region
      %276 = dma.done [#allocation26], 1024
    $region145: #{ac_discriminator_forward.1} parent=1 // pred_fallthru
      _
    // Predicated region
    $region146: #{ac_discriminator_forward.1} parent=1 // pred_check
      _
    $region147: #{ac_discriminator_forward.1} parent=1 // pred_check_branch
      %278 = sbr.rel (0) target = $region149
    $region148: #{ac_discriminator_forward.1} parent=1 // pred_region
      %279 = dma.done [#allocation29], 16
    $region149: #{ac_discriminator_forward.1} parent=1 // pred_fallthru
      _
    %v281 = vld [vmem:[%s0] sm:$0xff]
    %v282 = vld [vmem:[%s0 + $0x8] sm:$0xff]
    %v283 = vld [vmem:[%s0 + $0x10] sm:$0xff]
    %v284 = vld [vmem:[%s0 + $0x18] sm:$0xff]
    %v285 = vld [vmem:[%s0 + $0x20] sm:$0xff]
    %v286 = vld [vmem:[%s0 + $0x28] sm:$0xff]
    %v287 = vld [vmem:[%s0 + $0x30] sm:$0xff]
    %v288 = vld [vmem:[%s0 + $0x38] sm:$0xff]
    %v289 = vpack.c.bf16 %v281, %v281
    %v290 = vpack.c.bf16 %v282, %v282
    %v291 = vpack.c.bf16 %v283, %v283
    %v292 = vpack.c.bf16 %v284, %v284
    %v293 = vpack.c.bf16 %v285, %v285
    %v294 = vpack.c.bf16 %v286, %v286
    %v295 = vpack.c.bf16 %v287, %v287
    %v296 = vpack.c.bf16 %v288, %v288
    %v297 = vld [vmem:[#allocation2] sm:$0xff]
    %v298 = vld [vmem:[#allocation2 + $0x8] sm:$0xff]
    %v299 = vld [vmem:[#allocation2 + $0x10] sm:$0xff]
    %v300 = vld [vmem:[#allocation2 + $0x18] sm:$0xff]
    %v301 = vld [vmem:[#allocation2 + $0x20] sm:$0xff]
    %v302 = vld [vmem:[#allocation2 + $0x28] sm:$0xff]
    %v303 = vld [vmem:[#allocation2 + $0x30] sm:$0xff]
    %v304 = vld [vmem:[#allocation2 + $0x38] sm:$0xff]
    %v305 = vld [vmem:[#allocation2 + $0x40] sm:$0xff]
    %v306 = vld [vmem:[#allocation2 + $0x48] sm:$0xff]
    %v307 = vld [vmem:[#allocation2 + $0x50] sm:$0xff]
    %v308 = vld [vmem:[#allocation2 + $0x58] sm:$0xff]
    %v309 = vld [vmem:[#allocation2 + $0x60] sm:$0xff]
    %v310 = vld [vmem:[#allocation2 + $0x68] sm:$0xff]
    %v311 = vld [vmem:[#allocation2 + $0x70] sm:$0xff]
    %v312 = vld [vmem:[#allocation2 + $0x78] sm:$0xff]
    %v313 = vld [vmem:[#allocation2 + $0x80] sm:$0xff]
    %v314 = vld [vmem:[#allocation2 + $0x88] sm:$0xff]
    %v315 = vld [vmem:[#allocation2 + $0x90] sm:$0xff]
    %v316 = vld [vmem:[#allocation2 + $0x98] sm:$0xff]
    %v317 = vld [vmem:[#allocation2 + $0xa0] sm:$0xff]
    %v318 = vld [vmem:[#allocation2 + $0xa8] sm:$0xff]
    %v319 = vld [vmem:[#allocation2 + $0xb0] sm:$0xff]
    %v320 = vld [vmem:[#allocation2 + $0xb8] sm:$0xff]
    %v321 = vld [vmem:[#allocation2 + $0xc0] sm:$0xff]
    %v322 = vld [vmem:[#allocation2 + $0xc8] sm:$0xff]
    %v323 = vld [vmem:[#allocation2 + $0xd0] sm:$0xff]
    %v324 = vld [vmem:[#allocation2 + $0xd8] sm:$0xff]
    %v325 = vld [vmem:[#allocation2 + $0xe0] sm:$0xff]
    %v326 = vld [vmem:[#allocation2 + $0xe8] sm:$0xff]
    %v327 = vld [vmem:[#allocation2 + $0xf0] sm:$0xff]
    %v328 = vld [vmem:[#allocation2 + $0xf8] sm:$0xff]
    %v329 = vld [vmem:[#allocation2 + $0x100] sm:$0xff]
    %v330 = vld [vmem:[#allocation2 + $0x108] sm:$0xff]
    %v331 = vld [vmem:[#allocation2 + $0x110] sm:$0xff]
    %v332 = vld [vmem:[#allocation2 + $0x118] sm:$0xff]
    %v333 = vld [vmem:[#allocation2 + $0x120] sm:$0xff]
    %v334 = vld [vmem:[#allocation2 + $0x128] sm:$0xff]
    %v335 = vld [vmem:[#allocation2 + $0x130] sm:$0xff]
    %v336 = vld [vmem:[#allocation2 + $0x138] sm:$0xff]
    %v337 = vld [vmem:[#allocation2 + $0x140] sm:$0xff]
    %v338 = vld [vmem:[#allocation2 + $0x148] sm:$0xff]
    %v339 = vld [vmem:[#allocation2 + $0x150] sm:$0xff]
    %v340 = vld [vmem:[#allocation2 + $0x158] sm:$0xff]
    %v341 = vld [vmem:[#allocation2 + $0x160] sm:$0xff]
    %v342 = vld [vmem:[#allocation2 + $0x168] sm:$0xff]
    %v343 = vld [vmem:[#allocation2 + $0x170] sm:$0xff]
    %v344 = vld [vmem:[#allocation2 + $0x178] sm:$0xff]
    %v345 = vld [vmem:[#allocation2 + $0x180] sm:$0xff]
    %v346 = vld [vmem:[#allocation2 + $0x188] sm:$0xff]
    %v347 = vld [vmem:[#allocation2 + $0x190] sm:$0xff]
    %v348 = vld [vmem:[#allocation2 + $0x198] sm:$0xff]
    %v349 = vld [vmem:[#allocation2 + $0x1a0] sm:$0xff]
    %v350 = vld [vmem:[#allocation2 + $0x1a8] sm:$0xff]
    %v351 = vld [vmem:[#allocation2 + $0x1b0] sm:$0xff]
    %v352 = vld [vmem:[#allocation2 + $0x1b8] sm:$0xff]
    %v353 = vld [vmem:[#allocation2 + $0x1c0] sm:$0xff]
    %v354 = vld [vmem:[#allocation2 + $0x1c8] sm:$0xff]
    %v355 = vld [vmem:[#allocation2 + $0x1d0] sm:$0xff]
    %v356 = vld [vmem:[#allocation2 + $0x1d8] sm:$0xff]
    %v357 = vld [vmem:[#allocation2 + $0x1e0] sm:$0xff]
    %v358 = vld [vmem:[#allocation2 + $0x1e8] sm:$0xff]
    %v359 = vld [vmem:[#allocation2 + $0x1f0] sm:$0xff]
    %v360 = vld [vmem:[#allocation2 + $0x1f8] sm:$0xff]
    %v361 = vld [vmem:[#allocation2 + $0x200] sm:$0xff]
    %v362 = vld [vmem:[#allocation2 + $0x208] sm:$0xff]
    %v363 = vld [vmem:[#allocation2 + $0x210] sm:$0xff]
    %v364 = vld [vmem:[#allocation2 + $0x218] sm:$0xff]
    %v365 = vld [vmem:[#allocation2 + $0x220] sm:$0xff]
    %v366 = vld [vmem:[#allocation2 + $0x228] sm:$0xff]
    %v367 = vld [vmem:[#allocation2 + $0x230] sm:$0xff]
    %v368 = vld [vmem:[#allocation2 + $0x238] sm:$0xff]
    %v369 = vld [vmem:[#allocation2 + $0x240] sm:$0xff]
    %v370 = vld [vmem:[#allocation2 + $0x248] sm:$0xff]
    %v371 = vld [vmem:[#allocation2 + $0x250] sm:$0xff]
    %v372 = vld [vmem:[#allocation2 + $0x258] sm:$0xff]
    %v373 = vld [vmem:[#allocation2 + $0x260] sm:$0xff]
    %v374 = vld [vmem:[#allocation2 + $0x268] sm:$0xff]
    %v375 = vld [vmem:[#allocation2 + $0x270] sm:$0xff]
    %v376 = vld [vmem:[#allocation2 + $0x278] sm:$0xff]
    %v377 = vld [vmem:[#allocation2 + $0x280] sm:$0xff]
    %v378 = vld [vmem:[#allocation2 + $0x288] sm:$0xff]
    %v379 = vld [vmem:[#allocation2 + $0x290] sm:$0xff]
    %v380 = vld [vmem:[#allocation2 + $0x298] sm:$0xff]
    %v381 = vld [vmem:[#allocation2 + $0x2a0] sm:$0xff]
    %v382 = vld [vmem:[#allocation2 + $0x2a8] sm:$0xff]
    %v383 = vld [vmem:[#allocation2 + $0x2b0] sm:$0xff]
    %v384 = vld [vmem:[#allocation2 + $0x2b8] sm:$0xff]
    %v385 = vld [vmem:[#allocation2 + $0x2c0] sm:$0xff]
    %v386 = vld [vmem:[#allocation2 + $0x2c8] sm:$0xff]
    %v387 = vld [vmem:[#allocation2 + $0x2d0] sm:$0xff]
    %v388 = vld [vmem:[#allocation2 + $0x2d8] sm:$0xff]
    %v389 = vld [vmem:[#allocation2 + $0x2e0] sm:$0xff]
    %v390 = vld [vmem:[#allocation2 + $0x2e8] sm:$0xff]
    %v391 = vld [vmem:[#allocation2 + $0x2f0] sm:$0xff]
    %v392 = vld [vmem:[#allocation2 + $0x2f8] sm:$0xff]
    %v393 = vld [vmem:[#allocation2 + $0x300] sm:$0xff]
    %v394 = vld [vmem:[#allocation2 + $0x308] sm:$0xff]
    %v395 = vld [vmem:[#allocation2 + $0x310] sm:$0xff]
    %v396 = vld [vmem:[#allocation2 + $0x318] sm:$0xff]
    %v397 = vld [vmem:[#allocation2 + $0x320] sm:$0xff]
    %v398 = vld [vmem:[#allocation2 + $0x328] sm:$0xff]
    %v399 = vld [vmem:[#allocation2 + $0x330] sm:$0xff]
    %v400 = vld [vmem:[#allocation2 + $0x338] sm:$0xff]
    %v401 = vld [vmem:[#allocation2 + $0x340] sm:$0xff]
    %v402 = vld [vmem:[#allocation2 + $0x348] sm:$0xff]
    %v403 = vld [vmem:[#allocation2 + $0x350] sm:$0xff]
    %v404 = vld [vmem:[#allocation2 + $0x358] sm:$0xff]
    %v405 = vld [vmem:[#allocation2 + $0x360] sm:$0xff]
    %v406 = vld [vmem:[#allocation2 + $0x368] sm:$0xff]
    %v407 = vld [vmem:[#allocation2 + $0x370] sm:$0xff]
    %v408 = vld [vmem:[#allocation2 + $0x378] sm:$0xff]
    %v409 = vld [vmem:[#allocation2 + $0x380] sm:$0xff]
    %v410 = vld [vmem:[#allocation2 + $0x388] sm:$0xff]
    %v411 = vld [vmem:[#allocation2 + $0x390] sm:$0xff]
    %v412 = vld [vmem:[#allocation2 + $0x398] sm:$0xff]
    %v413 = vld [vmem:[#allocation2 + $0x3a0] sm:$0xff]
    %v414 = vld [vmem:[#allocation2 + $0x3a8] sm:$0xff]
    %v415 = vld [vmem:[#allocation2 + $0x3b0] sm:$0xff]
    %v416 = vld [vmem:[#allocation2 + $0x3b8] sm:$0xff]
    %v417 = vld [vmem:[#allocation2 + $0x3c0] sm:$0xff]
    %v418 = vld [vmem:[#allocation2 + $0x3c8] sm:$0xff]
    %v419 = vld [vmem:[#allocation2 + $0x3d0] sm:$0xff]
    %v420 = vld [vmem:[#allocation2 + $0x3d8] sm:$0xff]
    %v421 = vld [vmem:[#allocation2 + $0x3e0] sm:$0xff]
    %v422 = vld [vmem:[#allocation2 + $0x3e8] sm:$0xff]
    %v423 = vld [vmem:[#allocation2 + $0x3f0] sm:$0xff]
    %v424 = vld [vmem:[#allocation2 + $0x3f8] sm:$0xff]
    %v425 = vld [vmem:[#allocation2 + $0x400] sm:$0xff]
    %v426 = vld [vmem:[#allocation2 + $0x408] sm:$0xff]
    %v427 = vld [vmem:[#allocation2 + $0x410] sm:$0xff]
    %v428 = vld [vmem:[#allocation2 + $0x418] sm:$0xff]
    %v429 = vld [vmem:[#allocation2 + $0x420] sm:$0xff]
    %v430 = vld [vmem:[#allocation2 + $0x428] sm:$0xff]
    %v431 = vld [vmem:[#allocation2 + $0x430] sm:$0xff]
    %v432 = vld [vmem:[#allocation2 + $0x438] sm:$0xff]
    %v433 = vld [vmem:[#allocation2 + $0x440] sm:$0xff]
    %v434 = vld [vmem:[#allocation2 + $0x448] sm:$0xff]
    %v435 = vld [vmem:[#allocation2 + $0x450] sm:$0xff]
    %v436 = vld [vmem:[#allocation2 + $0x458] sm:$0xff]
    %v437 = vld [vmem:[#allocation2 + $0x460] sm:$0xff]
    %v438 = vld [vmem:[#allocation2 + $0x468] sm:$0xff]
    %v439 = vld [vmem:[#allocation2 + $0x470] sm:$0xff]
    %v440 = vld [vmem:[#allocation2 + $0x478] sm:$0xff]
    %v441 = vld [vmem:[#allocation2 + $0x480] sm:$0xff]
    %v442 = vld [vmem:[#allocation2 + $0x488] sm:$0xff]
    %v443 = vld [vmem:[#allocation2 + $0x490] sm:$0xff]
    %v444 = vld [vmem:[#allocation2 + $0x498] sm:$0xff]
    %v445 = vld [vmem:[#allocation2 + $0x4a0] sm:$0xff]
    %v446 = vld [vmem:[#allocation2 + $0x4a8] sm:$0xff]
    %v447 = vld [vmem:[#allocation2 + $0x4b0] sm:$0xff]
    %v448 = vld [vmem:[#allocation2 + $0x4b8] sm:$0xff]
    %v449 = vld [vmem:[#allocation2 + $0x4c0] sm:$0xff]
    %v450 = vld [vmem:[#allocation2 + $0x4c8] sm:$0xff]
    %v451 = vld [vmem:[#allocation2 + $0x4d0] sm:$0xff]
    %v452 = vld [vmem:[#allocation2 + $0x4d8] sm:$0xff]
    %v453 = vld [vmem:[#allocation2 + $0x4e0] sm:$0xff]
    %v454 = vld [vmem:[#allocation2 + $0x4e8] sm:$0xff]
    %v455 = vld [vmem:[#allocation2 + $0x4f0] sm:$0xff]
    %v456 = vld [vmem:[#allocation2 + $0x4f8] sm:$0xff]
    %v457 = vld [vmem:[#allocation2 + $0x500] sm:$0xff]
    %v458 = vld [vmem:[#allocation2 + $0x508] sm:$0xff]
    %v459 = vld [vmem:[#allocation2 + $0x510] sm:$0xff]
    %v460 = vld [vmem:[#allocation2 + $0x518] sm:$0xff]
    %v461 = vld [vmem:[#allocation2 + $0x520] sm:$0xff]
    %v462 = vld [vmem:[#allocation2 + $0x528] sm:$0xff]
    %v463 = vld [vmem:[#allocation2 + $0x530] sm:$0xff]
    %v464 = vld [vmem:[#allocation2 + $0x538] sm:$0xff]
    %v465 = vld [vmem:[#allocation2 + $0x540] sm:$0xff]
    %v466 = vld [vmem:[#allocation2 + $0x548] sm:$0xff]
    %v467 = vld [vmem:[#allocation2 + $0x550] sm:$0xff]
    %v468 = vld [vmem:[#allocation2 + $0x558] sm:$0xff]
    %v469 = vld [vmem:[#allocation2 + $0x560] sm:$0xff]
    %v470 = vld [vmem:[#allocation2 + $0x568] sm:$0xff]
    %v471 = vld [vmem:[#allocation2 + $0x570] sm:$0xff]
    %v472 = vld [vmem:[#allocation2 + $0x578] sm:$0xff]
    %v473 = vld [vmem:[#allocation2 + $0x580] sm:$0xff]
    %v474 = vld [vmem:[#allocation2 + $0x588] sm:$0xff]
    %v475 = vld [vmem:[#allocation2 + $0x590] sm:$0xff]
    %v476 = vld [vmem:[#allocation2 + $0x598] sm:$0xff]
    %v477 = vld [vmem:[#allocation2 + $0x5a0] sm:$0xff]
    %v478 = vld [vmem:[#allocation2 + $0x5a8] sm:$0xff]
    %v479 = vld [vmem:[#allocation2 + $0x5b0] sm:$0xff]
    %v480 = vld [vmem:[#allocation2 + $0x5b8] sm:$0xff]
    %v481 = vld [vmem:[#allocation2 + $0x5c0] sm:$0xff]
    %v482 = vld [vmem:[#allocation2 + $0x5c8] sm:$0xff]
    %v483 = vld [vmem:[#allocation2 + $0x5d0] sm:$0xff]
    %v484 = vld [vmem:[#allocation2 + $0x5d8] sm:$0xff]
    %v485 = vld [vmem:[#allocation2 + $0x5e0] sm:$0xff]
    %v486 = vld [vmem:[#allocation2 + $0x5e8] sm:$0xff]
    %v487 = vld [vmem:[#allocation2 + $0x5f0] sm:$0xff]
    %v488 = vld [vmem:[#allocation2 + $0x5f8] sm:$0xff]
    %v489 = vld [vmem:[#allocation2 + $0x600] sm:$0xff]
    %v490 = vld [vmem:[#allocation2 + $0x608] sm:$0xff]
    %v491 = vld [vmem:[#allocation2 + $0x610] sm:$0xff]
    %v492 = vld [vmem:[#allocation2 + $0x618] sm:$0xff]
    %v493 = vld [vmem:[#allocation2 + $0x620] sm:$0xff]
    %v494 = vld [vmem:[#allocation2 + $0x628] sm:$0xff]
    %v495 = vld [vmem:[#allocation2 + $0x630] sm:$0xff]
    %v496 = vld [vmem:[#allocation2 + $0x638] sm:$0xff]
    %v497 = vld [vmem:[#allocation2 + $0x640] sm:$0xff]
    %v498 = vld [vmem:[#allocation2 + $0x648] sm:$0xff]
    %v499 = vld [vmem:[#allocation2 + $0x650] sm:$0xff]
    %v500 = vld [vmem:[#allocation2 + $0x658] sm:$0xff]
    %v501 = vld [vmem:[#allocation2 + $0x660] sm:$0xff]
    %v502 = vld [vmem:[#allocation2 + $0x668] sm:$0xff]
    %v503 = vld [vmem:[#allocation2 + $0x670] sm:$0xff]
    %v504 = vld [vmem:[#allocation2 + $0x678] sm:$0xff]
    %v505 = vld [vmem:[#allocation2 + $0x680] sm:$0xff]
    %v506 = vld [vmem:[#allocation2 + $0x688] sm:$0xff]
    %v507 = vld [vmem:[#allocation2 + $0x690] sm:$0xff]
    %v508 = vld [vmem:[#allocation2 + $0x698] sm:$0xff]
    %v509 = vld [vmem:[#allocation2 + $0x6a0] sm:$0xff]
    %v510 = vld [vmem:[#allocation2 + $0x6a8] sm:$0xff]
    %v511 = vld [vmem:[#allocation2 + $0x6b0] sm:$0xff]
    %v512 = vld [vmem:[#allocation2 + $0x6b8] sm:$0xff]
    %v513 = vld [vmem:[#allocation2 + $0x6c0] sm:$0xff]
    %v514 = vld [vmem:[#allocation2 + $0x6c8] sm:$0xff]
    %v515 = vld [vmem:[#allocation2 + $0x6d0] sm:$0xff]
    %v516 = vld [vmem:[#allocation2 + $0x6d8] sm:$0xff]
    %v517 = vld [vmem:[#allocation2 + $0x6e0] sm:$0xff]
    %v518 = vld [vmem:[#allocation2 + $0x6e8] sm:$0xff]
    %v519 = vld [vmem:[#allocation2 + $0x6f0] sm:$0xff]
    %v520 = vld [vmem:[#allocation2 + $0x6f8] sm:$0xff]
    %v521 = vld [vmem:[#allocation2 + $0x700] sm:$0xff]
    %v522 = vld [vmem:[#allocation2 + $0x708] sm:$0xff]
    %v523 = vld [vmem:[#allocation2 + $0x710] sm:$0xff]
    %v524 = vld [vmem:[#allocation2 + $0x718] sm:$0xff]
    %v525 = vld [vmem:[#allocation2 + $0x720] sm:$0xff]
    %v526 = vld [vmem:[#allocation2 + $0x728] sm:$0xff]
    %v527 = vld [vmem:[#allocation2 + $0x730] sm:$0xff]
    %v528 = vld [vmem:[#allocation2 + $0x738] sm:$0xff]
    %v529 = vld [vmem:[#allocation2 + $0x740] sm:$0xff]
    %v530 = vld [vmem:[#allocation2 + $0x748] sm:$0xff]
    %v531 = vld [vmem:[#allocation2 + $0x750] sm:$0xff]
    %v532 = vld [vmem:[#allocation2 + $0x758] sm:$0xff]
    %v533 = vld [vmem:[#allocation2 + $0x760] sm:$0xff]
    %v534 = vld [vmem:[#allocation2 + $0x768] sm:$0xff]
    %v535 = vld [vmem:[#allocation2 + $0x770] sm:$0xff]
    %v536 = vld [vmem:[#allocation2 + $0x778] sm:$0xff]
    %v537 = vld [vmem:[#allocation2 + $0x780] sm:$0xff]
    %v538 = vld [vmem:[#allocation2 + $0x788] sm:$0xff]
    %v539 = vld [vmem:[#allocation2 + $0x790] sm:$0xff]
    %v540 = vld [vmem:[#allocation2 + $0x798] sm:$0xff]
    %v541 = vld [vmem:[#allocation2 + $0x7a0] sm:$0xff]
    %v542 = vld [vmem:[#allocation2 + $0x7a8] sm:$0xff]
    %v543 = vld [vmem:[#allocation2 + $0x7b0] sm:$0xff]
    %v544 = vld [vmem:[#allocation2 + $0x7b8] sm:$0xff]
    %v545 = vld [vmem:[#allocation2 + $0x7c0] sm:$0xff]
    %v546 = vld [vmem:[#allocation2 + $0x7c8] sm:$0xff]
    %v547 = vld [vmem:[#allocation2 + $0x7d0] sm:$0xff]
    %v548 = vld [vmem:[#allocation2 + $0x7d8] sm:$0xff]
    %v549 = vld [vmem:[#allocation2 + $0x7e0] sm:$0xff]
    %v550 = vld [vmem:[#allocation2 + $0x7e8] sm:$0xff]
    %v551 = vld [vmem:[#allocation2 + $0x7f0] sm:$0xff]
    %v552 = vld [vmem:[#allocation2 + $0x7f8] sm:$0xff]
    %v553 = vld [vmem:[#allocation2 + $0x800] sm:$0xff]
    %v554 = vld [vmem:[#allocation2 + $0x808] sm:$0xff]
    %v555 = vld [vmem:[#allocation2 + $0x810] sm:$0xff]
    %v556 = vld [vmem:[#allocation2 + $0x818] sm:$0xff]
    %v557 = vld [vmem:[#allocation2 + $0x820] sm:$0xff]
    %v558 = vld [vmem:[#allocation2 + $0x828] sm:$0xff]
    %v559 = vld [vmem:[#allocation2 + $0x830] sm:$0xff]
    %v560 = vld [vmem:[#allocation2 + $0x838] sm:$0xff]
    %v561 = vld [vmem:[#allocation2 + $0x840] sm:$0xff]
    %v562 = vld [vmem:[#allocation2 + $0x848] sm:$0xff]
    %v563 = vld [vmem:[#allocation2 + $0x850] sm:$0xff]
    %v564 = vld [vmem:[#allocation2 + $0x858] sm:$0xff]
    %v565 = vld [vmem:[#allocation2 + $0x860] sm:$0xff]
    %v566 = vld [vmem:[#allocation2 + $0x868] sm:$0xff]
    %v567 = vld [vmem:[#allocation2 + $0x870] sm:$0xff]
    %v568 = vld [vmem:[#allocation2 + $0x878] sm:$0xff]
    %v569 = vld [vmem:[#allocation2 + $0x880] sm:$0xff]
    %v570 = vld [vmem:[#allocation2 + $0x888] sm:$0xff]
    %v571 = vld [vmem:[#allocation2 + $0x890] sm:$0xff]
    %v572 = vld [vmem:[#allocation2 + $0x898] sm:$0xff]
    %v573 = vld [vmem:[#allocation2 + $0x8a0] sm:$0xff]
    %v574 = vld [vmem:[#allocation2 + $0x8a8] sm:$0xff]
    %v575 = vld [vmem:[#allocation2 + $0x8b0] sm:$0xff]
    %v576 = vld [vmem:[#allocation2 + $0x8b8] sm:$0xff]
    %v577 = vld [vmem:[#allocation2 + $0x8c0] sm:$0xff]
    %v578 = vld [vmem:[#allocation2 + $0x8c8] sm:$0xff]
    %v579 = vld [vmem:[#allocation2 + $0x8d0] sm:$0xff]
    %v580 = vld [vmem:[#allocation2 + $0x8d8] sm:$0xff]
    %v581 = vld [vmem:[#allocation2 + $0x8e0] sm:$0xff]
    %v582 = vld [vmem:[#allocation2 + $0x8e8] sm:$0xff]
    %v583 = vld [vmem:[#allocation2 + $0x8f0] sm:$0xff]
    %v584 = vld [vmem:[#allocation2 + $0x8f8] sm:$0xff]
    %v585 = vld [vmem:[#allocation2 + $0x900] sm:$0xff]
    %v586 = vld [vmem:[#allocation2 + $0x908] sm:$0xff]
    %v587 = vld [vmem:[#allocation2 + $0x910] sm:$0xff]
    %v588 = vld [vmem:[#allocation2 + $0x918] sm:$0xff]
    %v589 = vld [vmem:[#allocation2 + $0x920] sm:$0xff]
    %v590 = vld [vmem:[#allocation2 + $0x928] sm:$0xff]
    %v591 = vld [vmem:[#allocation2 + $0x930] sm:$0xff]
    %v592 = vld [vmem:[#allocation2 + $0x938] sm:$0xff]
    %v593 = vld [vmem:[#allocation2 + $0x940] sm:$0xff]
    %v594 = vld [vmem:[#allocation2 + $0x948] sm:$0xff]
    %v595 = vld [vmem:[#allocation2 + $0x950] sm:$0xff]
    %v596 = vld [vmem:[#allocation2 + $0x958] sm:$0xff]
    %v597 = vld [vmem:[#allocation2 + $0x960] sm:$0xff]
    %v598 = vld [vmem:[#allocation2 + $0x968] sm:$0xff]
    %v599 = vld [vmem:[#allocation2 + $0x970] sm:$0xff]
    %v600 = vld [vmem:[#allocation2 + $0x978] sm:$0xff]
    %v601 = vld [vmem:[#allocation2 + $0x980] sm:$0xff]
    %v602 = vld [vmem:[#allocation2 + $0x988] sm:$0xff]
    %v603 = vld [vmem:[#allocation2 + $0x990] sm:$0xff]
    %v604 = vld [vmem:[#allocation2 + $0x998] sm:$0xff]
    %v605 = vld [vmem:[#allocation2 + $0x9a0] sm:$0xff]
    %v606 = vld [vmem:[#allocation2 + $0x9a8] sm:$0xff]
    %v607 = vld [vmem:[#allocation2 + $0x9b0] sm:$0xff]
    %v608 = vld [vmem:[#allocation2 + $0x9b8] sm:$0xff]
    %v609 = vld [vmem:[#allocation2 + $0x9c0] sm:$0xff]
    %v610 = vld [vmem:[#allocation2 + $0x9c8] sm:$0xff]
    %v611 = vld [vmem:[#allocation2 + $0x9d0] sm:$0xff]
    %v612 = vld [vmem:[#allocation2 + $0x9d8] sm:$0xff]
    %v613 = vld [vmem:[#allocation2 + $0x9e0] sm:$0xff]
    %v614 = vld [vmem:[#allocation2 + $0x9e8] sm:$0xff]
    %v615 = vld [vmem:[#allocation2 + $0x9f0] sm:$0xff]
    %v616 = vld [vmem:[#allocation2 + $0x9f8] sm:$0xff]
    %v617 = vld [vmem:[#allocation2 + $0xa00] sm:$0xff]
    %v618 = vld [vmem:[#allocation2 + $0xa08] sm:$0xff]
    %v619 = vld [vmem:[#allocation2 + $0xa10] sm:$0xff]
    %v620 = vld [vmem:[#allocation2 + $0xa18] sm:$0xff]
    %v621 = vld [vmem:[#allocation2 + $0xa20] sm:$0xff]
    %v622 = vld [vmem:[#allocation2 + $0xa28] sm:$0xff]
    %v623 = vld [vmem:[#allocation2 + $0xa30] sm:$0xff]
    %v624 = vld [vmem:[#allocation2 + $0xa38] sm:$0xff]
    %v625 = vld [vmem:[#allocation2 + $0xa40] sm:$0xff]
    %v626 = vld [vmem:[#allocation2 + $0xa48] sm:$0xff]
    %v627 = vld [vmem:[#allocation2 + $0xa50] sm:$0xff]
    %v628 = vld [vmem:[#allocation2 + $0xa58] sm:$0xff]
    %v629 = vld [vmem:[#allocation2 + $0xa60] sm:$0xff]
    %v630 = vld [vmem:[#allocation2 + $0xa68] sm:$0xff]
    %v631 = vld [vmem:[#allocation2 + $0xa70] sm:$0xff]
    %v632 = vld [vmem:[#allocation2 + $0xa78] sm:$0xff]
    %v633 = vld [vmem:[#allocation2 + $0xa80] sm:$0xff]
    %v634 = vld [vmem:[#allocation2 + $0xa88] sm:$0xff]
    %v635 = vld [vmem:[#allocation2 + $0xa90] sm:$0xff]
    %v636 = vld [vmem:[#allocation2 + $0xa98] sm:$0xff]
    %v637 = vld [vmem:[#allocation2 + $0xaa0] sm:$0xff]
    %v638 = vld [vmem:[#allocation2 + $0xaa8] sm:$0xff]
    %v639 = vld [vmem:[#allocation2 + $0xab0] sm:$0xff]
    %v640 = vld [vmem:[#allocation2 + $0xab8] sm:$0xff]
    %v641 = vld [vmem:[#allocation2 + $0xac0] sm:$0xff]
    %v642 = vld [vmem:[#allocation2 + $0xac8] sm:$0xff]
    %v643 = vld [vmem:[#allocation2 + $0xad0] sm:$0xff]
    %v644 = vld [vmem:[#allocation2 + $0xad8] sm:$0xff]
    %v645 = vld [vmem:[#allocation2 + $0xae0] sm:$0xff]
    %v646 = vld [vmem:[#allocation2 + $0xae8] sm:$0xff]
    %v647 = vld [vmem:[#allocation2 + $0xaf0] sm:$0xff]
    %v648 = vld [vmem:[#allocation2 + $0xaf8] sm:$0xff]
    %v649 = vld [vmem:[#allocation2 + $0xb00] sm:$0xff]
    %v650 = vld [vmem:[#allocation2 + $0xb08] sm:$0xff]
    %v651 = vld [vmem:[#allocation2 + $0xb10] sm:$0xff]
    %v652 = vld [vmem:[#allocation2 + $0xb18] sm:$0xff]
    %v653 = vld [vmem:[#allocation2 + $0xb20] sm:$0xff]
    %v654 = vld [vmem:[#allocation2 + $0xb28] sm:$0xff]
    %v655 = vld [vmem:[#allocation2 + $0xb30] sm:$0xff]
    %v656 = vld [vmem:[#allocation2 + $0xb38] sm:$0xff]
    %v657 = vld [vmem:[#allocation2 + $0xb40] sm:$0xff]
    %v658 = vld [vmem:[#allocation2 + $0xb48] sm:$0xff]
    %v659 = vld [vmem:[#allocation2 + $0xb50] sm:$0xff]
    %v660 = vld [vmem:[#allocation2 + $0xb58] sm:$0xff]
    %v661 = vld [vmem:[#allocation2 + $0xb60] sm:$0xff]
    %v662 = vld [vmem:[#allocation2 + $0xb68] sm:$0xff]
    %v663 = vld [vmem:[#allocation2 + $0xb70] sm:$0xff]
    %v664 = vld [vmem:[#allocation2 + $0xb78] sm:$0xff]
    %v665 = vld [vmem:[#allocation2 + $0xb80] sm:$0xff]
    %v666 = vld [vmem:[#allocation2 + $0xb88] sm:$0xff]
    %v667 = vld [vmem:[#allocation2 + $0xb90] sm:$0xff]
    %v668 = vld [vmem:[#allocation2 + $0xb98] sm:$0xff]
    %v669 = vld [vmem:[#allocation2 + $0xba0] sm:$0xff]
    %v670 = vld [vmem:[#allocation2 + $0xba8] sm:$0xff]
    %v671 = vld [vmem:[#allocation2 + $0xbb0] sm:$0xff]
    %v672 = vld [vmem:[#allocation2 + $0xbb8] sm:$0xff]
    %v673 = vld [vmem:[#allocation2 + $0xbc0] sm:$0xff]
    %v674 = vld [vmem:[#allocation2 + $0xbc8] sm:$0xff]
    %v675 = vld [vmem:[#allocation2 + $0xbd0] sm:$0xff]
    %v676 = vld [vmem:[#allocation2 + $0xbd8] sm:$0xff]
    %v677 = vld [vmem:[#allocation2 + $0xbe0] sm:$0xff]
    %v678 = vld [vmem:[#allocation2 + $0xbe8] sm:$0xff]
    %v679 = vld [vmem:[#allocation2 + $0xbf0] sm:$0xff]
    %v680 = vld [vmem:[#allocation2 + $0xbf8] sm:$0xff]
    %v681 = vld [vmem:[#allocation2 + $0xc00] sm:$0xff]
    %v682 = vld [vmem:[#allocation2 + $0xc08] sm:$0xff]
    %v683 = vld [vmem:[#allocation2 + $0xc10] sm:$0xff]
    %v684 = vld [vmem:[#allocation2 + $0xc18] sm:$0xff]
    %v685 = vld [vmem:[#allocation2 + $0xc20] sm:$0xff]
    %v686 = vld [vmem:[#allocation2 + $0xc28] sm:$0xff]
    %v687 = vld [vmem:[#allocation2 + $0xc30] sm:$0xff]
    %v688 = vld [vmem:[#allocation2 + $0xc38] sm:$0xff]
    %v689 = vld [vmem:[#allocation2 + $0xc40] sm:$0xff]
    %v690 = vld [vmem:[#allocation2 + $0xc48] sm:$0xff]
    %v691 = vld [vmem:[#allocation2 + $0xc50] sm:$0xff]
    %v692 = vld [vmem:[#allocation2 + $0xc58] sm:$0xff]
    %v693 = vld [vmem:[#allocation2 + $0xc60] sm:$0xff]
    %v694 = vld [vmem:[#allocation2 + $0xc68] sm:$0xff]
    %v695 = vld [vmem:[#allocation2 + $0xc70] sm:$0xff]
    %v696 = vld [vmem:[#allocation2 + $0xc78] sm:$0xff]
    %v697 = vld [vmem:[#allocation2 + $0xc80] sm:$0xff]
    %v698 = vld [vmem:[#allocation2 + $0xc88] sm:$0xff]
    %v699 = vld [vmem:[#allocation2 + $0xc90] sm:$0xff]
    %v700 = vld [vmem:[#allocation2 + $0xc98] sm:$0xff]
    %v701 = vld [vmem:[#allocation2 + $0xca0] sm:$0xff]
    %v702 = vld [vmem:[#allocation2 + $0xca8] sm:$0xff]
    %v703 = vld [vmem:[#allocation2 + $0xcb0] sm:$0xff]
    %v704 = vld [vmem:[#allocation2 + $0xcb8] sm:$0xff]
    %v705 = vld [vmem:[#allocation2 + $0xcc0] sm:$0xff]
    %v706 = vld [vmem:[#allocation2 + $0xcc8] sm:$0xff]
    %v707 = vld [vmem:[#allocation2 + $0xcd0] sm:$0xff]
    %v708 = vld [vmem:[#allocation2 + $0xcd8] sm:$0xff]
    %v709 = vld [vmem:[#allocation2 + $0xce0] sm:$0xff]
    %v710 = vld [vmem:[#allocation2 + $0xce8] sm:$0xff]
    %v711 = vld [vmem:[#allocation2 + $0xcf0] sm:$0xff]
    %v712 = vld [vmem:[#allocation2 + $0xcf8] sm:$0xff]
    %v713 = vld [vmem:[#allocation2 + $0xd00] sm:$0xff]
    %v714 = vld [vmem:[#allocation2 + $0xd08] sm:$0xff]
    %v715 = vld [vmem:[#allocation2 + $0xd10] sm:$0xff]
    %v716 = vld [vmem:[#allocation2 + $0xd18] sm:$0xff]
    %v717 = vld [vmem:[#allocation2 + $0xd20] sm:$0xff]
    %v718 = vld [vmem:[#allocation2 + $0xd28] sm:$0xff]
    %v719 = vld [vmem:[#allocation2 + $0xd30] sm:$0xff]
    %v720 = vld [vmem:[#allocation2 + $0xd38] sm:$0xff]
    %v721 = vld [vmem:[#allocation2 + $0xd40] sm:$0xff]
    %v722 = vld [vmem:[#allocation2 + $0xd48] sm:$0xff]
    %v723 = vld [vmem:[#allocation2 + $0xd50] sm:$0xff]
    %v724 = vld [vmem:[#allocation2 + $0xd58] sm:$0xff]
    %v725 = vld [vmem:[#allocation2 + $0xd60] sm:$0xff]
    %v726 = vld [vmem:[#allocation2 + $0xd68] sm:$0xff]
    %v727 = vld [vmem:[#allocation2 + $0xd70] sm:$0xff]
    %v728 = vld [vmem:[#allocation2 + $0xd78] sm:$0xff]
    %v729 = vld [vmem:[#allocation2 + $0xd80] sm:$0xff]
    %v730 = vld [vmem:[#allocation2 + $0xd88] sm:$0xff]
    %v731 = vld [vmem:[#allocation2 + $0xd90] sm:$0xff]
    %v732 = vld [vmem:[#allocation2 + $0xd98] sm:$0xff]
    %v733 = vld [vmem:[#allocation2 + $0xda0] sm:$0xff]
    %v734 = vld [vmem:[#allocation2 + $0xda8] sm:$0xff]
    %v735 = vld [vmem:[#allocation2 + $0xdb0] sm:$0xff]
    %v736 = vld [vmem:[#allocation2 + $0xdb8] sm:$0xff]
    %v737 = vld [vmem:[#allocation2 + $0xdc0] sm:$0xff]
    %v738 = vld [vmem:[#allocation2 + $0xdc8] sm:$0xff]
    %v739 = vld [vmem:[#allocation2 + $0xdd0] sm:$0xff]
    %v740 = vld [vmem:[#allocation2 + $0xdd8] sm:$0xff]
    %v741 = vld [vmem:[#allocation2 + $0xde0] sm:$0xff]
    %v742 = vld [vmem:[#allocation2 + $0xde8] sm:$0xff]
    %v743 = vld [vmem:[#allocation2 + $0xdf0] sm:$0xff]
    %v744 = vld [vmem:[#allocation2 + $0xdf8] sm:$0xff]
    %v745 = vld [vmem:[#allocation2 + $0xe00] sm:$0xff]
    %v746 = vld [vmem:[#allocation2 + $0xe08] sm:$0xff]
    %v747 = vld [vmem:[#allocation2 + $0xe10] sm:$0xff]
    %v748 = vld [vmem:[#allocation2 + $0xe18] sm:$0xff]
    %v749 = vld [vmem:[#allocation2 + $0xe20] sm:$0xff]
    %v750 = vld [vmem:[#allocation2 + $0xe28] sm:$0xff]
    %v751 = vld [vmem:[#allocation2 + $0xe30] sm:$0xff]
    %v752 = vld [vmem:[#allocation2 + $0xe38] sm:$0xff]
    %v753 = vld [vmem:[#allocation2 + $0xe40] sm:$0xff]
    %v754 = vld [vmem:[#allocation2 + $0xe48] sm:$0xff]
    %v755 = vld [vmem:[#allocation2 + $0xe50] sm:$0xff]
    %v756 = vld [vmem:[#allocation2 + $0xe58] sm:$0xff]
    %v757 = vld [vmem:[#allocation2 + $0xe60] sm:$0xff]
    %v758 = vld [vmem:[#allocation2 + $0xe68] sm:$0xff]
    %v759 = vld [vmem:[#allocation2 + $0xe70] sm:$0xff]
    %v760 = vld [vmem:[#allocation2 + $0xe78] sm:$0xff]
    %v761 = vld [vmem:[#allocation2 + $0xe80] sm:$0xff]
    %v762 = vld [vmem:[#allocation2 + $0xe88] sm:$0xff]
    %v763 = vld [vmem:[#allocation2 + $0xe90] sm:$0xff]
    %v764 = vld [vmem:[#allocation2 + $0xe98] sm:$0xff]
    %v765 = vld [vmem:[#allocation2 + $0xea0] sm:$0xff]
    %v766 = vld [vmem:[#allocation2 + $0xea8] sm:$0xff]
    %v767 = vld [vmem:[#allocation2 + $0xeb0] sm:$0xff]
    %v768 = vld [vmem:[#allocation2 + $0xeb8] sm:$0xff]
    %v769 = vld [vmem:[#allocation2 + $0xec0] sm:$0xff]
    %v770 = vld [vmem:[#allocation2 + $0xec8] sm:$0xff]
    %v771 = vld [vmem:[#allocation2 + $0xed0] sm:$0xff]
    %v772 = vld [vmem:[#allocation2 + $0xed8] sm:$0xff]
    %v773 = vld [vmem:[#allocation2 + $0xee0] sm:$0xff]
    %v774 = vld [vmem:[#allocation2 + $0xee8] sm:$0xff]
    %v775 = vld [vmem:[#allocation2 + $0xef0] sm:$0xff]
    %v776 = vld [vmem:[#allocation2 + $0xef8] sm:$0xff]
    %v777 = vld [vmem:[#allocation2 + $0xf00] sm:$0xff]
    %v778 = vld [vmem:[#allocation2 + $0xf08] sm:$0xff]
    %v779 = vld [vmem:[#allocation2 + $0xf10] sm:$0xff]
    %v780 = vld [vmem:[#allocation2 + $0xf18] sm:$0xff]
    %v781 = vld [vmem:[#allocation2 + $0xf20] sm:$0xff]
    %v782 = vld [vmem:[#allocation2 + $0xf28] sm:$0xff]
    %v783 = vld [vmem:[#allocation2 + $0xf30] sm:$0xff]
    %v784 = vld [vmem:[#allocation2 + $0xf38] sm:$0xff]
    %v785 = vld [vmem:[#allocation2 + $0xf40] sm:$0xff]
    %v786 = vld [vmem:[#allocation2 + $0xf48] sm:$0xff]
    %v787 = vld [vmem:[#allocation2 + $0xf50] sm:$0xff]
    %v788 = vld [vmem:[#allocation2 + $0xf58] sm:$0xff]
    %v789 = vld [vmem:[#allocation2 + $0xf60] sm:$0xff]
    %v790 = vld [vmem:[#allocation2 + $0xf68] sm:$0xff]
    %v791 = vld [vmem:[#allocation2 + $0xf70] sm:$0xff]
    %v792 = vld [vmem:[#allocation2 + $0xf78] sm:$0xff]
    %v793 = vld [vmem:[#allocation2 + $0xf80] sm:$0xff]
    %v794 = vld [vmem:[#allocation2 + $0xf88] sm:$0xff]
    %v795 = vld [vmem:[#allocation2 + $0xf90] sm:$0xff]
    %v796 = vld [vmem:[#allocation2 + $0xf98] sm:$0xff]
    %v797 = vld [vmem:[#allocation2 + $0xfa0] sm:$0xff]
    %v798 = vld [vmem:[#allocation2 + $0xfa8] sm:$0xff]
    %v799 = vld [vmem:[#allocation2 + $0xfb0] sm:$0xff]
    %v800 = vld [vmem:[#allocation2 + $0xfb8] sm:$0xff]
    %v801 = vld [vmem:[#allocation2 + $0xfc0] sm:$0xff]
    %v802 = vld [vmem:[#allocation2 + $0xfc8] sm:$0xff]
    %v803 = vld [vmem:[#allocation2 + $0xfd0] sm:$0xff]
    %v804 = vld [vmem:[#allocation2 + $0xfd8] sm:$0xff]
    %v805 = vld [vmem:[#allocation2 + $0xfe0] sm:$0xff]
    %v806 = vld [vmem:[#allocation2 + $0xfe8] sm:$0xff]
    %v807 = vld [vmem:[#allocation2 + $0xff0] sm:$0xff]
    %v808 = vld [vmem:[#allocation2 + $0xff8] sm:$0xff]
    %v809 = vld [vmem:[#allocation4] sm:$0xff]
    %v811 = vlaneseq
    %v812 = vshrl.u32 %v811, 7
    %v813 = vsub.s32 0, %v812
    %v814 = vrot.slane %v809, %v813
    %v815 = vlaneseq
    %v816 = vshrl.u32 %v815, 7
    %v817 = vsub.s32 1, %v816
    %v818 = vrot.slane %v809, %v817
    %v819 = vlaneseq
    %v820 = vshrl.u32 %v819, 7
    %v821 = vsub.s32 2, %v820
    %v822 = vrot.slane %v809, %v821
    %v823 = vlaneseq
    %v824 = vshrl.u32 %v823, 7
    %v825 = vsub.s32 3, %v824
    %v826 = vrot.slane %v809, %v825
    %v827 = vlaneseq
    %v828 = vshrl.u32 %v827, 7
    %v829 = vsub.s32 4, %v828
    %v830 = vrot.slane %v809, %v829
    %v831 = vlaneseq
    %v832 = vshrl.u32 %v831, 7
    %v833 = vsub.s32 5, %v832
    %v834 = vrot.slane %v809, %v833
    %v835 = vlaneseq
    %v836 = vshrl.u32 %v835, 7
    %v837 = vsub.s32 6, %v836
    %v838 = vrot.slane %v809, %v837
    %v839 = vlaneseq
    %v840 = vshrl.u32 %v839, 7
    %v841 = vsub.s32 7, %v840
    %v842 = vrot.slane %v809, %v841
    %v1363 = vunpack.c.l.b16 %v297
    %v1364 = vunpack.c.h.b16 %v297
    %v1365 = vunpack.c.l.b16 %v298
    %v1366 = vunpack.c.h.b16 %v298
    %v1367 = vunpack.c.l.b16 %v299
    %v1368 = vunpack.c.h.b16 %v299
    %v1369 = vunpack.c.l.b16 %v300
    %v1370 = vunpack.c.h.b16 %v300
    %v1371 = vunpack.c.l.b16 %v301
    %v1372 = vunpack.c.h.b16 %v301
    %v1373 = vunpack.c.l.b16 %v302
    %v1374 = vunpack.c.h.b16 %v302
    %v1375 = vunpack.c.l.b16 %v303
    %v1376 = vunpack.c.h.b16 %v303
    %v1377 = vunpack.c.l.b16 %v304
    %v1378 = vunpack.c.h.b16 %v304
    %v1379 = vunpack.c.l.b16 %v305
    %v1380 = vunpack.c.h.b16 %v305
    %v1381 = vunpack.c.l.b16 %v306
    %v1382 = vunpack.c.h.b16 %v306
    %v1383 = vunpack.c.l.b16 %v307
    %v1384 = vunpack.c.h.b16 %v307
    %v1385 = vunpack.c.l.b16 %v308
    %v1386 = vunpack.c.h.b16 %v308
    %v1387 = vunpack.c.l.b16 %v309
    %v1388 = vunpack.c.h.b16 %v309
    %v1389 = vunpack.c.l.b16 %v310
    %v1390 = vunpack.c.h.b16 %v310
    %v1391 = vunpack.c.l.b16 %v311
    %v1392 = vunpack.c.h.b16 %v311
    %v1393 = vunpack.c.l.b16 %v312
    %v1394 = vunpack.c.h.b16 %v312
    %v1395 = vunpack.c.l.b16 %v313
    %v1396 = vunpack.c.h.b16 %v313
    %v1397 = vunpack.c.l.b16 %v314
    %v1398 = vunpack.c.h.b16 %v314
    %v1399 = vunpack.c.l.b16 %v315
    %v1400 = vunpack.c.h.b16 %v315
    %v1401 = vunpack.c.l.b16 %v316
    %v1402 = vunpack.c.h.b16 %v316
    %v1403 = vunpack.c.l.b16 %v317
    %v1404 = vunpack.c.h.b16 %v317
    %v1405 = vunpack.c.l.b16 %v318
    %v1406 = vunpack.c.h.b16 %v318
    %v1407 = vunpack.c.l.b16 %v319
    %v1408 = vunpack.c.h.b16 %v319
    %v1409 = vunpack.c.l.b16 %v320
    %v1410 = vunpack.c.h.b16 %v320
    %v1411 = vunpack.c.l.b16 %v321
    %v1412 = vunpack.c.h.b16 %v321
    %v1413 = vunpack.c.l.b16 %v322
    %v1414 = vunpack.c.h.b16 %v322
    %v1415 = vunpack.c.l.b16 %v323
    %v1416 = vunpack.c.h.b16 %v323
    %v1417 = vunpack.c.l.b16 %v324
    %v1418 = vunpack.c.h.b16 %v324
    %v1419 = vunpack.c.l.b16 %v325
    %v1420 = vunpack.c.h.b16 %v325
    %v1421 = vunpack.c.l.b16 %v326
    %v1422 = vunpack.c.h.b16 %v326
    %v1423 = vunpack.c.l.b16 %v327
    %v1424 = vunpack.c.h.b16 %v327
    %v1425 = vunpack.c.l.b16 %v328
    %v1426 = vunpack.c.h.b16 %v328
    %v1427 = vunpack.c.l.b16 %v329
    %v1428 = vunpack.c.h.b16 %v329
    %v1429 = vunpack.c.l.b16 %v330
    %v1430 = vunpack.c.h.b16 %v330
    %v1431 = vunpack.c.l.b16 %v331
    %v1432 = vunpack.c.h.b16 %v331
    %v1433 = vunpack.c.l.b16 %v332
    %v1434 = vunpack.c.h.b16 %v332
    %v1435 = vunpack.c.l.b16 %v333
    %v1436 = vunpack.c.h.b16 %v333
    %v1437 = vunpack.c.l.b16 %v334
    %v1438 = vunpack.c.h.b16 %v334
    %v1439 = vunpack.c.l.b16 %v335
    %v1440 = vunpack.c.h.b16 %v335
    %v1441 = vunpack.c.l.b16 %v336
    %v1442 = vunpack.c.h.b16 %v336
    %v1443 = vunpack.c.l.b16 %v337
    %v1444 = vunpack.c.h.b16 %v337
    %v1445 = vunpack.c.l.b16 %v338
    %v1446 = vunpack.c.h.b16 %v338
    %v1447 = vunpack.c.l.b16 %v339
    %v1448 = vunpack.c.h.b16 %v339
    %v1449 = vunpack.c.l.b16 %v340
    %v1450 = vunpack.c.h.b16 %v340
    %v1451 = vunpack.c.l.b16 %v341
    %v1452 = vunpack.c.h.b16 %v341
    %v1453 = vunpack.c.l.b16 %v342
    %v1454 = vunpack.c.h.b16 %v342
    %v1455 = vunpack.c.l.b16 %v343
    %v1456 = vunpack.c.h.b16 %v343
    %v1457 = vunpack.c.l.b16 %v344
    %v1458 = vunpack.c.h.b16 %v344
    %v1459 = vunpack.c.l.b16 %v345
    %v1460 = vunpack.c.h.b16 %v345
    %v1461 = vunpack.c.l.b16 %v346
    %v1462 = vunpack.c.h.b16 %v346
    %v1463 = vunpack.c.l.b16 %v347
    %v1464 = vunpack.c.h.b16 %v347
    %v1465 = vunpack.c.l.b16 %v348
    %v1466 = vunpack.c.h.b16 %v348
    %v1467 = vunpack.c.l.b16 %v349
    %v1468 = vunpack.c.h.b16 %v349
    %v1469 = vunpack.c.l.b16 %v350
    %v1470 = vunpack.c.h.b16 %v350
    %v1471 = vunpack.c.l.b16 %v351
    %v1472 = vunpack.c.h.b16 %v351
    %v1473 = vunpack.c.l.b16 %v352
    %v1474 = vunpack.c.h.b16 %v352
    %v1475 = vunpack.c.l.b16 %v353
    %v1476 = vunpack.c.h.b16 %v353
    %v1477 = vunpack.c.l.b16 %v354
    %v1478 = vunpack.c.h.b16 %v354
    %v1479 = vunpack.c.l.b16 %v355
    %v1480 = vunpack.c.h.b16 %v355
    %v1481 = vunpack.c.l.b16 %v356
    %v1482 = vunpack.c.h.b16 %v356
    %v1483 = vunpack.c.l.b16 %v357
    %v1484 = vunpack.c.h.b16 %v357
    %v1485 = vunpack.c.l.b16 %v358
    %v1486 = vunpack.c.h.b16 %v358
    %v1487 = vunpack.c.l.b16 %v359
    %v1488 = vunpack.c.h.b16 %v359
    %v1489 = vunpack.c.l.b16 %v360
    %v1490 = vunpack.c.h.b16 %v360
    %v1491 = vunpack.c.l.b16 %v361
    %v1492 = vunpack.c.h.b16 %v361
    %v1493 = vunpack.c.l.b16 %v362
    %v1494 = vunpack.c.h.b16 %v362
    %v1495 = vunpack.c.l.b16 %v363
    %v1496 = vunpack.c.h.b16 %v363
    %v1497 = vunpack.c.l.b16 %v364
    %v1498 = vunpack.c.h.b16 %v364
    %v1499 = vunpack.c.l.b16 %v365
    %v1500 = vunpack.c.h.b16 %v365
    %v1501 = vunpack.c.l.b16 %v366
    %v1502 = vunpack.c.h.b16 %v366
    %v1503 = vunpack.c.l.b16 %v367
    %v1504 = vunpack.c.h.b16 %v367
    %v1505 = vunpack.c.l.b16 %v368
    %v1506 = vunpack.c.h.b16 %v368
    %v1507 = vunpack.c.l.b16 %v369
    %v1508 = vunpack.c.h.b16 %v369
    %v1509 = vunpack.c.l.b16 %v370
    %v1510 = vunpack.c.h.b16 %v370
    %v1511 = vunpack.c.l.b16 %v371
    %v1512 = vunpack.c.h.b16 %v371
    %v1513 = vunpack.c.l.b16 %v372
    %v1514 = vunpack.c.h.b16 %v372
    %v1515 = vunpack.c.l.b16 %v373
    %v1516 = vunpack.c.h.b16 %v373
    %v1517 = vunpack.c.l.b16 %v374
    %v1518 = vunpack.c.h.b16 %v374
    %v1519 = vunpack.c.l.b16 %v375
    %v1520 = vunpack.c.h.b16 %v375
    %v1521 = vunpack.c.l.b16 %v376
    %v1522 = vunpack.c.h.b16 %v376
    %v1523 = vunpack.c.l.b16 %v377
    %v1524 = vunpack.c.h.b16 %v377
    %v1525 = vunpack.c.l.b16 %v378
    %v1526 = vunpack.c.h.b16 %v378
    %v1527 = vunpack.c.l.b16 %v379
    %v1528 = vunpack.c.h.b16 %v379
    %v1529 = vunpack.c.l.b16 %v380
    %v1530 = vunpack.c.h.b16 %v380
    %v1531 = vunpack.c.l.b16 %v381
    %v1532 = vunpack.c.h.b16 %v381
    %v1533 = vunpack.c.l.b16 %v382
    %v1534 = vunpack.c.h.b16 %v382
    %v1535 = vunpack.c.l.b16 %v383
    %v1536 = vunpack.c.h.b16 %v383
    %v1537 = vunpack.c.l.b16 %v384
    %v1538 = vunpack.c.h.b16 %v384
    %v1539 = vunpack.c.l.b16 %v385
    %v1540 = vunpack.c.h.b16 %v385
    %v1541 = vunpack.c.l.b16 %v386
    %v1542 = vunpack.c.h.b16 %v386
    %v1543 = vunpack.c.l.b16 %v387
    %v1544 = vunpack.c.h.b16 %v387
    %v1545 = vunpack.c.l.b16 %v388
    %v1546 = vunpack.c.h.b16 %v388
    %v1547 = vunpack.c.l.b16 %v389
    %v1548 = vunpack.c.h.b16 %v389
    %v1549 = vunpack.c.l.b16 %v390
    %v1550 = vunpack.c.h.b16 %v390
    %v1551 = vunpack.c.l.b16 %v391
    %v1552 = vunpack.c.h.b16 %v391
    %v1553 = vunpack.c.l.b16 %v392
    %v1554 = vunpack.c.h.b16 %v392
    %v1555 = vunpack.c.l.b16 %v393
    %v1556 = vunpack.c.h.b16 %v393
    %v1557 = vunpack.c.l.b16 %v394
    %v1558 = vunpack.c.h.b16 %v394
    %v1559 = vunpack.c.l.b16 %v395
    %v1560 = vunpack.c.h.b16 %v395
    %v1561 = vunpack.c.l.b16 %v396
    %v1562 = vunpack.c.h.b16 %v396
    %v1563 = vunpack.c.l.b16 %v397
    %v1564 = vunpack.c.h.b16 %v397
    %v1565 = vunpack.c.l.b16 %v398
    %v1566 = vunpack.c.h.b16 %v398
    %v1567 = vunpack.c.l.b16 %v399
    %v1568 = vunpack.c.h.b16 %v399
    %v1569 = vunpack.c.l.b16 %v400
    %v1570 = vunpack.c.h.b16 %v400
    %v1571 = vunpack.c.l.b16 %v401
    %v1572 = vunpack.c.h.b16 %v401
    %v1573 = vunpack.c.l.b16 %v402
    %v1574 = vunpack.c.h.b16 %v402
    %v1575 = vunpack.c.l.b16 %v403
    %v1576 = vunpack.c.h.b16 %v403
    %v1577 = vunpack.c.l.b16 %v404
    %v1578 = vunpack.c.h.b16 %v404
    %v1579 = vunpack.c.l.b16 %v405
    %v1580 = vunpack.c.h.b16 %v405
    %v1581 = vunpack.c.l.b16 %v406
    %v1582 = vunpack.c.h.b16 %v406
    %v1583 = vunpack.c.l.b16 %v407
    %v1584 = vunpack.c.h.b16 %v407
    %v1585 = vunpack.c.l.b16 %v408
    %v1586 = vunpack.c.h.b16 %v408
    %v1587 = vunpack.c.l.b16 %v409
    %v1588 = vunpack.c.h.b16 %v409
    %v1589 = vunpack.c.l.b16 %v410
    %v1590 = vunpack.c.h.b16 %v410
    %v1591 = vunpack.c.l.b16 %v411
    %v1592 = vunpack.c.h.b16 %v411
    %v1593 = vunpack.c.l.b16 %v412
    %v1594 = vunpack.c.h.b16 %v412
    %v1595 = vunpack.c.l.b16 %v413
    %v1596 = vunpack.c.h.b16 %v413
    %v1597 = vunpack.c.l.b16 %v414
    %v1598 = vunpack.c.h.b16 %v414
    %v1599 = vunpack.c.l.b16 %v415
    %v1600 = vunpack.c.h.b16 %v415
    %v1601 = vunpack.c.l.b16 %v416
    %v1602 = vunpack.c.h.b16 %v416
    %v1603 = vunpack.c.l.b16 %v417
    %v1604 = vunpack.c.h.b16 %v417
    %v1605 = vunpack.c.l.b16 %v418
    %v1606 = vunpack.c.h.b16 %v418
    %v1607 = vunpack.c.l.b16 %v419
    %v1608 = vunpack.c.h.b16 %v419
    %v1609 = vunpack.c.l.b16 %v420
    %v1610 = vunpack.c.h.b16 %v420
    %v1611 = vunpack.c.l.b16 %v421
    %v1612 = vunpack.c.h.b16 %v421
    %v1613 = vunpack.c.l.b16 %v422
    %v1614 = vunpack.c.h.b16 %v422
    %v1615 = vunpack.c.l.b16 %v423
    %v1616 = vunpack.c.h.b16 %v423
    %v1617 = vunpack.c.l.b16 %v424
    %v1618 = vunpack.c.h.b16 %v424
    %v1619 = vunpack.c.l.b16 %v425
    %v1620 = vunpack.c.h.b16 %v425
    %v1621 = vunpack.c.l.b16 %v426
    %v1622 = vunpack.c.h.b16 %v426
    %v1623 = vunpack.c.l.b16 %v427
    %v1624 = vunpack.c.h.b16 %v427
    %v1625 = vunpack.c.l.b16 %v428
    %v1626 = vunpack.c.h.b16 %v428
    %v1627 = vunpack.c.l.b16 %v429
    %v1628 = vunpack.c.h.b16 %v429
    %v1629 = vunpack.c.l.b16 %v430
    %v1630 = vunpack.c.h.b16 %v430
    %v1631 = vunpack.c.l.b16 %v431
    %v1632 = vunpack.c.h.b16 %v431
    %v1633 = vunpack.c.l.b16 %v432
    %v1634 = vunpack.c.h.b16 %v432
    %v1635 = vunpack.c.l.b16 %v433
    %v1636 = vunpack.c.h.b16 %v433
    %v1637 = vunpack.c.l.b16 %v434
    %v1638 = vunpack.c.h.b16 %v434
    %v1639 = vunpack.c.l.b16 %v435
    %v1640 = vunpack.c.h.b16 %v435
    %v1641 = vunpack.c.l.b16 %v436
    %v1642 = vunpack.c.h.b16 %v436
    %v1643 = vunpack.c.l.b16 %v437
    %v1644 = vunpack.c.h.b16 %v437
    %v1645 = vunpack.c.l.b16 %v438
    %v1646 = vunpack.c.h.b16 %v438
    %v1647 = vunpack.c.l.b16 %v439
    %v1648 = vunpack.c.h.b16 %v439
    %v1649 = vunpack.c.l.b16 %v440
    %v1650 = vunpack.c.h.b16 %v440
    %v1651 = vunpack.c.l.b16 %v441
    %v1652 = vunpack.c.h.b16 %v441
    %v1653 = vunpack.c.l.b16 %v442
    %v1654 = vunpack.c.h.b16 %v442
    %v1655 = vunpack.c.l.b16 %v443
    %v1656 = vunpack.c.h.b16 %v443
    %v1657 = vunpack.c.l.b16 %v444
    %v1658 = vunpack.c.h.b16 %v444
    %v1659 = vunpack.c.l.b16 %v445
    %v1660 = vunpack.c.h.b16 %v445
    %v1661 = vunpack.c.l.b16 %v446
    %v1662 = vunpack.c.h.b16 %v446
    %v1663 = vunpack.c.l.b16 %v447
    %v1664 = vunpack.c.h.b16 %v447
    %v1665 = vunpack.c.l.b16 %v448
    %v1666 = vunpack.c.h.b16 %v448
    %v1667 = vunpack.c.l.b16 %v449
    %v1668 = vunpack.c.h.b16 %v449
    %v1669 = vunpack.c.l.b16 %v450
    %v1670 = vunpack.c.h.b16 %v450
    %v1671 = vunpack.c.l.b16 %v451
    %v1672 = vunpack.c.h.b16 %v451
    %v1673 = vunpack.c.l.b16 %v452
    %v1674 = vunpack.c.h.b16 %v452
    %v1675 = vunpack.c.l.b16 %v453
    %v1676 = vunpack.c.h.b16 %v453
    %v1677 = vunpack.c.l.b16 %v454
    %v1678 = vunpack.c.h.b16 %v454
    %v1679 = vunpack.c.l.b16 %v455
    %v1680 = vunpack.c.h.b16 %v455
    %v1681 = vunpack.c.l.b16 %v456
    %v1682 = vunpack.c.h.b16 %v456
    %v1683 = vunpack.c.l.b16 %v457
    %v1684 = vunpack.c.h.b16 %v457
    %v1685 = vunpack.c.l.b16 %v458
    %v1686 = vunpack.c.h.b16 %v458
    %v1687 = vunpack.c.l.b16 %v459
    %v1688 = vunpack.c.h.b16 %v459
    %v1689 = vunpack.c.l.b16 %v460
    %v1690 = vunpack.c.h.b16 %v460
    %v1691 = vunpack.c.l.b16 %v461
    %v1692 = vunpack.c.h.b16 %v461
    %v1693 = vunpack.c.l.b16 %v462
    %v1694 = vunpack.c.h.b16 %v462
    %v1695 = vunpack.c.l.b16 %v463
    %v1696 = vunpack.c.h.b16 %v463
    %v1697 = vunpack.c.l.b16 %v464
    %v1698 = vunpack.c.h.b16 %v464
    %v1699 = vunpack.c.l.b16 %v465
    %v1700 = vunpack.c.h.b16 %v465
    %v1701 = vunpack.c.l.b16 %v466
    %v1702 = vunpack.c.h.b16 %v466
    %v1703 = vunpack.c.l.b16 %v467
    %v1704 = vunpack.c.h.b16 %v467
    %v1705 = vunpack.c.l.b16 %v468
    %v1706 = vunpack.c.h.b16 %v468
    %v1707 = vunpack.c.l.b16 %v469
    %v1708 = vunpack.c.h.b16 %v469
    %v1709 = vunpack.c.l.b16 %v470
    %v1710 = vunpack.c.h.b16 %v470
    %v1711 = vunpack.c.l.b16 %v471
    %v1712 = vunpack.c.h.b16 %v471
    %v1713 = vunpack.c.l.b16 %v472
    %v1714 = vunpack.c.h.b16 %v472
    %v1715 = vunpack.c.l.b16 %v473
    %v1716 = vunpack.c.h.b16 %v473
    %v1717 = vunpack.c.l.b16 %v474
    %v1718 = vunpack.c.h.b16 %v474
    %v1719 = vunpack.c.l.b16 %v475
    %v1720 = vunpack.c.h.b16 %v475
    %v1721 = vunpack.c.l.b16 %v476
    %v1722 = vunpack.c.h.b16 %v476
    %v1723 = vunpack.c.l.b16 %v477
    %v1724 = vunpack.c.h.b16 %v477
    %v1725 = vunpack.c.l.b16 %v478
    %v1726 = vunpack.c.h.b16 %v478
    %v1727 = vunpack.c.l.b16 %v479
    %v1728 = vunpack.c.h.b16 %v479
    %v1729 = vunpack.c.l.b16 %v480
    %v1730 = vunpack.c.h.b16 %v480
    %v1731 = vunpack.c.l.b16 %v481
    %v1732 = vunpack.c.h.b16 %v481
    %v1733 = vunpack.c.l.b16 %v482
    %v1734 = vunpack.c.h.b16 %v482
    %v1735 = vunpack.c.l.b16 %v483
    %v1736 = vunpack.c.h.b16 %v483
    %v1737 = vunpack.c.l.b16 %v484
    %v1738 = vunpack.c.h.b16 %v484
    %v1739 = vunpack.c.l.b16 %v485
    %v1740 = vunpack.c.h.b16 %v485
    %v1741 = vunpack.c.l.b16 %v486
    %v1742 = vunpack.c.h.b16 %v486
    %v1743 = vunpack.c.l.b16 %v487
    %v1744 = vunpack.c.h.b16 %v487
    %v1745 = vunpack.c.l.b16 %v488
    %v1746 = vunpack.c.h.b16 %v488
    %v1747 = vunpack.c.l.b16 %v489
    %v1748 = vunpack.c.h.b16 %v489
    %v1749 = vunpack.c.l.b16 %v490
    %v1750 = vunpack.c.h.b16 %v490
    %v1751 = vunpack.c.l.b16 %v491
    %v1752 = vunpack.c.h.b16 %v491
    %v1753 = vunpack.c.l.b16 %v492
    %v1754 = vunpack.c.h.b16 %v492
    %v1755 = vunpack.c.l.b16 %v493
    %v1756 = vunpack.c.h.b16 %v493
    %v1757 = vunpack.c.l.b16 %v494
    %v1758 = vunpack.c.h.b16 %v494
    %v1759 = vunpack.c.l.b16 %v495
    %v1760 = vunpack.c.h.b16 %v495
    %v1761 = vunpack.c.l.b16 %v496
    %v1762 = vunpack.c.h.b16 %v496
    %v1763 = vunpack.c.l.b16 %v497
    %v1764 = vunpack.c.h.b16 %v497
    %v1765 = vunpack.c.l.b16 %v498
    %v1766 = vunpack.c.h.b16 %v498
    %v1767 = vunpack.c.l.b16 %v499
    %v1768 = vunpack.c.h.b16 %v499
    %v1769 = vunpack.c.l.b16 %v500
    %v1770 = vunpack.c.h.b16 %v500
    %v1771 = vunpack.c.l.b16 %v501
    %v1772 = vunpack.c.h.b16 %v501
    %v1773 = vunpack.c.l.b16 %v502
    %v1774 = vunpack.c.h.b16 %v502
    %v1775 = vunpack.c.l.b16 %v503
    %v1776 = vunpack.c.h.b16 %v503
    %v1777 = vunpack.c.l.b16 %v504
    %v1778 = vunpack.c.h.b16 %v504
    %v1779 = vunpack.c.l.b16 %v505
    %v1780 = vunpack.c.h.b16 %v505
    %v1781 = vunpack.c.l.b16 %v506
    %v1782 = vunpack.c.h.b16 %v506
    %v1783 = vunpack.c.l.b16 %v507
    %v1784 = vunpack.c.h.b16 %v507
    %v1785 = vunpack.c.l.b16 %v508
    %v1786 = vunpack.c.h.b16 %v508
    %v1787 = vunpack.c.l.b16 %v509
    %v1788 = vunpack.c.h.b16 %v509
    %v1789 = vunpack.c.l.b16 %v510
    %v1790 = vunpack.c.h.b16 %v510
    %v1791 = vunpack.c.l.b16 %v511
    %v1792 = vunpack.c.h.b16 %v511
    %v1793 = vunpack.c.l.b16 %v512
    %v1794 = vunpack.c.h.b16 %v512
    %v1795 = vunpack.c.l.b16 %v513
    %v1796 = vunpack.c.h.b16 %v513
    %v1797 = vunpack.c.l.b16 %v514
    %v1798 = vunpack.c.h.b16 %v514
    %v1799 = vunpack.c.l.b16 %v515
    %v1800 = vunpack.c.h.b16 %v515
    %v1801 = vunpack.c.l.b16 %v516
    %v1802 = vunpack.c.h.b16 %v516
    %v1803 = vunpack.c.l.b16 %v517
    %v1804 = vunpack.c.h.b16 %v517
    %v1805 = vunpack.c.l.b16 %v518
    %v1806 = vunpack.c.h.b16 %v518
    %v1807 = vunpack.c.l.b16 %v519
    %v1808 = vunpack.c.h.b16 %v519
    %v1809 = vunpack.c.l.b16 %v520
    %v1810 = vunpack.c.h.b16 %v520
    %v1811 = vunpack.c.l.b16 %v521
    %v1812 = vunpack.c.h.b16 %v521
    %v1813 = vunpack.c.l.b16 %v522
    %v1814 = vunpack.c.h.b16 %v522
    %v1815 = vunpack.c.l.b16 %v523
    %v1816 = vunpack.c.h.b16 %v523
    %v1817 = vunpack.c.l.b16 %v524
    %v1818 = vunpack.c.h.b16 %v524
    %v1819 = vunpack.c.l.b16 %v525
    %v1820 = vunpack.c.h.b16 %v525
    %v1821 = vunpack.c.l.b16 %v526
    %v1822 = vunpack.c.h.b16 %v526
    %v1823 = vunpack.c.l.b16 %v527
    %v1824 = vunpack.c.h.b16 %v527
    %v1825 = vunpack.c.l.b16 %v528
    %v1826 = vunpack.c.h.b16 %v528
    %v1827 = vunpack.c.l.b16 %v529
    %v1828 = vunpack.c.h.b16 %v529
    %v1829 = vunpack.c.l.b16 %v530
    %v1830 = vunpack.c.h.b16 %v530
    %v1831 = vunpack.c.l.b16 %v531
    %v1832 = vunpack.c.h.b16 %v531
    %v1833 = vunpack.c.l.b16 %v532
    %v1834 = vunpack.c.h.b16 %v532
    %v1835 = vunpack.c.l.b16 %v533
    %v1836 = vunpack.c.h.b16 %v533
    %v1837 = vunpack.c.l.b16 %v534
    %v1838 = vunpack.c.h.b16 %v534
    %v1839 = vunpack.c.l.b16 %v535
    %v1840 = vunpack.c.h.b16 %v535
    %v1841 = vunpack.c.l.b16 %v536
    %v1842 = vunpack.c.h.b16 %v536
    %v1843 = vunpack.c.l.b16 %v537
    %v1844 = vunpack.c.h.b16 %v537
    %v1845 = vunpack.c.l.b16 %v538
    %v1846 = vunpack.c.h.b16 %v538
    %v1847 = vunpack.c.l.b16 %v539
    %v1848 = vunpack.c.h.b16 %v539
    %v1849 = vunpack.c.l.b16 %v540
    %v1850 = vunpack.c.h.b16 %v540
    %v1851 = vunpack.c.l.b16 %v541
    %v1852 = vunpack.c.h.b16 %v541
    %v1853 = vunpack.c.l.b16 %v542
    %v1854 = vunpack.c.h.b16 %v542
    %v1855 = vunpack.c.l.b16 %v543
    %v1856 = vunpack.c.h.b16 %v543
    %v1857 = vunpack.c.l.b16 %v544
    %v1858 = vunpack.c.h.b16 %v544
    %v1859 = vunpack.c.l.b16 %v545
    %v1860 = vunpack.c.h.b16 %v545
    %v1861 = vunpack.c.l.b16 %v546
    %v1862 = vunpack.c.h.b16 %v546
    %v1863 = vunpack.c.l.b16 %v547
    %v1864 = vunpack.c.h.b16 %v547
    %v1865 = vunpack.c.l.b16 %v548
    %v1866 = vunpack.c.h.b16 %v548
    %v1867 = vunpack.c.l.b16 %v549
    %v1868 = vunpack.c.h.b16 %v549
    %v1869 = vunpack.c.l.b16 %v550
    %v1870 = vunpack.c.h.b16 %v550
    %v1871 = vunpack.c.l.b16 %v551
    %v1872 = vunpack.c.h.b16 %v551
    %v1873 = vunpack.c.l.b16 %v552
    %v1874 = vunpack.c.h.b16 %v552
    %v1875 = vunpack.c.l.b16 %v553
    %v1876 = vunpack.c.h.b16 %v553
    %v1877 = vunpack.c.l.b16 %v554
    %v1878 = vunpack.c.h.b16 %v554
    %v1879 = vunpack.c.l.b16 %v555
    %v1880 = vunpack.c.h.b16 %v555
    %v1881 = vunpack.c.l.b16 %v556
    %v1882 = vunpack.c.h.b16 %v556
    %v1883 = vunpack.c.l.b16 %v557
    %v1884 = vunpack.c.h.b16 %v557
    %v1885 = vunpack.c.l.b16 %v558
    %v1886 = vunpack.c.h.b16 %v558
    %v1887 = vunpack.c.l.b16 %v559
    %v1888 = vunpack.c.h.b16 %v559
    %v1889 = vunpack.c.l.b16 %v560
    %v1890 = vunpack.c.h.b16 %v560
    %v1891 = vunpack.c.l.b16 %v561
    %v1892 = vunpack.c.h.b16 %v561
    %v1893 = vunpack.c.l.b16 %v562
    %v1894 = vunpack.c.h.b16 %v562
    %v1895 = vunpack.c.l.b16 %v563
    %v1896 = vunpack.c.h.b16 %v563
    %v1897 = vunpack.c.l.b16 %v564
    %v1898 = vunpack.c.h.b16 %v564
    %v1899 = vunpack.c.l.b16 %v565
    %v1900 = vunpack.c.h.b16 %v565
    %v1901 = vunpack.c.l.b16 %v566
    %v1902 = vunpack.c.h.b16 %v566
    %v1903 = vunpack.c.l.b16 %v567
    %v1904 = vunpack.c.h.b16 %v567
    %v1905 = vunpack.c.l.b16 %v568
    %v1906 = vunpack.c.h.b16 %v568
    %v1907 = vunpack.c.l.b16 %v569
    %v1908 = vunpack.c.h.b16 %v569
    %v1909 = vunpack.c.l.b16 %v570
    %v1910 = vunpack.c.h.b16 %v570
    %v1911 = vunpack.c.l.b16 %v571
    %v1912 = vunpack.c.h.b16 %v571
    %v1913 = vunpack.c.l.b16 %v572
    %v1914 = vunpack.c.h.b16 %v572
    %v1915 = vunpack.c.l.b16 %v573
    %v1916 = vunpack.c.h.b16 %v573
    %v1917 = vunpack.c.l.b16 %v574
    %v1918 = vunpack.c.h.b16 %v574
    %v1919 = vunpack.c.l.b16 %v575
    %v1920 = vunpack.c.h.b16 %v575
    %v1921 = vunpack.c.l.b16 %v576
    %v1922 = vunpack.c.h.b16 %v576
    %v1923 = vunpack.c.l.b16 %v577
    %v1924 = vunpack.c.h.b16 %v577
    %v1925 = vunpack.c.l.b16 %v578
    %v1926 = vunpack.c.h.b16 %v578
    %v1927 = vunpack.c.l.b16 %v579
    %v1928 = vunpack.c.h.b16 %v579
    %v1929 = vunpack.c.l.b16 %v580
    %v1930 = vunpack.c.h.b16 %v580
    %v1931 = vunpack.c.l.b16 %v581
    %v1932 = vunpack.c.h.b16 %v581
    %v1933 = vunpack.c.l.b16 %v582
    %v1934 = vunpack.c.h.b16 %v582
    %v1935 = vunpack.c.l.b16 %v583
    %v1936 = vunpack.c.h.b16 %v583
    %v1937 = vunpack.c.l.b16 %v584
    %v1938 = vunpack.c.h.b16 %v584
    %v1939 = vunpack.c.l.b16 %v585
    %v1940 = vunpack.c.h.b16 %v585
    %v1941 = vunpack.c.l.b16 %v586
    %v1942 = vunpack.c.h.b16 %v586
    %v1943 = vunpack.c.l.b16 %v587
    %v1944 = vunpack.c.h.b16 %v587
    %v1945 = vunpack.c.l.b16 %v588
    %v1946 = vunpack.c.h.b16 %v588
    %v1947 = vunpack.c.l.b16 %v589
    %v1948 = vunpack.c.h.b16 %v589
    %v1949 = vunpack.c.l.b16 %v590
    %v1950 = vunpack.c.h.b16 %v590
    %v1951 = vunpack.c.l.b16 %v591
    %v1952 = vunpack.c.h.b16 %v591
    %v1953 = vunpack.c.l.b16 %v592
    %v1954 = vunpack.c.h.b16 %v592
    %v1955 = vunpack.c.l.b16 %v593
    %v1956 = vunpack.c.h.b16 %v593
    %v1957 = vunpack.c.l.b16 %v594
    %v1958 = vunpack.c.h.b16 %v594
    %v1959 = vunpack.c.l.b16 %v595
    %v1960 = vunpack.c.h.b16 %v595
    %v1961 = vunpack.c.l.b16 %v596
    %v1962 = vunpack.c.h.b16 %v596
    %v1963 = vunpack.c.l.b16 %v597
    %v1964 = vunpack.c.h.b16 %v597
    %v1965 = vunpack.c.l.b16 %v598
    %v1966 = vunpack.c.h.b16 %v598
    %v1967 = vunpack.c.l.b16 %v599
    %v1968 = vunpack.c.h.b16 %v599
    %v1969 = vunpack.c.l.b16 %v600
    %v1970 = vunpack.c.h.b16 %v600
    %v1971 = vunpack.c.l.b16 %v601
    %v1972 = vunpack.c.h.b16 %v601
    %v1973 = vunpack.c.l.b16 %v602
    %v1974 = vunpack.c.h.b16 %v602
    %v1975 = vunpack.c.l.b16 %v603
    %v1976 = vunpack.c.h.b16 %v603
    %v1977 = vunpack.c.l.b16 %v604
    %v1978 = vunpack.c.h.b16 %v604
    %v1979 = vunpack.c.l.b16 %v605
    %v1980 = vunpack.c.h.b16 %v605
    %v1981 = vunpack.c.l.b16 %v606
    %v1982 = vunpack.c.h.b16 %v606
    %v1983 = vunpack.c.l.b16 %v607
    %v1984 = vunpack.c.h.b16 %v607
    %v1985 = vunpack.c.l.b16 %v608
    %v1986 = vunpack.c.h.b16 %v608
    %v1987 = vunpack.c.l.b16 %v609
    %v1988 = vunpack.c.h.b16 %v609
    %v1989 = vunpack.c.l.b16 %v610
    %v1990 = vunpack.c.h.b16 %v610
    %v1991 = vunpack.c.l.b16 %v611
    %v1992 = vunpack.c.h.b16 %v611
    %v1993 = vunpack.c.l.b16 %v612
    %v1994 = vunpack.c.h.b16 %v612
    %v1995 = vunpack.c.l.b16 %v613
    %v1996 = vunpack.c.h.b16 %v613
    %v1997 = vunpack.c.l.b16 %v614
    %v1998 = vunpack.c.h.b16 %v614
    %v1999 = vunpack.c.l.b16 %v615
    %v2000 = vunpack.c.h.b16 %v615
    %v2001 = vunpack.c.l.b16 %v616
    %v2002 = vunpack.c.h.b16 %v616
    %v2003 = vunpack.c.l.b16 %v617
    %v2004 = vunpack.c.h.b16 %v617
    %v2005 = vunpack.c.l.b16 %v618
    %v2006 = vunpack.c.h.b16 %v618
    %v2007 = vunpack.c.l.b16 %v619
    %v2008 = vunpack.c.h.b16 %v619
    %v2009 = vunpack.c.l.b16 %v620
    %v2010 = vunpack.c.h.b16 %v620
    %v2011 = vunpack.c.l.b16 %v621
    %v2012 = vunpack.c.h.b16 %v621
    %v2013 = vunpack.c.l.b16 %v622
    %v2014 = vunpack.c.h.b16 %v622
    %v2015 = vunpack.c.l.b16 %v623
    %v2016 = vunpack.c.h.b16 %v623
    %v2017 = vunpack.c.l.b16 %v624
    %v2018 = vunpack.c.h.b16 %v624
    %v2019 = vunpack.c.l.b16 %v625
    %v2020 = vunpack.c.h.b16 %v625
    %v2021 = vunpack.c.l.b16 %v626
    %v2022 = vunpack.c.h.b16 %v626
    %v2023 = vunpack.c.l.b16 %v627
    %v2024 = vunpack.c.h.b16 %v627
    %v2025 = vunpack.c.l.b16 %v628
    %v2026 = vunpack.c.h.b16 %v628
    %v2027 = vunpack.c.l.b16 %v629
    %v2028 = vunpack.c.h.b16 %v629
    %v2029 = vunpack.c.l.b16 %v630
    %v2030 = vunpack.c.h.b16 %v630
    %v2031 = vunpack.c.l.b16 %v631
    %v2032 = vunpack.c.h.b16 %v631
    %v2033 = vunpack.c.l.b16 %v632
    %v2034 = vunpack.c.h.b16 %v632
    %v2035 = vunpack.c.l.b16 %v633
    %v2036 = vunpack.c.h.b16 %v633
    %v2037 = vunpack.c.l.b16 %v634
    %v2038 = vunpack.c.h.b16 %v634
    %v2039 = vunpack.c.l.b16 %v635
    %v2040 = vunpack.c.h.b16 %v635
    %v2041 = vunpack.c.l.b16 %v636
    %v2042 = vunpack.c.h.b16 %v636
    %v2043 = vunpack.c.l.b16 %v637
    %v2044 = vunpack.c.h.b16 %v637
    %v2045 = vunpack.c.l.b16 %v638
    %v2046 = vunpack.c.h.b16 %v638
    %v2047 = vunpack.c.l.b16 %v639
    %v2048 = vunpack.c.h.b16 %v639
    %v2049 = vunpack.c.l.b16 %v640
    %v2050 = vunpack.c.h.b16 %v640
    %v2051 = vunpack.c.l.b16 %v641
    %v2052 = vunpack.c.h.b16 %v641
    %v2053 = vunpack.c.l.b16 %v642
    %v2054 = vunpack.c.h.b16 %v642
    %v2055 = vunpack.c.l.b16 %v643
    %v2056 = vunpack.c.h.b16 %v643
    %v2057 = vunpack.c.l.b16 %v644
    %v2058 = vunpack.c.h.b16 %v644
    %v2059 = vunpack.c.l.b16 %v645
    %v2060 = vunpack.c.h.b16 %v645
    %v2061 = vunpack.c.l.b16 %v646
    %v2062 = vunpack.c.h.b16 %v646
    %v2063 = vunpack.c.l.b16 %v647
    %v2064 = vunpack.c.h.b16 %v647
    %v2065 = vunpack.c.l.b16 %v648
    %v2066 = vunpack.c.h.b16 %v648
    %v2067 = vunpack.c.l.b16 %v649
    %v2068 = vunpack.c.h.b16 %v649
    %v2069 = vunpack.c.l.b16 %v650
    %v2070 = vunpack.c.h.b16 %v650
    %v2071 = vunpack.c.l.b16 %v651
    %v2072 = vunpack.c.h.b16 %v651
    %v2073 = vunpack.c.l.b16 %v652
    %v2074 = vunpack.c.h.b16 %v652
    %v2075 = vunpack.c.l.b16 %v653
    %v2076 = vunpack.c.h.b16 %v653
    %v2077 = vunpack.c.l.b16 %v654
    %v2078 = vunpack.c.h.b16 %v654
    %v2079 = vunpack.c.l.b16 %v655
    %v2080 = vunpack.c.h.b16 %v655
    %v2081 = vunpack.c.l.b16 %v656
    %v2082 = vunpack.c.h.b16 %v656
    %v2083 = vunpack.c.l.b16 %v657
    %v2084 = vunpack.c.h.b16 %v657
    %v2085 = vunpack.c.l.b16 %v658
    %v2086 = vunpack.c.h.b16 %v658
    %v2087 = vunpack.c.l.b16 %v659
    %v2088 = vunpack.c.h.b16 %v659
    %v2089 = vunpack.c.l.b16 %v660
    %v2090 = vunpack.c.h.b16 %v660
    %v2091 = vunpack.c.l.b16 %v661
    %v2092 = vunpack.c.h.b16 %v661
    %v2093 = vunpack.c.l.b16 %v662
    %v2094 = vunpack.c.h.b16 %v662
    %v2095 = vunpack.c.l.b16 %v663
    %v2096 = vunpack.c.h.b16 %v663
    %v2097 = vunpack.c.l.b16 %v664
    %v2098 = vunpack.c.h.b16 %v664
    %v2099 = vunpack.c.l.b16 %v665
    %v2100 = vunpack.c.h.b16 %v665
    %v2101 = vunpack.c.l.b16 %v666
    %v2102 = vunpack.c.h.b16 %v666
    %v2103 = vunpack.c.l.b16 %v667
    %v2104 = vunpack.c.h.b16 %v667
    %v2105 = vunpack.c.l.b16 %v668
    %v2106 = vunpack.c.h.b16 %v668
    %v2107 = vunpack.c.l.b16 %v669
    %v2108 = vunpack.c.h.b16 %v669
    %v2109 = vunpack.c.l.b16 %v670
    %v2110 = vunpack.c.h.b16 %v670
    %v2111 = vunpack.c.l.b16 %v671
    %v2112 = vunpack.c.h.b16 %v671
    %v2113 = vunpack.c.l.b16 %v672
    %v2114 = vunpack.c.h.b16 %v672
    %v2115 = vunpack.c.l.b16 %v673
    %v2116 = vunpack.c.h.b16 %v673
    %v2117 = vunpack.c.l.b16 %v674
    %v2118 = vunpack.c.h.b16 %v674
    %v2119 = vunpack.c.l.b16 %v675
    %v2120 = vunpack.c.h.b16 %v675
    %v2121 = vunpack.c.l.b16 %v676
    %v2122 = vunpack.c.h.b16 %v676
    %v2123 = vunpack.c.l.b16 %v677
    %v2124 = vunpack.c.h.b16 %v677
    %v2125 = vunpack.c.l.b16 %v678
    %v2126 = vunpack.c.h.b16 %v678
    %v2127 = vunpack.c.l.b16 %v679
    %v2128 = vunpack.c.h.b16 %v679
    %v2129 = vunpack.c.l.b16 %v680
    %v2130 = vunpack.c.h.b16 %v680
    %v2131 = vunpack.c.l.b16 %v681
    %v2132 = vunpack.c.h.b16 %v681
    %v2133 = vunpack.c.l.b16 %v682
    %v2134 = vunpack.c.h.b16 %v682
    %v2135 = vunpack.c.l.b16 %v683
    %v2136 = vunpack.c.h.b16 %v683
    %v2137 = vunpack.c.l.b16 %v684
    %v2138 = vunpack.c.h.b16 %v684
    %v2139 = vunpack.c.l.b16 %v685
    %v2140 = vunpack.c.h.b16 %v685
    %v2141 = vunpack.c.l.b16 %v686
    %v2142 = vunpack.c.h.b16 %v686
    %v2143 = vunpack.c.l.b16 %v687
    %v2144 = vunpack.c.h.b16 %v687
    %v2145 = vunpack.c.l.b16 %v688
    %v2146 = vunpack.c.h.b16 %v688
    %v2147 = vunpack.c.l.b16 %v689
    %v2148 = vunpack.c.h.b16 %v689
    %v2149 = vunpack.c.l.b16 %v690
    %v2150 = vunpack.c.h.b16 %v690
    %v2151 = vunpack.c.l.b16 %v691
    %v2152 = vunpack.c.h.b16 %v691
    %v2153 = vunpack.c.l.b16 %v692
    %v2154 = vunpack.c.h.b16 %v692
    %v2155 = vunpack.c.l.b16 %v693
    %v2156 = vunpack.c.h.b16 %v693
    %v2157 = vunpack.c.l.b16 %v694
    %v2158 = vunpack.c.h.b16 %v694
    %v2159 = vunpack.c.l.b16 %v695
    %v2160 = vunpack.c.h.b16 %v695
    %v2161 = vunpack.c.l.b16 %v696
    %v2162 = vunpack.c.h.b16 %v696
    %v2163 = vunpack.c.l.b16 %v697
    %v2164 = vunpack.c.h.b16 %v697
    %v2165 = vunpack.c.l.b16 %v698
    %v2166 = vunpack.c.h.b16 %v698
    %v2167 = vunpack.c.l.b16 %v699
    %v2168 = vunpack.c.h.b16 %v699
    %v2169 = vunpack.c.l.b16 %v700
    %v2170 = vunpack.c.h.b16 %v700
    %v2171 = vunpack.c.l.b16 %v701
    %v2172 = vunpack.c.h.b16 %v701
    %v2173 = vunpack.c.l.b16 %v702
    %v2174 = vunpack.c.h.b16 %v702
    %v2175 = vunpack.c.l.b16 %v703
    %v2176 = vunpack.c.h.b16 %v703
    %v2177 = vunpack.c.l.b16 %v704
    %v2178 = vunpack.c.h.b16 %v704
    %v2179 = vunpack.c.l.b16 %v705
    %v2180 = vunpack.c.h.b16 %v705
    %v2181 = vunpack.c.l.b16 %v706
    %v2182 = vunpack.c.h.b16 %v706
    %v2183 = vunpack.c.l.b16 %v707
    %v2184 = vunpack.c.h.b16 %v707
    %v2185 = vunpack.c.l.b16 %v708
    %v2186 = vunpack.c.h.b16 %v708
    %v2187 = vunpack.c.l.b16 %v709
    %v2188 = vunpack.c.h.b16 %v709
    %v2189 = vunpack.c.l.b16 %v710
    %v2190 = vunpack.c.h.b16 %v710
    %v2191 = vunpack.c.l.b16 %v711
    %v2192 = vunpack.c.h.b16 %v711
    %v2193 = vunpack.c.l.b16 %v712
    %v2194 = vunpack.c.h.b16 %v712
    %v2195 = vunpack.c.l.b16 %v713
    %v2196 = vunpack.c.h.b16 %v713
    %v2197 = vunpack.c.l.b16 %v714
    %v2198 = vunpack.c.h.b16 %v714
    %v2199 = vunpack.c.l.b16 %v715
    %v2200 = vunpack.c.h.b16 %v715
    %v2201 = vunpack.c.l.b16 %v716
    %v2202 = vunpack.c.h.b16 %v716
    %v2203 = vunpack.c.l.b16 %v717
    %v2204 = vunpack.c.h.b16 %v717
    %v2205 = vunpack.c.l.b16 %v718
    %v2206 = vunpack.c.h.b16 %v718
    %v2207 = vunpack.c.l.b16 %v719
    %v2208 = vunpack.c.h.b16 %v719
    %v2209 = vunpack.c.l.b16 %v720
    %v2210 = vunpack.c.h.b16 %v720
    %v2211 = vunpack.c.l.b16 %v721
    %v2212 = vunpack.c.h.b16 %v721
    %v2213 = vunpack.c.l.b16 %v722
    %v2214 = vunpack.c.h.b16 %v722
    %v2215 = vunpack.c.l.b16 %v723
    %v2216 = vunpack.c.h.b16 %v723
    %v2217 = vunpack.c.l.b16 %v724
    %v2218 = vunpack.c.h.b16 %v724
    %v2219 = vunpack.c.l.b16 %v725
    %v2220 = vunpack.c.h.b16 %v725
    %v2221 = vunpack.c.l.b16 %v726
    %v2222 = vunpack.c.h.b16 %v726
    %v2223 = vunpack.c.l.b16 %v727
    %v2224 = vunpack.c.h.b16 %v727
    %v2225 = vunpack.c.l.b16 %v728
    %v2226 = vunpack.c.h.b16 %v728
    %v2227 = vunpack.c.l.b16 %v729
    %v2228 = vunpack.c.h.b16 %v729
    %v2229 = vunpack.c.l.b16 %v730
    %v2230 = vunpack.c.h.b16 %v730
    %v2231 = vunpack.c.l.b16 %v731
    %v2232 = vunpack.c.h.b16 %v731
    %v2233 = vunpack.c.l.b16 %v732
    %v2234 = vunpack.c.h.b16 %v732
    %v2235 = vunpack.c.l.b16 %v733
    %v2236 = vunpack.c.h.b16 %v733
    %v2237 = vunpack.c.l.b16 %v734
    %v2238 = vunpack.c.h.b16 %v734
    %v2239 = vunpack.c.l.b16 %v735
    %v2240 = vunpack.c.h.b16 %v735
    %v2241 = vunpack.c.l.b16 %v736
    %v2242 = vunpack.c.h.b16 %v736
    %v2243 = vunpack.c.l.b16 %v737
    %v2244 = vunpack.c.h.b16 %v737
    %v2245 = vunpack.c.l.b16 %v738
    %v2246 = vunpack.c.h.b16 %v738
    %v2247 = vunpack.c.l.b16 %v739
    %v2248 = vunpack.c.h.b16 %v739
    %v2249 = vunpack.c.l.b16 %v740
    %v2250 = vunpack.c.h.b16 %v740
    %v2251 = vunpack.c.l.b16 %v741
    %v2252 = vunpack.c.h.b16 %v741
    %v2253 = vunpack.c.l.b16 %v742
    %v2254 = vunpack.c.h.b16 %v742
    %v2255 = vunpack.c.l.b16 %v743
    %v2256 = vunpack.c.h.b16 %v743
    %v2257 = vunpack.c.l.b16 %v744
    %v2258 = vunpack.c.h.b16 %v744
    %v2259 = vunpack.c.l.b16 %v745
    %v2260 = vunpack.c.h.b16 %v745
    %v2261 = vunpack.c.l.b16 %v746
    %v2262 = vunpack.c.h.b16 %v746
    %v2263 = vunpack.c.l.b16 %v747
    %v2264 = vunpack.c.h.b16 %v747
    %v2265 = vunpack.c.l.b16 %v748
    %v2266 = vunpack.c.h.b16 %v748
    %v2267 = vunpack.c.l.b16 %v749
    %v2268 = vunpack.c.h.b16 %v749
    %v2269 = vunpack.c.l.b16 %v750
    %v2270 = vunpack.c.h.b16 %v750
    %v2271 = vunpack.c.l.b16 %v751
    %v2272 = vunpack.c.h.b16 %v751
    %v2273 = vunpack.c.l.b16 %v752
    %v2274 = vunpack.c.h.b16 %v752
    %v2275 = vunpack.c.l.b16 %v753
    %v2276 = vunpack.c.h.b16 %v753
    %v2277 = vunpack.c.l.b16 %v754
    %v2278 = vunpack.c.h.b16 %v754
    %v2279 = vunpack.c.l.b16 %v755
    %v2280 = vunpack.c.h.b16 %v755
    %v2281 = vunpack.c.l.b16 %v756
    %v2282 = vunpack.c.h.b16 %v756
    %v2283 = vunpack.c.l.b16 %v757
    %v2284 = vunpack.c.h.b16 %v757
    %v2285 = vunpack.c.l.b16 %v758
    %v2286 = vunpack.c.h.b16 %v758
    %v2287 = vunpack.c.l.b16 %v759
    %v2288 = vunpack.c.h.b16 %v759
    %v2289 = vunpack.c.l.b16 %v760
    %v2290 = vunpack.c.h.b16 %v760
    %v2291 = vunpack.c.l.b16 %v761
    %v2292 = vunpack.c.h.b16 %v761
    %v2293 = vunpack.c.l.b16 %v762
    %v2294 = vunpack.c.h.b16 %v762
    %v2295 = vunpack.c.l.b16 %v763
    %v2296 = vunpack.c.h.b16 %v763
    %v2297 = vunpack.c.l.b16 %v764
    %v2298 = vunpack.c.h.b16 %v764
    %v2299 = vunpack.c.l.b16 %v765
    %v2300 = vunpack.c.h.b16 %v765
    %v2301 = vunpack.c.l.b16 %v766
    %v2302 = vunpack.c.h.b16 %v766
    %v2303 = vunpack.c.l.b16 %v767
    %v2304 = vunpack.c.h.b16 %v767
    %v2305 = vunpack.c.l.b16 %v768
    %v2306 = vunpack.c.h.b16 %v768
    %v2307 = vunpack.c.l.b16 %v769
    %v2308 = vunpack.c.h.b16 %v769
    %v2309 = vunpack.c.l.b16 %v770
    %v2310 = vunpack.c.h.b16 %v770
    %v2311 = vunpack.c.l.b16 %v771
    %v2312 = vunpack.c.h.b16 %v771
    %v2313 = vunpack.c.l.b16 %v772
    %v2314 = vunpack.c.h.b16 %v772
    %v2315 = vunpack.c.l.b16 %v773
    %v2316 = vunpack.c.h.b16 %v773
    %v2317 = vunpack.c.l.b16 %v774
    %v2318 = vunpack.c.h.b16 %v774
    %v2319 = vunpack.c.l.b16 %v775
    %v2320 = vunpack.c.h.b16 %v775
    %v2321 = vunpack.c.l.b16 %v776
    %v2322 = vunpack.c.h.b16 %v776
    %v2323 = vunpack.c.l.b16 %v777
    %v2324 = vunpack.c.h.b16 %v777
    %v2325 = vunpack.c.l.b16 %v778
    %v2326 = vunpack.c.h.b16 %v778
    %v2327 = vunpack.c.l.b16 %v779
    %v2328 = vunpack.c.h.b16 %v779
    %v2329 = vunpack.c.l.b16 %v780
    %v2330 = vunpack.c.h.b16 %v780
    %v2331 = vunpack.c.l.b16 %v781
    %v2332 = vunpack.c.h.b16 %v781
    %v2333 = vunpack.c.l.b16 %v782
    %v2334 = vunpack.c.h.b16 %v782
    %v2335 = vunpack.c.l.b16 %v783
    %v2336 = vunpack.c.h.b16 %v783
    %v2337 = vunpack.c.l.b16 %v784
    %v2338 = vunpack.c.h.b16 %v784
    %v2339 = vunpack.c.l.b16 %v785
    %v2340 = vunpack.c.h.b16 %v785
    %v2341 = vunpack.c.l.b16 %v786
    %v2342 = vunpack.c.h.b16 %v786
    %v2343 = vunpack.c.l.b16 %v787
    %v2344 = vunpack.c.h.b16 %v787
    %v2345 = vunpack.c.l.b16 %v788
    %v2346 = vunpack.c.h.b16 %v788
    %v2347 = vunpack.c.l.b16 %v789
    %v2348 = vunpack.c.h.b16 %v789
    %v2349 = vunpack.c.l.b16 %v790
    %v2350 = vunpack.c.h.b16 %v790
    %v2351 = vunpack.c.l.b16 %v791
    %v2352 = vunpack.c.h.b16 %v791
    %v2353 = vunpack.c.l.b16 %v792
    %v2354 = vunpack.c.h.b16 %v792
    %v2355 = vunpack.c.l.b16 %v793
    %v2356 = vunpack.c.h.b16 %v793
    %v2357 = vunpack.c.l.b16 %v794
    %v2358 = vunpack.c.h.b16 %v794
    %v2359 = vunpack.c.l.b16 %v795
    %v2360 = vunpack.c.h.b16 %v795
    %v2361 = vunpack.c.l.b16 %v796
    %v2362 = vunpack.c.h.b16 %v796
    %v2363 = vunpack.c.l.b16 %v797
    %v2364 = vunpack.c.h.b16 %v797
    %v2365 = vunpack.c.l.b16 %v798
    %v2366 = vunpack.c.h.b16 %v798
    %v2367 = vunpack.c.l.b16 %v799
    %v2368 = vunpack.c.h.b16 %v799
    %v2369 = vunpack.c.l.b16 %v800
    %v2370 = vunpack.c.h.b16 %v800
    %v2371 = vunpack.c.l.b16 %v801
    %v2372 = vunpack.c.h.b16 %v801
    %v2373 = vunpack.c.l.b16 %v802
    %v2374 = vunpack.c.h.b16 %v802
    %v2375 = vunpack.c.l.b16 %v803
    %v2376 = vunpack.c.h.b16 %v803
    %v2377 = vunpack.c.l.b16 %v804
    %v2378 = vunpack.c.h.b16 %v804
    %v2379 = vunpack.c.l.b16 %v805
    %v2380 = vunpack.c.h.b16 %v805
    %v2381 = vunpack.c.l.b16 %v806
    %v2382 = vunpack.c.h.b16 %v806
    %v2383 = vunpack.c.l.b16 %v807
    %v2384 = vunpack.c.h.b16 %v807
    %v2385 = vunpack.c.l.b16 %v808
    %v2386 = vunpack.c.h.b16 %v808
    %v2387 = vpack.c.b16 %v1371, %v1363
    %v2388 = vpack.c.b16 %v1372, %v1364
    %v2389 = vpack.c.b16 %v1373, %v1365
    %v2390 = vpack.c.b16 %v1374, %v1366
    %v2391 = vpack.c.b16 %v1375, %v1367
    %v2392 = vpack.c.b16 %v1376, %v1368
    %v2393 = vpack.c.b16 %v1377, %v1369
    %v2394 = vpack.c.b16 %v1378, %v1370
    %v2395 = vpack.c.b16 %v1387, %v1379
    %v2396 = vpack.c.b16 %v1388, %v1380
    %v2397 = vpack.c.b16 %v1389, %v1381
    %v2398 = vpack.c.b16 %v1390, %v1382
    %v2399 = vpack.c.b16 %v1391, %v1383
    %v2400 = vpack.c.b16 %v1392, %v1384
    %v2401 = vpack.c.b16 %v1393, %v1385
    %v2402 = vpack.c.b16 %v1394, %v1386
    %v2403 = vpack.c.b16 %v1403, %v1395
    %v2404 = vpack.c.b16 %v1404, %v1396
    %v2405 = vpack.c.b16 %v1405, %v1397
    %v2406 = vpack.c.b16 %v1406, %v1398
    %v2407 = vpack.c.b16 %v1407, %v1399
    %v2408 = vpack.c.b16 %v1408, %v1400
    %v2409 = vpack.c.b16 %v1409, %v1401
    %v2410 = vpack.c.b16 %v1410, %v1402
    %v2411 = vpack.c.b16 %v1419, %v1411
    %v2412 = vpack.c.b16 %v1420, %v1412
    %v2413 = vpack.c.b16 %v1421, %v1413
    %v2414 = vpack.c.b16 %v1422, %v1414
    %v2415 = vpack.c.b16 %v1423, %v1415
    %v2416 = vpack.c.b16 %v1424, %v1416
    %v2417 = vpack.c.b16 %v1425, %v1417
    %v2418 = vpack.c.b16 %v1426, %v1418
    %v2419 = vpack.c.b16 %v1435, %v1427
    %v2420 = vpack.c.b16 %v1436, %v1428
    %v2421 = vpack.c.b16 %v1437, %v1429
    %v2422 = vpack.c.b16 %v1438, %v1430
    %v2423 = vpack.c.b16 %v1439, %v1431
    %v2424 = vpack.c.b16 %v1440, %v1432
    %v2425 = vpack.c.b16 %v1441, %v1433
    %v2426 = vpack.c.b16 %v1442, %v1434
    %v2427 = vpack.c.b16 %v1451, %v1443
    %v2428 = vpack.c.b16 %v1452, %v1444
    %v2429 = vpack.c.b16 %v1453, %v1445
    %v2430 = vpack.c.b16 %v1454, %v1446
    %v2431 = vpack.c.b16 %v1455, %v1447
    %v2432 = vpack.c.b16 %v1456, %v1448
    %v2433 = vpack.c.b16 %v1457, %v1449
    %v2434 = vpack.c.b16 %v1458, %v1450
    %v2435 = vpack.c.b16 %v1467, %v1459
    %v2436 = vpack.c.b16 %v1468, %v1460
    %v2437 = vpack.c.b16 %v1469, %v1461
    %v2438 = vpack.c.b16 %v1470, %v1462
    %v2439 = vpack.c.b16 %v1471, %v1463
    %v2440 = vpack.c.b16 %v1472, %v1464
    %v2441 = vpack.c.b16 %v1473, %v1465
    %v2442 = vpack.c.b16 %v1474, %v1466
    %v2443 = vpack.c.b16 %v1483, %v1475
    %v2444 = vpack.c.b16 %v1484, %v1476
    %v2445 = vpack.c.b16 %v1485, %v1477
    %v2446 = vpack.c.b16 %v1486, %v1478
    %v2447 = vpack.c.b16 %v1487, %v1479
    %v2448 = vpack.c.b16 %v1488, %v1480
    %v2449 = vpack.c.b16 %v1489, %v1481
    %v2450 = vpack.c.b16 %v1490, %v1482
    %v2451 = vpack.c.b16 %v1499, %v1491
    %v2452 = vpack.c.b16 %v1500, %v1492
    %v2453 = vpack.c.b16 %v1501, %v1493
    %v2454 = vpack.c.b16 %v1502, %v1494
    %v2455 = vpack.c.b16 %v1503, %v1495
    %v2456 = vpack.c.b16 %v1504, %v1496
    %v2457 = vpack.c.b16 %v1505, %v1497
    %v2458 = vpack.c.b16 %v1506, %v1498
    %v2459 = vpack.c.b16 %v1515, %v1507
    %v2460 = vpack.c.b16 %v1516, %v1508
    %v2461 = vpack.c.b16 %v1517, %v1509
    %v2462 = vpack.c.b16 %v1518, %v1510
    %v2463 = vpack.c.b16 %v1519, %v1511
    %v2464 = vpack.c.b16 %v1520, %v1512
    %v2465 = vpack.c.b16 %v1521, %v1513
    %v2466 = vpack.c.b16 %v1522, %v1514
    %v2467 = vpack.c.b16 %v1531, %v1523
    %v2468 = vpack.c.b16 %v1532, %v1524
    %v2469 = vpack.c.b16 %v1533, %v1525
    %v2470 = vpack.c.b16 %v1534, %v1526
    %v2471 = vpack.c.b16 %v1535, %v1527
    %v2472 = vpack.c.b16 %v1536, %v1528
    %v2473 = vpack.c.b16 %v1537, %v1529
    %v2474 = vpack.c.b16 %v1538, %v1530
    %v2475 = vpack.c.b16 %v1547, %v1539
    %v2476 = vpack.c.b16 %v1548, %v1540
    %v2477 = vpack.c.b16 %v1549, %v1541
    %v2478 = vpack.c.b16 %v1550, %v1542
    %v2479 = vpack.c.b16 %v1551, %v1543
    %v2480 = vpack.c.b16 %v1552, %v1544
    %v2481 = vpack.c.b16 %v1553, %v1545
    %v2482 = vpack.c.b16 %v1554, %v1546
    %v2483 = vpack.c.b16 %v1563, %v1555
    %v2484 = vpack.c.b16 %v1564, %v1556
    %v2485 = vpack.c.b16 %v1565, %v1557
    %v2486 = vpack.c.b16 %v1566, %v1558
    %v2487 = vpack.c.b16 %v1567, %v1559
    %v2488 = vpack.c.b16 %v1568, %v1560
    %v2489 = vpack.c.b16 %v1569, %v1561
    %v2490 = vpack.c.b16 %v1570, %v1562
    %v2491 = vpack.c.b16 %v1579, %v1571
    %v2492 = vpack.c.b16 %v1580, %v1572
    %v2493 = vpack.c.b16 %v1581, %v1573
    %v2494 = vpack.c.b16 %v1582, %v1574
    %v2495 = vpack.c.b16 %v1583, %v1575
    %v2496 = vpack.c.b16 %v1584, %v1576
    %v2497 = vpack.c.b16 %v1585, %v1577
    %v2498 = vpack.c.b16 %v1586, %v1578
    %v2499 = vpack.c.b16 %v1595, %v1587
    %v2500 = vpack.c.b16 %v1596, %v1588
    %v2501 = vpack.c.b16 %v1597, %v1589
    %v2502 = vpack.c.b16 %v1598, %v1590
    %v2503 = vpack.c.b16 %v1599, %v1591
    %v2504 = vpack.c.b16 %v1600, %v1592
    %v2505 = vpack.c.b16 %v1601, %v1593
    %v2506 = vpack.c.b16 %v1602, %v1594
    %v2507 = vpack.c.b16 %v1611, %v1603
    %v2508 = vpack.c.b16 %v1612, %v1604
    %v2509 = vpack.c.b16 %v1613, %v1605
    %v2510 = vpack.c.b16 %v1614, %v1606
    %v2511 = vpack.c.b16 %v1615, %v1607
    %v2512 = vpack.c.b16 %v1616, %v1608
    %v2513 = vpack.c.b16 %v1617, %v1609
    %v2514 = vpack.c.b16 %v1618, %v1610
    %v2515 = vpack.c.b16 %v1627, %v1619
    %v2516 = vpack.c.b16 %v1628, %v1620
    %v2517 = vpack.c.b16 %v1629, %v1621
    %v2518 = vpack.c.b16 %v1630, %v1622
    %v2519 = vpack.c.b16 %v1631, %v1623
    %v2520 = vpack.c.b16 %v1632, %v1624
    %v2521 = vpack.c.b16 %v1633, %v1625
    %v2522 = vpack.c.b16 %v1634, %v1626
    %v2523 = vpack.c.b16 %v1643, %v1635
    %v2524 = vpack.c.b16 %v1644, %v1636
    %v2525 = vpack.c.b16 %v1645, %v1637
    %v2526 = vpack.c.b16 %v1646, %v1638
    %v2527 = vpack.c.b16 %v1647, %v1639
    %v2528 = vpack.c.b16 %v1648, %v1640
    %v2529 = vpack.c.b16 %v1649, %v1641
    %v2530 = vpack.c.b16 %v1650, %v1642
    %v2531 = vpack.c.b16 %v1659, %v1651
    %v2532 = vpack.c.b16 %v1660, %v1652
    %v2533 = vpack.c.b16 %v1661, %v1653
    %v2534 = vpack.c.b16 %v1662, %v1654
    %v2535 = vpack.c.b16 %v1663, %v1655
    %v2536 = vpack.c.b16 %v1664, %v1656
    %v2537 = vpack.c.b16 %v1665, %v1657
    %v2538 = vpack.c.b16 %v1666, %v1658
    %v2539 = vpack.c.b16 %v1675, %v1667
    %v2540 = vpack.c.b16 %v1676, %v1668
    %v2541 = vpack.c.b16 %v1677, %v1669
    %v2542 = vpack.c.b16 %v1678, %v1670
    %v2543 = vpack.c.b16 %v1679, %v1671
    %v2544 = vpack.c.b16 %v1680, %v1672
    %v2545 = vpack.c.b16 %v1681, %v1673
    %v2546 = vpack.c.b16 %v1682, %v1674
    %v2547 = vpack.c.b16 %v1691, %v1683
    %v2548 = vpack.c.b16 %v1692, %v1684
    %v2549 = vpack.c.b16 %v1693, %v1685
    %v2550 = vpack.c.b16 %v1694, %v1686
    %v2551 = vpack.c.b16 %v1695, %v1687
    %v2552 = vpack.c.b16 %v1696, %v1688
    %v2553 = vpack.c.b16 %v1697, %v1689
    %v2554 = vpack.c.b16 %v1698, %v1690
    %v2555 = vpack.c.b16 %v1707, %v1699
    %v2556 = vpack.c.b16 %v1708, %v1700
    %v2557 = vpack.c.b16 %v1709, %v1701
    %v2558 = vpack.c.b16 %v1710, %v1702
    %v2559 = vpack.c.b16 %v1711, %v1703
    %v2560 = vpack.c.b16 %v1712, %v1704
    %v2561 = vpack.c.b16 %v1713, %v1705
    %v2562 = vpack.c.b16 %v1714, %v1706
    %v2563 = vpack.c.b16 %v1723, %v1715
    %v2564 = vpack.c.b16 %v1724, %v1716
    %v2565 = vpack.c.b16 %v1725, %v1717
    %v2566 = vpack.c.b16 %v1726, %v1718
    %v2567 = vpack.c.b16 %v1727, %v1719
    %v2568 = vpack.c.b16 %v1728, %v1720
    %v2569 = vpack.c.b16 %v1729, %v1721
    %v2570 = vpack.c.b16 %v1730, %v1722
    %v2571 = vpack.c.b16 %v1739, %v1731
    %v2572 = vpack.c.b16 %v1740, %v1732
    %v2573 = vpack.c.b16 %v1741, %v1733
    %v2574 = vpack.c.b16 %v1742, %v1734
    %v2575 = vpack.c.b16 %v1743, %v1735
    %v2576 = vpack.c.b16 %v1744, %v1736
    %v2577 = vpack.c.b16 %v1745, %v1737
    %v2578 = vpack.c.b16 %v1746, %v1738
    %v2579 = vpack.c.b16 %v1755, %v1747
    %v2580 = vpack.c.b16 %v1756, %v1748
    %v2581 = vpack.c.b16 %v1757, %v1749
    %v2582 = vpack.c.b16 %v1758, %v1750
    %v2583 = vpack.c.b16 %v1759, %v1751
    %v2584 = vpack.c.b16 %v1760, %v1752
    %v2585 = vpack.c.b16 %v1761, %v1753
    %v2586 = vpack.c.b16 %v1762, %v1754
    %v2587 = vpack.c.b16 %v1771, %v1763
    %v2588 = vpack.c.b16 %v1772, %v1764
    %v2589 = vpack.c.b16 %v1773, %v1765
    %v2590 = vpack.c.b16 %v1774, %v1766
    %v2591 = vpack.c.b16 %v1775, %v1767
    %v2592 = vpack.c.b16 %v1776, %v1768
    %v2593 = vpack.c.b16 %v1777, %v1769
    %v2594 = vpack.c.b16 %v1778, %v1770
    %v2595 = vpack.c.b16 %v1787, %v1779
    %v2596 = vpack.c.b16 %v1788, %v1780
    %v2597 = vpack.c.b16 %v1789, %v1781
    %v2598 = vpack.c.b16 %v1790, %v1782
    %v2599 = vpack.c.b16 %v1791, %v1783
    %v2600 = vpack.c.b16 %v1792, %v1784
    %v2601 = vpack.c.b16 %v1793, %v1785
    %v2602 = vpack.c.b16 %v1794, %v1786
    %v2603 = vpack.c.b16 %v1803, %v1795
    %v2604 = vpack.c.b16 %v1804, %v1796
    %v2605 = vpack.c.b16 %v1805, %v1797
    %v2606 = vpack.c.b16 %v1806, %v1798
    %v2607 = vpack.c.b16 %v1807, %v1799
    %v2608 = vpack.c.b16 %v1808, %v1800
    %v2609 = vpack.c.b16 %v1809, %v1801
    %v2610 = vpack.c.b16 %v1810, %v1802
    %v2611 = vpack.c.b16 %v1819, %v1811
    %v2612 = vpack.c.b16 %v1820, %v1812
    %v2613 = vpack.c.b16 %v1821, %v1813
    %v2614 = vpack.c.b16 %v1822, %v1814
    %v2615 = vpack.c.b16 %v1823, %v1815
    %v2616 = vpack.c.b16 %v1824, %v1816
    %v2617 = vpack.c.b16 %v1825, %v1817
    %v2618 = vpack.c.b16 %v1826, %v1818
    %v2619 = vpack.c.b16 %v1835, %v1827
    %v2620 = vpack.c.b16 %v1836, %v1828
    %v2621 = vpack.c.b16 %v1837, %v1829
    %v2622 = vpack.c.b16 %v1838, %v1830
    %v2623 = vpack.c.b16 %v1839, %v1831
    %v2624 = vpack.c.b16 %v1840, %v1832
    %v2625 = vpack.c.b16 %v1841, %v1833
    %v2626 = vpack.c.b16 %v1842, %v1834
    %v2627 = vpack.c.b16 %v1851, %v1843
    %v2628 = vpack.c.b16 %v1852, %v1844
    %v2629 = vpack.c.b16 %v1853, %v1845
    %v2630 = vpack.c.b16 %v1854, %v1846
    %v2631 = vpack.c.b16 %v1855, %v1847
    %v2632 = vpack.c.b16 %v1856, %v1848
    %v2633 = vpack.c.b16 %v1857, %v1849
    %v2634 = vpack.c.b16 %v1858, %v1850
    %v2635 = vpack.c.b16 %v1867, %v1859
    %v2636 = vpack.c.b16 %v1868, %v1860
    %v2637 = vpack.c.b16 %v1869, %v1861
    %v2638 = vpack.c.b16 %v1870, %v1862
    %v2639 = vpack.c.b16 %v1871, %v1863
    %v2640 = vpack.c.b16 %v1872, %v1864
    %v2641 = vpack.c.b16 %v1873, %v1865
    %v2642 = vpack.c.b16 %v1874, %v1866
    %v2643 = vpack.c.b16 %v1883, %v1875
    %v2644 = vpack.c.b16 %v1884, %v1876
    %v2645 = vpack.c.b16 %v1885, %v1877
    %v2646 = vpack.c.b16 %v1886, %v1878
    %v2647 = vpack.c.b16 %v1887, %v1879
    %v2648 = vpack.c.b16 %v1888, %v1880
    %v2649 = vpack.c.b16 %v1889, %v1881
    %v2650 = vpack.c.b16 %v1890, %v1882
    %v2651 = vpack.c.b16 %v1899, %v1891
    %v2652 = vpack.c.b16 %v1900, %v1892
    %v2653 = vpack.c.b16 %v1901, %v1893
    %v2654 = vpack.c.b16 %v1902, %v1894
    %v2655 = vpack.c.b16 %v1903, %v1895
    %v2656 = vpack.c.b16 %v1904, %v1896
    %v2657 = vpack.c.b16 %v1905, %v1897
    %v2658 = vpack.c.b16 %v1906, %v1898
    %v2659 = vpack.c.b16 %v1915, %v1907
    %v2660 = vpack.c.b16 %v1916, %v1908
    %v2661 = vpack.c.b16 %v1917, %v1909
    %v2662 = vpack.c.b16 %v1918, %v1910
    %v2663 = vpack.c.b16 %v1919, %v1911
    %v2664 = vpack.c.b16 %v1920, %v1912
    %v2665 = vpack.c.b16 %v1921, %v1913
    %v2666 = vpack.c.b16 %v1922, %v1914
    %v2667 = vpack.c.b16 %v1931, %v1923
    %v2668 = vpack.c.b16 %v1932, %v1924
    %v2669 = vpack.c.b16 %v1933, %v1925
    %v2670 = vpack.c.b16 %v1934, %v1926
    %v2671 = vpack.c.b16 %v1935, %v1927
    %v2672 = vpack.c.b16 %v1936, %v1928
    %v2673 = vpack.c.b16 %v1937, %v1929
    %v2674 = vpack.c.b16 %v1938, %v1930
    %v2675 = vpack.c.b16 %v1947, %v1939
    %v2676 = vpack.c.b16 %v1948, %v1940
    %v2677 = vpack.c.b16 %v1949, %v1941
    %v2678 = vpack.c.b16 %v1950, %v1942
    %v2679 = vpack.c.b16 %v1951, %v1943
    %v2680 = vpack.c.b16 %v1952, %v1944
    %v2681 = vpack.c.b16 %v1953, %v1945
    %v2682 = vpack.c.b16 %v1954, %v1946
    %v2683 = vpack.c.b16 %v1963, %v1955
    %v2684 = vpack.c.b16 %v1964, %v1956
    %v2685 = vpack.c.b16 %v1965, %v1957
    %v2686 = vpack.c.b16 %v1966, %v1958
    %v2687 = vpack.c.b16 %v1967, %v1959
    %v2688 = vpack.c.b16 %v1968, %v1960
    %v2689 = vpack.c.b16 %v1969, %v1961
    %v2690 = vpack.c.b16 %v1970, %v1962
    %v2691 = vpack.c.b16 %v1979, %v1971
    %v2692 = vpack.c.b16 %v1980, %v1972
    %v2693 = vpack.c.b16 %v1981, %v1973
    %v2694 = vpack.c.b16 %v1982, %v1974
    %v2695 = vpack.c.b16 %v1983, %v1975
    %v2696 = vpack.c.b16 %v1984, %v1976
    %v2697 = vpack.c.b16 %v1985, %v1977
    %v2698 = vpack.c.b16 %v1986, %v1978
    %v2699 = vpack.c.b16 %v1995, %v1987
    %v2700 = vpack.c.b16 %v1996, %v1988
    %v2701 = vpack.c.b16 %v1997, %v1989
    %v2702 = vpack.c.b16 %v1998, %v1990
    %v2703 = vpack.c.b16 %v1999, %v1991
    %v2704 = vpack.c.b16 %v2000, %v1992
    %v2705 = vpack.c.b16 %v2001, %v1993
    %v2706 = vpack.c.b16 %v2002, %v1994
    %v2707 = vpack.c.b16 %v2011, %v2003
    %v2708 = vpack.c.b16 %v2012, %v2004
    %v2709 = vpack.c.b16 %v2013, %v2005
    %v2710 = vpack.c.b16 %v2014, %v2006
    %v2711 = vpack.c.b16 %v2015, %v2007
    %v2712 = vpack.c.b16 %v2016, %v2008
    %v2713 = vpack.c.b16 %v2017, %v2009
    %v2714 = vpack.c.b16 %v2018, %v2010
    %v2715 = vpack.c.b16 %v2027, %v2019
    %v2716 = vpack.c.b16 %v2028, %v2020
    %v2717 = vpack.c.b16 %v2029, %v2021
    %v2718 = vpack.c.b16 %v2030, %v2022
    %v2719 = vpack.c.b16 %v2031, %v2023
    %v2720 = vpack.c.b16 %v2032, %v2024
    %v2721 = vpack.c.b16 %v2033, %v2025
    %v2722 = vpack.c.b16 %v2034, %v2026
    %v2723 = vpack.c.b16 %v2043, %v2035
    %v2724 = vpack.c.b16 %v2044, %v2036
    %v2725 = vpack.c.b16 %v2045, %v2037
    %v2726 = vpack.c.b16 %v2046, %v2038
    %v2727 = vpack.c.b16 %v2047, %v2039
    %v2728 = vpack.c.b16 %v2048, %v2040
    %v2729 = vpack.c.b16 %v2049, %v2041
    %v2730 = vpack.c.b16 %v2050, %v2042
    %v2731 = vpack.c.b16 %v2059, %v2051
    %v2732 = vpack.c.b16 %v2060, %v2052
    %v2733 = vpack.c.b16 %v2061, %v2053
    %v2734 = vpack.c.b16 %v2062, %v2054
    %v2735 = vpack.c.b16 %v2063, %v2055
    %v2736 = vpack.c.b16 %v2064, %v2056
    %v2737 = vpack.c.b16 %v2065, %v2057
    %v2738 = vpack.c.b16 %v2066, %v2058
    %v2739 = vpack.c.b16 %v2075, %v2067
    %v2740 = vpack.c.b16 %v2076, %v2068
    %v2741 = vpack.c.b16 %v2077, %v2069
    %v2742 = vpack.c.b16 %v2078, %v2070
    %v2743 = vpack.c.b16 %v2079, %v2071
    %v2744 = vpack.c.b16 %v2080, %v2072
    %v2745 = vpack.c.b16 %v2081, %v2073
    %v2746 = vpack.c.b16 %v2082, %v2074
    %v2747 = vpack.c.b16 %v2091, %v2083
    %v2748 = vpack.c.b16 %v2092, %v2084
    %v2749 = vpack.c.b16 %v2093, %v2085
    %v2750 = vpack.c.b16 %v2094, %v2086
    %v2751 = vpack.c.b16 %v2095, %v2087
    %v2752 = vpack.c.b16 %v2096, %v2088
    %v2753 = vpack.c.b16 %v2097, %v2089
    %v2754 = vpack.c.b16 %v2098, %v2090
    %v2755 = vpack.c.b16 %v2107, %v2099
    %v2756 = vpack.c.b16 %v2108, %v2100
    %v2757 = vpack.c.b16 %v2109, %v2101
    %v2758 = vpack.c.b16 %v2110, %v2102
    %v2759 = vpack.c.b16 %v2111, %v2103
    %v2760 = vpack.c.b16 %v2112, %v2104
    %v2761 = vpack.c.b16 %v2113, %v2105
    %v2762 = vpack.c.b16 %v2114, %v2106
    %v2763 = vpack.c.b16 %v2123, %v2115
    %v2764 = vpack.c.b16 %v2124, %v2116
    %v2765 = vpack.c.b16 %v2125, %v2117
    %v2766 = vpack.c.b16 %v2126, %v2118
    %v2767 = vpack.c.b16 %v2127, %v2119
    %v2768 = vpack.c.b16 %v2128, %v2120
    %v2769 = vpack.c.b16 %v2129, %v2121
    %v2770 = vpack.c.b16 %v2130, %v2122
    %v2771 = vpack.c.b16 %v2139, %v2131
    %v2772 = vpack.c.b16 %v2140, %v2132
    %v2773 = vpack.c.b16 %v2141, %v2133
    %v2774 = vpack.c.b16 %v2142, %v2134
    %v2775 = vpack.c.b16 %v2143, %v2135
    %v2776 = vpack.c.b16 %v2144, %v2136
    %v2777 = vpack.c.b16 %v2145, %v2137
    %v2778 = vpack.c.b16 %v2146, %v2138
    %v2779 = vpack.c.b16 %v2155, %v2147
    %v2780 = vpack.c.b16 %v2156, %v2148
    %v2781 = vpack.c.b16 %v2157, %v2149
    %v2782 = vpack.c.b16 %v2158, %v2150
    %v2783 = vpack.c.b16 %v2159, %v2151
    %v2784 = vpack.c.b16 %v2160, %v2152
    %v2785 = vpack.c.b16 %v2161, %v2153
    %v2786 = vpack.c.b16 %v2162, %v2154
    %v2787 = vpack.c.b16 %v2171, %v2163
    %v2788 = vpack.c.b16 %v2172, %v2164
    %v2789 = vpack.c.b16 %v2173, %v2165
    %v2790 = vpack.c.b16 %v2174, %v2166
    %v2791 = vpack.c.b16 %v2175, %v2167
    %v2792 = vpack.c.b16 %v2176, %v2168
    %v2793 = vpack.c.b16 %v2177, %v2169
    %v2794 = vpack.c.b16 %v2178, %v2170
    %v2795 = vpack.c.b16 %v2187, %v2179
    %v2796 = vpack.c.b16 %v2188, %v2180
    %v2797 = vpack.c.b16 %v2189, %v2181
    %v2798 = vpack.c.b16 %v2190, %v2182
    %v2799 = vpack.c.b16 %v2191, %v2183
    %v2800 = vpack.c.b16 %v2192, %v2184
    %v2801 = vpack.c.b16 %v2193, %v2185
    %v2802 = vpack.c.b16 %v2194, %v2186
    %v2803 = vpack.c.b16 %v2203, %v2195
    %v2804 = vpack.c.b16 %v2204, %v2196
    %v2805 = vpack.c.b16 %v2205, %v2197
    %v2806 = vpack.c.b16 %v2206, %v2198
    %v2807 = vpack.c.b16 %v2207, %v2199
    %v2808 = vpack.c.b16 %v2208, %v2200
    %v2809 = vpack.c.b16 %v2209, %v2201
    %v2810 = vpack.c.b16 %v2210, %v2202
    %v2811 = vpack.c.b16 %v2219, %v2211
    %v2812 = vpack.c.b16 %v2220, %v2212
    %v2813 = vpack.c.b16 %v2221, %v2213
    %v2814 = vpack.c.b16 %v2222, %v2214
    %v2815 = vpack.c.b16 %v2223, %v2215
    %v2816 = vpack.c.b16 %v2224, %v2216
    %v2817 = vpack.c.b16 %v2225, %v2217
    %v2818 = vpack.c.b16 %v2226, %v2218
    %v2819 = vpack.c.b16 %v2235, %v2227
    %v2820 = vpack.c.b16 %v2236, %v2228
    %v2821 = vpack.c.b16 %v2237, %v2229
    %v2822 = vpack.c.b16 %v2238, %v2230
    %v2823 = vpack.c.b16 %v2239, %v2231
    %v2824 = vpack.c.b16 %v2240, %v2232
    %v2825 = vpack.c.b16 %v2241, %v2233
    %v2826 = vpack.c.b16 %v2242, %v2234
    %v2827 = vpack.c.b16 %v2251, %v2243
    %v2828 = vpack.c.b16 %v2252, %v2244
    %v2829 = vpack.c.b16 %v2253, %v2245
    %v2830 = vpack.c.b16 %v2254, %v2246
    %v2831 = vpack.c.b16 %v2255, %v2247
    %v2832 = vpack.c.b16 %v2256, %v2248
    %v2833 = vpack.c.b16 %v2257, %v2249
    %v2834 = vpack.c.b16 %v2258, %v2250
    %v2835 = vpack.c.b16 %v2267, %v2259
    %v2836 = vpack.c.b16 %v2268, %v2260
    %v2837 = vpack.c.b16 %v2269, %v2261
    %v2838 = vpack.c.b16 %v2270, %v2262
    %v2839 = vpack.c.b16 %v2271, %v2263
    %v2840 = vpack.c.b16 %v2272, %v2264
    %v2841 = vpack.c.b16 %v2273, %v2265
    %v2842 = vpack.c.b16 %v2274, %v2266
    %v2843 = vpack.c.b16 %v2283, %v2275
    %v2844 = vpack.c.b16 %v2284, %v2276
    %v2845 = vpack.c.b16 %v2285, %v2277
    %v2846 = vpack.c.b16 %v2286, %v2278
    %v2847 = vpack.c.b16 %v2287, %v2279
    %v2848 = vpack.c.b16 %v2288, %v2280
    %v2849 = vpack.c.b16 %v2289, %v2281
    %v2850 = vpack.c.b16 %v2290, %v2282
    %v2851 = vpack.c.b16 %v2299, %v2291
    %v2852 = vpack.c.b16 %v2300, %v2292
    %v2853 = vpack.c.b16 %v2301, %v2293
    %v2854 = vpack.c.b16 %v2302, %v2294
    %v2855 = vpack.c.b16 %v2303, %v2295
    %v2856 = vpack.c.b16 %v2304, %v2296
    %v2857 = vpack.c.b16 %v2305, %v2297
    %v2858 = vpack.c.b16 %v2306, %v2298
    %v2859 = vpack.c.b16 %v2315, %v2307
    %v2860 = vpack.c.b16 %v2316, %v2308
    %v2861 = vpack.c.b16 %v2317, %v2309
    %v2862 = vpack.c.b16 %v2318, %v2310
    %v2863 = vpack.c.b16 %v2319, %v2311
    %v2864 = vpack.c.b16 %v2320, %v2312
    %v2865 = vpack.c.b16 %v2321, %v2313
    %v2866 = vpack.c.b16 %v2322, %v2314
    %v2867 = vpack.c.b16 %v2331, %v2323
    %v2868 = vpack.c.b16 %v2332, %v2324
    %v2869 = vpack.c.b16 %v2333, %v2325
    %v2870 = vpack.c.b16 %v2334, %v2326
    %v2871 = vpack.c.b16 %v2335, %v2327
    %v2872 = vpack.c.b16 %v2336, %v2328
    %v2873 = vpack.c.b16 %v2337, %v2329
    %v2874 = vpack.c.b16 %v2338, %v2330
    %v2875 = vpack.c.b16 %v2347, %v2339
    %v2876 = vpack.c.b16 %v2348, %v2340
    %v2877 = vpack.c.b16 %v2349, %v2341
    %v2878 = vpack.c.b16 %v2350, %v2342
    %v2879 = vpack.c.b16 %v2351, %v2343
    %v2880 = vpack.c.b16 %v2352, %v2344
    %v2881 = vpack.c.b16 %v2353, %v2345
    %v2882 = vpack.c.b16 %v2354, %v2346
    %v2883 = vpack.c.b16 %v2363, %v2355
    %v2884 = vpack.c.b16 %v2364, %v2356
    %v2885 = vpack.c.b16 %v2365, %v2357
    %v2886 = vpack.c.b16 %v2366, %v2358
    %v2887 = vpack.c.b16 %v2367, %v2359
    %v2888 = vpack.c.b16 %v2368, %v2360
    %v2889 = vpack.c.b16 %v2369, %v2361
    %v2890 = vpack.c.b16 %v2370, %v2362
    %v2891 = vpack.c.b16 %v2379, %v2371
    %v2892 = vpack.c.b16 %v2380, %v2372
    %v2893 = vpack.c.b16 %v2381, %v2373
    %v2894 = vpack.c.b16 %v2382, %v2374
    %v2895 = vpack.c.b16 %v2383, %v2375
    %v2896 = vpack.c.b16 %v2384, %v2376
    %v2897 = vpack.c.b16 %v2385, %v2377
    %v2898 = vpack.c.b16 %v2386, %v2378
    %3411 = vmatprep.subr.bf16.mxu0 %v2388
    %3412 = vmatpush1.bf16.msra.mxu0 %v2387
    %3413 = vmatprep.subr.bf16.mxu0 %v2396
    %3414 = vmatpush1.bf16.msra.mxu0 %v2395
    %3415 = vmatprep.subr.bf16.mxu0 %v2404
    %3416 = vmatpush1.bf16.msra.mxu0 %v2403
    %3417 = vmatprep.subr.bf16.mxu0 %v2412
    %3418 = vmatpush1.bf16.msra.mxu0 %v2411
    %3419 = vmatprep.subr.bf16.mxu0 %v2420
    %3420 = vmatpush1.bf16.msra.mxu0 %v2419
    %3421 = vmatprep.subr.bf16.mxu0 %v2428
    %3422 = vmatpush1.bf16.msra.mxu0 %v2427
    %3423 = vmatprep.subr.bf16.mxu0 %v2436
    %3424 = vmatpush1.bf16.msra.mxu0 %v2435
    %3425 = vmatprep.subr.bf16.mxu0 %v2444
    %3426 = vmatpush1.bf16.msra.mxu0 %v2443
    %3427 = vmatprep.subr.bf16.mxu0 %v2452
    %3428 = vmatpush1.bf16.msra.mxu0 %v2451
    %3429 = vmatprep.subr.bf16.mxu0 %v2460
    %3430 = vmatpush1.bf16.msra.mxu0 %v2459
    %3431 = vmatprep.subr.bf16.mxu0 %v2468
    %3432 = vmatpush1.bf16.msra.mxu0 %v2467
    %3433 = vmatprep.subr.bf16.mxu0 %v2476
    %3434 = vmatpush1.bf16.msra.mxu0 %v2475
    %3435 = vmatprep.subr.bf16.mxu0 %v2484
    %3436 = vmatpush1.bf16.msra.mxu0 %v2483
    %3437 = vmatprep.subr.bf16.mxu0 %v2492
    %3438 = vmatpush1.bf16.msra.mxu0 %v2491
    %3439 = vmatprep.subr.bf16.mxu0 %v2500
    %3440 = vmatpush1.bf16.msra.mxu0 %v2499
    %3441 = vmatprep.subr.bf16.mxu0 %v2508
    %3442 = vmatpush1.bf16.msra.mxu0 %v2507
    %3443 = vmatprep.mubr.bf16.mxu0 %v290
    %3444 = vmatmul.mubr.bf16.gmra.mrb[0].mxu0 %v289
    %v3445 = vpop.f32.mrb[0].mxu0
    %v3446 = vadd.f32 %v814, %v3445
    %v3447 = vpop.f32.mrb[0].mxu0
    %v3448 = vadd.f32 %v818, %v3447
    %v3449 = vpop.f32.mrb[0].mxu0
    %v3450 = vpop.f32.mrb[0].mxu0
    %3451 = vdwg.mxu0
    %3452 = vmatprep.subr.bf16.mxu0 %v2516
    %3453 = vmatpush1.bf16.msra.mxu0 %v2515
    %3454 = vmatprep.subr.bf16.mxu0 %v2524
    %3455 = vmatpush1.bf16.msra.mxu0 %v2523
    %3456 = vmatprep.subr.bf16.mxu0 %v2532
    %3457 = vmatpush1.bf16.msra.mxu0 %v2531
    %3458 = vmatprep.subr.bf16.mxu0 %v2540
    %3459 = vmatpush1.bf16.msra.mxu0 %v2539
    %3460 = vmatprep.subr.bf16.mxu0 %v2548
    %3461 = vmatpush1.bf16.msra.mxu0 %v2547
    %3462 = vmatprep.subr.bf16.mxu0 %v2556
    %3463 = vmatpush1.bf16.msra.mxu0 %v2555
    %3464 = vmatprep.subr.bf16.mxu0 %v2564
    %3465 = vmatpush1.bf16.msra.mxu0 %v2563
    %3466 = vmatprep.subr.bf16.mxu0 %v2572
    %3467 = vmatpush1.bf16.msra.mxu0 %v2571
    %3468 = vmatprep.subr.bf16.mxu0 %v2580
    %3469 = vmatpush1.bf16.msra.mxu0 %v2579
    %3470 = vmatprep.subr.bf16.mxu0 %v2588
    %3471 = vmatpush1.bf16.msra.mxu0 %v2587
    %3472 = vmatprep.subr.bf16.mxu0 %v2596
    %3473 = vmatpush1.bf16.msra.mxu0 %v2595
    %3474 = vmatprep.subr.bf16.mxu0 %v2604
    %3475 = vmatpush1.bf16.msra.mxu0 %v2603
    %3476 = vmatprep.subr.bf16.mxu0 %v2612
    %3477 = vmatpush1.bf16.msra.mxu0 %v2611
    %3478 = vmatprep.subr.bf16.mxu0 %v2620
    %3479 = vmatpush1.bf16.msra.mxu0 %v2619
    %3480 = vmatprep.subr.bf16.mxu0 %v2628
    %3481 = vmatpush1.bf16.msra.mxu0 %v2627
    %3482 = vmatprep.subr.bf16.mxu0 %v2636
    %3483 = vmatpush1.bf16.msra.mxu0 %v2635
    %3484 = vmatprep.mubr.bf16.mxu0 %v292
    %3485 = vmatmul.mubr.bf16.gmra.mrb[0].mxu0 %v291
    %v3486 = vpop.f32.mrb[0].mxu0
    %v3487 = vadd.f32 %v3446, %v3486
    %v3488 = vpop.f32.mrb[0].mxu0
    %v3489 = vadd.f32 %v3448, %v3488
    %v3490 = vpop.f32.mrb[0].mxu0
    %v3491 = vpop.f32.mrb[0].mxu0
    %3492 = vdwg.mxu0
    %3493 = vmatprep.subr.bf16.mxu0 %v2644
    %3494 = vmatpush1.bf16.msra.mxu0 %v2643
    %3495 = vmatprep.subr.bf16.mxu0 %v2652
    %3496 = vmatpush1.bf16.msra.mxu0 %v2651
    %3497 = vmatprep.subr.bf16.mxu0 %v2660
    %3498 = vmatpush1.bf16.msra.mxu0 %v2659
    %3499 = vmatprep.subr.bf16.mxu0 %v2668
    %3500 = vmatpush1.bf16.msra.mxu0 %v2667
    %3501 = vmatprep.subr.bf16.mxu0 %v2676
    %3502 = vmatpush1.bf16.msra.mxu0 %v2675
    %3503 = vmatprep.subr.bf16.mxu0 %v2684
    %3504 = vmatpush1.bf16.msra.mxu0 %v2683
    %3505 = vmatprep.subr.bf16.mxu0 %v2692
    %3506 = vmatpush1.bf16.msra.mxu0 %v2691
    %3507 = vmatprep.subr.bf16.mxu0 %v2700
    %3508 = vmatpush1.bf16.msra.mxu0 %v2699
    %3509 = vmatprep.subr.bf16.mxu0 %v2708
    %3510 = vmatpush1.bf16.msra.mxu0 %v2707
    %3511 = vmatprep.subr.bf16.mxu0 %v2716
    %3512 = vmatpush1.bf16.msra.mxu0 %v2715
    %3513 = vmatprep.subr.bf16.mxu0 %v2724
    %3514 = vmatpush1.bf16.msra.mxu0 %v2723
    %3515 = vmatprep.subr.bf16.mxu0 %v2732
    %3516 = vmatpush1.bf16.msra.mxu0 %v2731
    %3517 = vmatprep.subr.bf16.mxu0 %v2740
    %3518 = vmatpush1.bf16.msra.mxu0 %v2739
    %3519 = vmatprep.subr.bf16.mxu0 %v2748
    %3520 = vmatpush1.bf16.msra.mxu0 %v2747
    %3521 = vmatprep.subr.bf16.mxu0 %v2756
    %3522 = vmatpush1.bf16.msra.mxu0 %v2755
    %3523 = vmatprep.subr.bf16.mxu0 %v2764
    %3524 = vmatpush1.bf16.msra.mxu0 %v2763
    %3525 = vmatprep.mubr.bf16.mxu0 %v294
    %3526 = vmatmul.mubr.bf16.gmra.mrb[0].mxu0 %v293
    %v3527 = vpop.f32.mrb[0].mxu0
    %v3528 = vadd.f32 %v3487, %v3527
    %v3529 = vpop.f32.mrb[0].mxu0
    %v3530 = vadd.f32 %v3489, %v3529
    %v3531 = vpop.f32.mrb[0].mxu0
    %v3532 = vpop.f32.mrb[0].mxu0
    %3533 = vdwg.mxu0
    %3534 = vmatprep.subr.bf16.mxu0 %v2772
    %3535 = vmatpush1.bf16.msra.mxu0 %v2771
    %3536 = vmatprep.subr.bf16.mxu0 %v2780
    %3537 = vmatpush1.bf16.msra.mxu0 %v2779
    %3538 = vmatprep.subr.bf16.mxu0 %v2788
    %3539 = vmatpush1.bf16.msra.mxu0 %v2787
    %3540 = vmatprep.subr.bf16.mxu0 %v2796
    %3541 = vmatpush1.bf16.msra.mxu0 %v2795
    %3542 = vmatprep.subr.bf16.mxu0 %v2804
    %3543 = vmatpush1.bf16.msra.mxu0 %v2803
    %3544 = vmatprep.subr.bf16.mxu0 %v2812
    %3545 = vmatpush1.bf16.msra.mxu0 %v2811
    %3546 = vmatprep.subr.bf16.mxu0 %v2820
    %3547 = vmatpush1.bf16.msra.mxu0 %v2819
    %3548 = vmatprep.subr.bf16.mxu0 %v2828
    %3549 = vmatpush1.bf16.msra.mxu0 %v2827
    %3550 = vmatprep.subr.bf16.mxu0 %v2836
    %3551 = vmatpush1.bf16.msra.mxu0 %v2835
    %3552 = vmatprep.subr.bf16.mxu0 %v2844
    %3553 = vmatpush1.bf16.msra.mxu0 %v2843
    %3554 = vmatprep.subr.bf16.mxu0 %v2852
    %3555 = vmatpush1.bf16.msra.mxu0 %v2851
    %3556 = vmatprep.subr.bf16.mxu0 %v2860
    %3557 = vmatpush1.bf16.msra.mxu0 %v2859
    %3558 = vmatprep.subr.bf16.mxu0 %v2868
    %3559 = vmatpush1.bf16.msra.mxu0 %v2867
    %3560 = vmatprep.subr.bf16.mxu0 %v2876
    %3561 = vmatpush1.bf16.msra.mxu0 %v2875
    %3562 = vmatprep.subr.bf16.mxu0 %v2884
    %3563 = vmatpush1.bf16.msra.mxu0 %v2883
    %3564 = vmatprep.subr.bf16.mxu0 %v2892
    %3565 = vmatpush1.bf16.msra.mxu0 %v2891
    %3566 = vmatprep.mubr.bf16.mxu0 %v296
    %3567 = vmatmul.mubr.bf16.gmra.mrb[0].mxu0 %v295
    %v3568 = vpop.f32.mrb[0].mxu0
    %v3569 = vadd.f32 %v3528, %v3568
    %v3570 = vpop.f32.mrb[0].mxu0
    %v3571 = vadd.f32 %v3530, %v3570
    %v3572 = vpop.f32.mrb[0].mxu0
    %v3573 = vpop.f32.mrb[0].mxu0
    %3574 = vdwg.mxu0
    %3575 = vmatprep.subr.bf16.mxu0 %v2390
    %3576 = vmatpush1.bf16.msra.mxu0 %v2389
    %3577 = vmatprep.subr.bf16.mxu0 %v2398
    %3578 = vmatpush1.bf16.msra.mxu0 %v2397
    %3579 = vmatprep.subr.bf16.mxu0 %v2406
    %3580 = vmatpush1.bf16.msra.mxu0 %v2405
    %3581 = vmatprep.subr.bf16.mxu0 %v2414
    %3582 = vmatpush1.bf16.msra.mxu0 %v2413
    %3583 = vmatprep.subr.bf16.mxu0 %v2422
    %3584 = vmatpush1.bf16.msra.mxu0 %v2421
    %3585 = vmatprep.subr.bf16.mxu0 %v2430
    %3586 = vmatpush1.bf16.msra.mxu0 %v2429
    %3587 = vmatprep.subr.bf16.mxu0 %v2438
    %3588 = vmatpush1.bf16.msra.mxu0 %v2437
    %3589 = vmatprep.subr.bf16.mxu0 %v2446
    %3590 = vmatpush1.bf16.msra.mxu0 %v2445
    %3591 = vmatprep.subr.bf16.mxu0 %v2454
    %3592 = vmatpush1.bf16.msra.mxu0 %v2453
    %3593 = vmatprep.subr.bf16.mxu0 %v2462
    %3594 = vmatpush1.bf16.msra.mxu0 %v2461
    %3595 = vmatprep.subr.bf16.mxu0 %v2470
    %3596 = vmatpush1.bf16.msra.mxu0 %v2469
    %3597 = vmatprep.subr.bf16.mxu0 %v2478
    %3598 = vmatpush1.bf16.msra.mxu0 %v2477
    %3599 = vmatprep.subr.bf16.mxu0 %v2486
    %3600 = vmatpush1.bf16.msra.mxu0 %v2485
    %3601 = vmatprep.subr.bf16.mxu0 %v2494
    %3602 = vmatpush1.bf16.msra.mxu0 %v2493
    %3603 = vmatprep.subr.bf16.mxu0 %v2502
    %3604 = vmatpush1.bf16.msra.mxu0 %v2501
    %3605 = vmatprep.subr.bf16.mxu0 %v2510
    %3606 = vmatpush1.bf16.msra.mxu0 %v2509
    %3607 = vmatprep.mubr.bf16.mxu0 %v290
    %3608 = vmatmul.mubr.bf16.gmra.mrb[0].mxu0 %v289
    %v3609 = vpop.f32.mrb[0].mxu0
    %v3610 = vadd.f32 %v822, %v3609
    %v3611 = vpop.f32.mrb[0].mxu0
    %v3612 = vadd.f32 %v826, %v3611
    %v3613 = vpop.f32.mrb[0].mxu0
    %v3614 = vpop.f32.mrb[0].mxu0
    %3615 = vdwg.mxu0
    %3616 = vmatprep.subr.bf16.mxu0 %v2518
    %3617 = vmatpush1.bf16.msra.mxu0 %v2517
    %3618 = vmatprep.subr.bf16.mxu0 %v2526
    %3619 = vmatpush1.bf16.msra.mxu0 %v2525
    %3620 = vmatprep.subr.bf16.mxu0 %v2534
    %3621 = vmatpush1.bf16.msra.mxu0 %v2533
    %3622 = vmatprep.subr.bf16.mxu0 %v2542
    %3623 = vmatpush1.bf16.msra.mxu0 %v2541
    %3624 = vmatprep.subr.bf16.mxu0 %v2550
    %3625 = vmatpush1.bf16.msra.mxu0 %v2549
    %3626 = vmatprep.subr.bf16.mxu0 %v2558
    %3627 = vmatpush1.bf16.msra.mxu0 %v2557
    %3628 = vmatprep.subr.bf16.mxu0 %v2566
    %3629 = vmatpush1.bf16.msra.mxu0 %v2565
    %3630 = vmatprep.subr.bf16.mxu0 %v2574
    %3631 = vmatpush1.bf16.msra.mxu0 %v2573
    %3632 = vmatprep.subr.bf16.mxu0 %v2582
    %3633 = vmatpush1.bf16.msra.mxu0 %v2581
    %3634 = vmatprep.subr.bf16.mxu0 %v2590
    %3635 = vmatpush1.bf16.msra.mxu0 %v2589
    %3636 = vmatprep.subr.bf16.mxu0 %v2598
    %3637 = vmatpush1.bf16.msra.mxu0 %v2597
    %3638 = vmatprep.subr.bf16.mxu0 %v2606
    %3639 = vmatpush1.bf16.msra.mxu0 %v2605
    %3640 = vmatprep.subr.bf16.mxu0 %v2614
    %3641 = vmatpush1.bf16.msra.mxu0 %v2613
    %3642 = vmatprep.subr.bf16.mxu0 %v2622
    %3643 = vmatpush1.bf16.msra.mxu0 %v2621
    %3644 = vmatprep.subr.bf16.mxu0 %v2630
    %3645 = vmatpush1.bf16.msra.mxu0 %v2629
    %3646 = vmatprep.subr.bf16.mxu0 %v2638
    %3647 = vmatpush1.bf16.msra.mxu0 %v2637
    %3648 = vmatprep.mubr.bf16.mxu0 %v292
    %3649 = vmatmul.mubr.bf16.gmra.mrb[0].mxu0 %v291
    %v3650 = vpop.f32.mrb[0].mxu0
    %v3651 = vadd.f32 %v3610, %v3650
    %v3652 = vpop.f32.mrb[0].mxu0
    %v3653 = vadd.f32 %v3612, %v3652
    %v3654 = vpop.f32.mrb[0].mxu0
    %v3655 = vpop.f32.mrb[0].mxu0
    %3656 = vdwg.mxu0
    %3657 = vmatprep.subr.bf16.mxu0 %v2646
    %3658 = vmatpush1.bf16.msra.mxu0 %v2645
    %3659 = vmatprep.subr.bf16.mxu0 %v2654
    %3660 = vmatpush1.bf16.msra.mxu0 %v2653
    %3661 = vmatprep.subr.bf16.mxu0 %v2662
    %3662 = vmatpush1.bf16.msra.mxu0 %v2661
    %3663 = vmatprep.subr.bf16.mxu0 %v2670
    %3664 = vmatpush1.bf16.msra.mxu0 %v2669
    %3665 = vmatprep.subr.bf16.mxu0 %v2678
    %3666 = vmatpush1.bf16.msra.mxu0 %v2677
    %3667 = vmatprep.subr.bf16.mxu0 %v2686
    %3668 = vmatpush1.bf16.msra.mxu0 %v2685
    %3669 = vmatprep.subr.bf16.mxu0 %v2694
    %3670 = vmatpush1.bf16.msra.mxu0 %v2693
    %3671 = vmatprep.subr.bf16.mxu0 %v2702
    %3672 = vmatpush1.bf16.msra.mxu0 %v2701
    %3673 = vmatprep.subr.bf16.mxu0 %v2710
    %3674 = vmatpush1.bf16.msra.mxu0 %v2709
    %3675 = vmatprep.subr.bf16.mxu0 %v2718
    %3676 = vmatpush1.bf16.msra.mxu0 %v2717
    %3677 = vmatprep.subr.bf16.mxu0 %v2726
    %3678 = vmatpush1.bf16.msra.mxu0 %v2725
    %3679 = vmatprep.subr.bf16.mxu0 %v2734
    %3680 = vmatpush1.bf16.msra.mxu0 %v2733
    %3681 = vmatprep.subr.bf16.mxu0 %v2742
    %3682 = vmatpush1.bf16.msra.mxu0 %v2741
    %3683 = vmatprep.subr.bf16.mxu0 %v2750
    %3684 = vmatpush1.bf16.msra.mxu0 %v2749
    %3685 = vmatprep.subr.bf16.mxu0 %v2758
    %3686 = vmatpush1.bf16.msra.mxu0 %v2757
    %3687 = vmatprep.subr.bf16.mxu0 %v2766
    %3688 = vmatpush1.bf16.msra.mxu0 %v2765
    %3689 = vmatprep.mubr.bf16.mxu0 %v294
    %3690 = vmatmul.mubr.bf16.gmra.mrb[0].mxu0 %v293
    %v3691 = vpop.f32.mrb[0].mxu0
    %v3692 = vadd.f32 %v3651, %v3691
    %v3693 = vpop.f32.mrb[0].mxu0
    %v3694 = vadd.f32 %v3653, %v3693
    %v3695 = vpop.f32.mrb[0].mxu0
    %v3696 = vpop.f32.mrb[0].mxu0
    %3697 = vdwg.mxu0
    %3698 = vmatprep.subr.bf16.mxu0 %v2774
    %3699 = vmatpush1.bf16.msra.mxu0 %v2773
    %3700 = vmatprep.subr.bf16.mxu0 %v2782
    %3701 = vmatpush1.bf16.msra.mxu0 %v2781
    %3702 = vmatprep.subr.bf16.mxu0 %v2790
    %3703 = vmatpush1.bf16.msra.mxu0 %v2789
    %3704 = vmatprep.subr.bf16.mxu0 %v2798
    %3705 = vmatpush1.bf16.msra.mxu0 %v2797
    %3706 = vmatprep.subr.bf16.mxu0 %v2806
    %3707 = vmatpush1.bf16.msra.mxu0 %v2805
    %3708 = vmatprep.subr.bf16.mxu0 %v2814
    %3709 = vmatpush1.bf16.msra.mxu0 %v2813
    %3710 = vmatprep.subr.bf16.mxu0 %v2822
    %3711 = vmatpush1.bf16.msra.mxu0 %v2821
    %3712 = vmatprep.subr.bf16.mxu0 %v2830
    %3713 = vmatpush1.bf16.msra.mxu0 %v2829
    %3714 = vmatprep.subr.bf16.mxu0 %v2838
    %3715 = vmatpush1.bf16.msra.mxu0 %v2837
    %3716 = vmatprep.subr.bf16.mxu0 %v2846
    %3717 = vmatpush1.bf16.msra.mxu0 %v2845
    %3718 = vmatprep.subr.bf16.mxu0 %v2854
    %3719 = vmatpush1.bf16.msra.mxu0 %v2853
    %3720 = vmatprep.subr.bf16.mxu0 %v2862
    %3721 = vmatpush1.bf16.msra.mxu0 %v2861
    %3722 = vmatprep.subr.bf16.mxu0 %v2870
    %3723 = vmatpush1.bf16.msra.mxu0 %v2869
    %3724 = vmatprep.subr.bf16.mxu0 %v2878
    %3725 = vmatpush1.bf16.msra.mxu0 %v2877
    %3726 = vmatprep.subr.bf16.mxu0 %v2886
    %3727 = vmatpush1.bf16.msra.mxu0 %v2885
    %3728 = vmatprep.subr.bf16.mxu0 %v2894
    %3729 = vmatpush1.bf16.msra.mxu0 %v2893
    %3730 = vmatprep.mubr.bf16.mxu0 %v296
    %3731 = vmatmul.mubr.bf16.gmra.mrb[0].mxu0 %v295
    %v3732 = vpop.f32.mrb[0].mxu0
    %v3733 = vadd.f32 %v3692, %v3732
    %v3734 = vpop.f32.mrb[0].mxu0
    %v3735 = vadd.f32 %v3694, %v3734
    %v3736 = vpop.f32.mrb[0].mxu0
    %v3737 = vpop.f32.mrb[0].mxu0
    %3738 = vdwg.mxu0
    %3739 = vmatprep.subr.bf16.mxu0 %v2392
    %3740 = vmatpush1.bf16.msra.mxu0 %v2391
    %3741 = vmatprep.subr.bf16.mxu0 %v2400
    %3742 = vmatpush1.bf16.msra.mxu0 %v2399
    %3743 = vmatprep.subr.bf16.mxu0 %v2408
    %3744 = vmatpush1.bf16.msra.mxu0 %v2407
    %3745 = vmatprep.subr.bf16.mxu0 %v2416
    %3746 = vmatpush1.bf16.msra.mxu0 %v2415
    %3747 = vmatprep.subr.bf16.mxu0 %v2424
    %3748 = vmatpush1.bf16.msra.mxu0 %v2423
    %3749 = vmatprep.subr.bf16.mxu0 %v2432
    %3750 = vmatpush1.bf16.msra.mxu0 %v2431
    %3751 = vmatprep.subr.bf16.mxu0 %v2440
    %3752 = vmatpush1.bf16.msra.mxu0 %v2439
    %3753 = vmatprep.subr.bf16.mxu0 %v2448
    %3754 = vmatpush1.bf16.msra.mxu0 %v2447
    %3755 = vmatprep.subr.bf16.mxu0 %v2456
    %3756 = vmatpush1.bf16.msra.mxu0 %v2455
    %3757 = vmatprep.subr.bf16.mxu0 %v2464
    %3758 = vmatpush1.bf16.msra.mxu0 %v2463
    %3759 = vmatprep.subr.bf16.mxu0 %v2472
    %3760 = vmatpush1.bf16.msra.mxu0 %v2471
    %3761 = vmatprep.subr.bf16.mxu0 %v2480
    %3762 = vmatpush1.bf16.msra.mxu0 %v2479
    %3763 = vmatprep.subr.bf16.mxu0 %v2488
    %3764 = vmatpush1.bf16.msra.mxu0 %v2487
    %3765 = vmatprep.subr.bf16.mxu0 %v2496
    %3766 = vmatpush1.bf16.msra.mxu0 %v2495
    %3767 = vmatprep.subr.bf16.mxu0 %v2504
    %3768 = vmatpush1.bf16.msra.mxu0 %v2503
    %3769 = vmatprep.subr.bf16.mxu0 %v2512
    %3770 = vmatpush1.bf16.msra.mxu0 %v2511
    %3771 = vmatprep.mubr.bf16.mxu0 %v290
    %3772 = vmatmul.mubr.bf16.gmra.mrb[0].mxu0 %v289
    %v3773 = vpop.f32.mrb[0].mxu0
    %v3774 = vadd.f32 %v830, %v3773
    %v3775 = vpop.f32.mrb[0].mxu0
    %v3776 = vadd.f32 %v834, %v3775
    %v3777 = vpop.f32.mrb[0].mxu0
    %v3778 = vpop.f32.mrb[0].mxu0
    %3779 = vdwg.mxu0
    %3780 = vmatprep.subr.bf16.mxu0 %v2520
    %3781 = vmatpush1.bf16.msra.mxu0 %v2519
    %3782 = vmatprep.subr.bf16.mxu0 %v2528
    %3783 = vmatpush1.bf16.msra.mxu0 %v2527
    %3784 = vmatprep.subr.bf16.mxu0 %v2536
    %3785 = vmatpush1.bf16.msra.mxu0 %v2535
    %3786 = vmatprep.subr.bf16.mxu0 %v2544
    %3787 = vmatpush1.bf16.msra.mxu0 %v2543
    %3788 = vmatprep.subr.bf16.mxu0 %v2552
    %3789 = vmatpush1.bf16.msra.mxu0 %v2551
    %3790 = vmatprep.subr.bf16.mxu0 %v2560
    %3791 = vmatpush1.bf16.msra.mxu0 %v2559
    %3792 = vmatprep.subr.bf16.mxu0 %v2568
    %3793 = vmatpush1.bf16.msra.mxu0 %v2567
    %3794 = vmatprep.subr.bf16.mxu0 %v2576
    %3795 = vmatpush1.bf16.msra.mxu0 %v2575
    %3796 = vmatprep.subr.bf16.mxu0 %v2584
    %3797 = vmatpush1.bf16.msra.mxu0 %v2583
    %3798 = vmatprep.subr.bf16.mxu0 %v2592
    %3799 = vmatpush1.bf16.msra.mxu0 %v2591
    %3800 = vmatprep.subr.bf16.mxu0 %v2600
    %3801 = vmatpush1.bf16.msra.mxu0 %v2599
    %3802 = vmatprep.subr.bf16.mxu0 %v2608
    %3803 = vmatpush1.bf16.msra.mxu0 %v2607
    %3804 = vmatprep.subr.bf16.mxu0 %v2616
    %3805 = vmatpush1.bf16.msra.mxu0 %v2615
    %3806 = vmatprep.subr.bf16.mxu0 %v2624
    %3807 = vmatpush1.bf16.msra.mxu0 %v2623
    %3808 = vmatprep.subr.bf16.mxu0 %v2632
    %3809 = vmatpush1.bf16.msra.mxu0 %v2631
    %3810 = vmatprep.subr.bf16.mxu0 %v2640
    %3811 = vmatpush1.bf16.msra.mxu0 %v2639
    %3812 = vmatprep.mubr.bf16.mxu0 %v292
    %3813 = vmatmul.mubr.bf16.gmra.mrb[0].mxu0 %v291
    %v3814 = vpop.f32.mrb[0].mxu0
    %v3815 = vadd.f32 %v3774, %v3814
    %v3816 = vpop.f32.mrb[0].mxu0
    %v3817 = vadd.f32 %v3776, %v3816
    %v3818 = vpop.f32.mrb[0].mxu0
    %v3819 = vpop.f32.mrb[0].mxu0
    %3820 = vdwg.mxu0
    %3821 = vmatprep.subr.bf16.mxu0 %v2648
    %3822 = vmatpush1.bf16.msra.mxu0 %v2647
    %3823 = vmatprep.subr.bf16.mxu0 %v2656
    %3824 = vmatpush1.bf16.msra.mxu0 %v2655
    %3825 = vmatprep.subr.bf16.mxu0 %v2664
    %3826 = vmatpush1.bf16.msra.mxu0 %v2663
    %3827 = vmatprep.subr.bf16.mxu0 %v2672
    %3828 = vmatpush1.bf16.msra.mxu0 %v2671
    %3829 = vmatprep.subr.bf16.mxu0 %v2680
    %3830 = vmatpush1.bf16.msra.mxu0 %v2679
    %3831 = vmatprep.subr.bf16.mxu0 %v2688
    %3832 = vmatpush1.bf16.msra.mxu0 %v2687
    %3833 = vmatprep.subr.bf16.mxu0 %v2696
    %3834 = vmatpush1.bf16.msra.mxu0 %v2695
    %3835 = vmatprep.subr.bf16.mxu0 %v2704
    %3836 = vmatpush1.bf16.msra.mxu0 %v2703
    %3837 = vmatprep.subr.bf16.mxu0 %v2712
    %3838 = vmatpush1.bf16.msra.mxu0 %v2711
    %3839 = vmatprep.subr.bf16.mxu0 %v2720
    %3840 = vmatpush1.bf16.msra.mxu0 %v2719
    %3841 = vmatprep.subr.bf16.mxu0 %v2728
    %3842 = vmatpush1.bf16.msra.mxu0 %v2727
    %3843 = vmatprep.subr.bf16.mxu0 %v2736
    %3844 = vmatpush1.bf16.msra.mxu0 %v2735
    %3845 = vmatprep.subr.bf16.mxu0 %v2744
    %3846 = vmatpush1.bf16.msra.mxu0 %v2743
    %3847 = vmatprep.subr.bf16.mxu0 %v2752
    %3848 = vmatpush1.bf16.msra.mxu0 %v2751
    %3849 = vmatprep.subr.bf16.mxu0 %v2760
    %3850 = vmatpush1.bf16.msra.mxu0 %v2759
    %3851 = vmatprep.subr.bf16.mxu0 %v2768
    %3852 = vmatpush1.bf16.msra.mxu0 %v2767
    %3853 = vmatprep.mubr.bf16.mxu0 %v294
    %3854 = vmatmul.mubr.bf16.gmra.mrb[0].mxu0 %v293
    %v3855 = vpop.f32.mrb[0].mxu0
    %v3856 = vadd.f32 %v3815, %v3855
    %v3857 = vpop.f32.mrb[0].mxu0
    %v3858 = vadd.f32 %v3817, %v3857
    %v3859 = vpop.f32.mrb[0].mxu0
    %v3860 = vpop.f32.mrb[0].mxu0
    %3861 = vdwg.mxu0
    %3862 = vmatprep.subr.bf16.mxu0 %v2776
    %3863 = vmatpush1.bf16.msra.mxu0 %v2775
    %3864 = vmatprep.subr.bf16.mxu0 %v2784
    %3865 = vmatpush1.bf16.msra.mxu0 %v2783
    %3866 = vmatprep.subr.bf16.mxu0 %v2792
    %3867 = vmatpush1.bf16.msra.mxu0 %v2791
    %3868 = vmatprep.subr.bf16.mxu0 %v2800
    %3869 = vmatpush1.bf16.msra.mxu0 %v2799
    %3870 = vmatprep.subr.bf16.mxu0 %v2808
    %3871 = vmatpush1.bf16.msra.mxu0 %v2807
    %3872 = vmatprep.subr.bf16.mxu0 %v2816
    %3873 = vmatpush1.bf16.msra.mxu0 %v2815
    %3874 = vmatprep.subr.bf16.mxu0 %v2824
    %3875 = vmatpush1.bf16.msra.mxu0 %v2823
    %3876 = vmatprep.subr.bf16.mxu0 %v2832
    %3877 = vmatpush1.bf16.msra.mxu0 %v2831
    %3878 = vmatprep.subr.bf16.mxu0 %v2840
    %3879 = vmatpush1.bf16.msra.mxu0 %v2839
    %3880 = vmatprep.subr.bf16.mxu0 %v2848
    %3881 = vmatpush1.bf16.msra.mxu0 %v2847
    %3882 = vmatprep.subr.bf16.mxu0 %v2856
    %3883 = vmatpush1.bf16.msra.mxu0 %v2855
    %3884 = vmatprep.subr.bf16.mxu0 %v2864
    %3885 = vmatpush1.bf16.msra.mxu0 %v2863
    %3886 = vmatprep.subr.bf16.mxu0 %v2872
    %3887 = vmatpush1.bf16.msra.mxu0 %v2871
    %3888 = vmatprep.subr.bf16.mxu0 %v2880
    %3889 = vmatpush1.bf16.msra.mxu0 %v2879
    %3890 = vmatprep.subr.bf16.mxu0 %v2888
    %3891 = vmatpush1.bf16.msra.mxu0 %v2887
    %3892 = vmatprep.subr.bf16.mxu0 %v2896
    %3893 = vmatpush1.bf16.msra.mxu0 %v2895
    %3894 = vmatprep.mubr.bf16.mxu0 %v296
    %3895 = vmatmul.mubr.bf16.gmra.mrb[0].mxu0 %v295
    %v3896 = vpop.f32.mrb[0].mxu0
    %v3897 = vadd.f32 %v3856, %v3896
    %v3898 = vpop.f32.mrb[0].mxu0
    %v3899 = vadd.f32 %v3858, %v3898
    %v3900 = vpop.f32.mrb[0].mxu0
    %v3901 = vpop.f32.mrb[0].mxu0
    %3902 = vdwg.mxu0
    %3903 = vmatprep.subr.bf16.mxu0 %v2394
    %3904 = vmatpush1.bf16.msra.mxu0 %v2393
    %3905 = vmatprep.subr.bf16.mxu0 %v2402
    %3906 = vmatpush1.bf16.msra.mxu0 %v2401
    %3907 = vmatprep.subr.bf16.mxu0 %v2410
    %3908 = vmatpush1.bf16.msra.mxu0 %v2409
    %3909 = vmatprep.subr.bf16.mxu0 %v2418
    %3910 = vmatpush1.bf16.msra.mxu0 %v2417
    %3911 = vmatprep.subr.bf16.mxu0 %v2426
    %3912 = vmatpush1.bf16.msra.mxu0 %v2425
    %3913 = vmatprep.subr.bf16.mxu0 %v2434
    %3914 = vmatpush1.bf16.msra.mxu0 %v2433
    %3915 = vmatprep.subr.bf16.mxu0 %v2442
    %3916 = vmatpush1.bf16.msra.mxu0 %v2441
    %3917 = vmatprep.subr.bf16.mxu0 %v2450
    %3918 = vmatpush1.bf16.msra.mxu0 %v2449
    %3919 = vmatprep.subr.bf16.mxu0 %v2458
    %3920 = vmatpush1.bf16.msra.mxu0 %v2457
    %3921 = vmatprep.subr.bf16.mxu0 %v2466
    %3922 = vmatpush1.bf16.msra.mxu0 %v2465
    %3923 = vmatprep.subr.bf16.mxu0 %v2474
    %3924 = vmatpush1.bf16.msra.mxu0 %v2473
    %3925 = vmatprep.subr.bf16.mxu0 %v2482
    %3926 = vmatpush1.bf16.msra.mxu0 %v2481
    %3927 = vmatprep.subr.bf16.mxu0 %v2490
    %3928 = vmatpush1.bf16.msra.mxu0 %v2489
    %3929 = vmatprep.subr.bf16.mxu0 %v2498
    %3930 = vmatpush1.bf16.msra.mxu0 %v2497
    %3931 = vmatprep.subr.bf16.mxu0 %v2506
    %3932 = vmatpush1.bf16.msra.mxu0 %v2505
    %3933 = vmatprep.subr.bf16.mxu0 %v2514
    %3934 = vmatpush1.bf16.msra.mxu0 %v2513
    %3935 = vmatprep.mubr.bf16.mxu0 %v290
    %3936 = vmatmul.mubr.bf16.gmra.mrb[0].mxu0 %v289
    %v3937 = vpop.f32.mrb[0].mxu0
    %v3938 = vadd.f32 %v838, %v3937
    %v3939 = vpop.f32.mrb[0].mxu0
    %v3940 = vadd.f32 %v842, %v3939
    %v3941 = vpop.f32.mrb[0].mxu0
    %v3942 = vpop.f32.mrb[0].mxu0
    %3943 = vdwg.mxu0
    %3944 = vmatprep.subr.bf16.mxu0 %v2522
    %3945 = vmatpush1.bf16.msra.mxu0 %v2521
    %3946 = vmatprep.subr.bf16.mxu0 %v2530
    %3947 = vmatpush1.bf16.msra.mxu0 %v2529
    %3948 = vmatprep.subr.bf16.mxu0 %v2538
    %3949 = vmatpush1.bf16.msra.mxu0 %v2537
    %3950 = vmatprep.subr.bf16.mxu0 %v2546
    %3951 = vmatpush1.bf16.msra.mxu0 %v2545
    %3952 = vmatprep.subr.bf16.mxu0 %v2554
    %3953 = vmatpush1.bf16.msra.mxu0 %v2553
    %3954 = vmatprep.subr.bf16.mxu0 %v2562
    %3955 = vmatpush1.bf16.msra.mxu0 %v2561
    %3956 = vmatprep.subr.bf16.mxu0 %v2570
    %3957 = vmatpush1.bf16.msra.mxu0 %v2569
    %3958 = vmatprep.subr.bf16.mxu0 %v2578
    %3959 = vmatpush1.bf16.msra.mxu0 %v2577
    %3960 = vmatprep.subr.bf16.mxu0 %v2586
    %3961 = vmatpush1.bf16.msra.mxu0 %v2585
    %3962 = vmatprep.subr.bf16.mxu0 %v2594
    %3963 = vmatpush1.bf16.msra.mxu0 %v2593
    %3964 = vmatprep.subr.bf16.mxu0 %v2602
    %3965 = vmatpush1.bf16.msra.mxu0 %v2601
    %3966 = vmatprep.subr.bf16.mxu0 %v2610
    %3967 = vmatpush1.bf16.msra.mxu0 %v2609
    %3968 = vmatprep.subr.bf16.mxu0 %v2618
    %3969 = vmatpush1.bf16.msra.mxu0 %v2617
    %3970 = vmatprep.subr.bf16.mxu0 %v2626
    %3971 = vmatpush1.bf16.msra.mxu0 %v2625
    %3972 = vmatprep.subr.bf16.mxu0 %v2634
    %3973 = vmatpush1.bf16.msra.mxu0 %v2633
    %3974 = vmatprep.subr.bf16.mxu0 %v2642
    %3975 = vmatpush1.bf16.msra.mxu0 %v2641
    %3976 = vmatprep.mubr.bf16.mxu0 %v292
    %3977 = vmatmul.mubr.bf16.gmra.mrb[0].mxu0 %v291
    %v3978 = vpop.f32.mrb[0].mxu0
    %v3979 = vadd.f32 %v3938, %v3978
    %v3980 = vpop.f32.mrb[0].mxu0
    %v3981 = vadd.f32 %v3940, %v3980
    %v3982 = vpop.f32.mrb[0].mxu0
    %v3983 = vpop.f32.mrb[0].mxu0
    %3984 = vdwg.mxu0
    %3985 = vmatprep.subr.bf16.mxu0 %v2650
    %3986 = vmatpush1.bf16.msra.mxu0 %v2649
    %3987 = vmatprep.subr.bf16.mxu0 %v2658
    %3988 = vmatpush1.bf16.msra.mxu0 %v2657
    %3989 = vmatprep.subr.bf16.mxu0 %v2666
    %3990 = vmatpush1.bf16.msra.mxu0 %v2665
    %3991 = vmatprep.subr.bf16.mxu0 %v2674
    %3992 = vmatpush1.bf16.msra.mxu0 %v2673
    %3993 = vmatprep.subr.bf16.mxu0 %v2682
    %3994 = vmatpush1.bf16.msra.mxu0 %v2681
    %3995 = vmatprep.subr.bf16.mxu0 %v2690
    %3996 = vmatpush1.bf16.msra.mxu0 %v2689
    %3997 = vmatprep.subr.bf16.mxu0 %v2698
    %3998 = vmatpush1.bf16.msra.mxu0 %v2697
    %3999 = vmatprep.subr.bf16.mxu0 %v2706
    %4000 = vmatpush1.bf16.msra.mxu0 %v2705
    %4001 = vmatprep.subr.bf16.mxu0 %v2714
    %4002 = vmatpush1.bf16.msra.mxu0 %v2713
    %4003 = vmatprep.subr.bf16.mxu0 %v2722
    %4004 = vmatpush1.bf16.msra.mxu0 %v2721
    %4005 = vmatprep.subr.bf16.mxu0 %v2730
    %4006 = vmatpush1.bf16.msra.mxu0 %v2729
    %4007 = vmatprep.subr.bf16.mxu0 %v2738
    %4008 = vmatpush1.bf16.msra.mxu0 %v2737
    %4009 = vmatprep.subr.bf16.mxu0 %v2746
    %4010 = vmatpush1.bf16.msra.mxu0 %v2745
    %4011 = vmatprep.subr.bf16.mxu0 %v2754
    %4012 = vmatpush1.bf16.msra.mxu0 %v2753
    %4013 = vmatprep.subr.bf16.mxu0 %v2762
    %4014 = vmatpush1.bf16.msra.mxu0 %v2761
    %4015 = vmatprep.subr.bf16.mxu0 %v2770
    %4016 = vmatpush1.bf16.msra.mxu0 %v2769
    %4017 = vmatprep.mubr.bf16.mxu0 %v294
    %4018 = vmatmul.mubr.bf16.gmra.mrb[0].mxu0 %v293
    %v4019 = vpop.f32.mrb[0].mxu0
    %v4020 = vadd.f32 %v3979, %v4019
    %v4021 = vpop.f32.mrb[0].mxu0
    %v4022 = vadd.f32 %v3981, %v4021
    %v4023 = vpop.f32.mrb[0].mxu0
    %v4024 = vpop.f32.mrb[0].mxu0
    %4025 = vdwg.mxu0
    %4026 = vmatprep.subr.bf16.mxu0 %v2778
    %4027 = vmatpush1.bf16.msra.mxu0 %v2777
    %4028 = vmatprep.subr.bf16.mxu0 %v2786
    %4029 = vmatpush1.bf16.msra.mxu0 %v2785
    %4030 = vmatprep.subr.bf16.mxu0 %v2794
    %4031 = vmatpush1.bf16.msra.mxu0 %v2793
    %4032 = vmatprep.subr.bf16.mxu0 %v2802
    %4033 = vmatpush1.bf16.msra.mxu0 %v2801
    %4034 = vmatprep.subr.bf16.mxu0 %v2810
    %4035 = vmatpush1.bf16.msra.mxu0 %v2809
    %4036 = vmatprep.subr.bf16.mxu0 %v2818
    %4037 = vmatpush1.bf16.msra.mxu0 %v2817
    %4038 = vmatprep.subr.bf16.mxu0 %v2826
    %4039 = vmatpush1.bf16.msra.mxu0 %v2825
    %4040 = vmatprep.subr.bf16.mxu0 %v2834
    %4041 = vmatpush1.bf16.msra.mxu0 %v2833
    %4042 = vmatprep.subr.bf16.mxu0 %v2842
    %4043 = vmatpush1.bf16.msra.mxu0 %v2841
    %4044 = vmatprep.subr.bf16.mxu0 %v2850
    %4045 = vmatpush1.bf16.msra.mxu0 %v2849
    %4046 = vmatprep.subr.bf16.mxu0 %v2858
    %4047 = vmatpush1.bf16.msra.mxu0 %v2857
    %4048 = vmatprep.subr.bf16.mxu0 %v2866
    %4049 = vmatpush1.bf16.msra.mxu0 %v2865
    %4050 = vmatprep.subr.bf16.mxu0 %v2874
    %4051 = vmatpush1.bf16.msra.mxu0 %v2873
    %4052 = vmatprep.subr.bf16.mxu0 %v2882
    %4053 = vmatpush1.bf16.msra.mxu0 %v2881
    %4054 = vmatprep.subr.bf16.mxu0 %v2890
    %4055 = vmatpush1.bf16.msra.mxu0 %v2889
    %4056 = vmatprep.subr.bf16.mxu0 %v2898
    %4057 = vmatpush1.bf16.msra.mxu0 %v2897
    %4058 = vmatprep.mubr.bf16.mxu0 %v296
    %4059 = vmatmul.mubr.bf16.gmra.mrb[0].mxu0 %v295
    %v4060 = vpop.f32.mrb[0].mxu0
    %v4061 = vadd.f32 %v4020, %v4060
    %v4062 = vpop.f32.mrb[0].mxu0
    %v4063 = vadd.f32 %v4022, %v4062
    %v4064 = vpop.f32.mrb[0].mxu0
    %v4065 = vpop.f32.mrb[0].mxu0
    %4066 = vdwg.mxu0
    %vm4067 = vcmp.ge.f32.partialorder %v3569, 0.0
    %vm4068 = vcmp.ge.f32.partialorder %v3571, 0.0
    %vm4069 = vcmp.ge.f32.partialorder %v3733, 0.0
    %vm4070 = vcmp.ge.f32.partialorder %v3735, 0.0
    %vm4071 = vcmp.ge.f32.partialorder %v3897, 0.0
    %vm4072 = vcmp.ge.f32.partialorder %v3899, 0.0
    %vm4073 = vcmp.ge.f32.partialorder %v4061, 0.0
    %vm4074 = vcmp.ge.f32.partialorder %v4063, 0.0
    %v4075 = vmul.f32 %v3569, 0.2
    %v4076 = vmul.f32 %v3571, 0.2
    %v4077 = vmul.f32 %v3733, 0.2
    %v4078 = vmul.f32 %v3735, 0.2
    %v4079 = vmul.f32 %v3897, 0.2
    %v4080 = vmul.f32 %v3899, 0.2
    %v4081 = vmul.f32 %v4061, 0.2
    %v4082 = vmul.f32 %v4063, 0.2
    %v4083 = vsel %vm4067, %v3569, %v4075
    %v4084 = vsel %vm4068, %v3571, %v4076
    %v4085 = vsel %vm4069, %v3733, %v4077
    %v4086 = vsel %vm4070, %v3735, %v4078
    %v4087 = vsel %vm4071, %v3897, %v4079
    %v4088 = vsel %vm4072, %v3899, %v4080
    %v4089 = vsel %vm4073, %v4061, %v4081
    %v4090 = vsel %vm4074, %v4063, %v4082
    %v4091 = vld [vmem:[#allocation6] sm:$0xff]
    %v4093 = vlaneseq
    %v4094 = vshrl.u32 %v4093, 7
    %v4095 = vsub.s32 0, %v4094
    %v4096 = vrot.slane %v4091, %v4095
    %v4097 = vlaneseq
    %v4098 = vshrl.u32 %v4097, 7
    %v4099 = vsub.s32 1, %v4098
    %v4100 = vrot.slane %v4091, %v4099
    %v4101 = vlaneseq
    %v4102 = vshrl.u32 %v4101, 7
    %v4103 = vsub.s32 2, %v4102
    %v4104 = vrot.slane %v4091, %v4103
    %v4105 = vlaneseq
    %v4106 = vshrl.u32 %v4105, 7
    %v4107 = vsub.s32 3, %v4106
    %v4108 = vrot.slane %v4091, %v4107
    %v4109 = vlaneseq
    %v4110 = vshrl.u32 %v4109, 7
    %v4111 = vsub.s32 4, %v4110
    %v4112 = vrot.slane %v4091, %v4111
    %v4113 = vlaneseq
    %v4114 = vshrl.u32 %v4113, 7
    %v4115 = vsub.s32 5, %v4114
    %v4116 = vrot.slane %v4091, %v4115
    %v4117 = vlaneseq
    %v4118 = vshrl.u32 %v4117, 7
    %v4119 = vsub.s32 6, %v4118
    %v4120 = vrot.slane %v4091, %v4119
    %v4121 = vlaneseq
    %v4122 = vshrl.u32 %v4121, 7
    %v4123 = vsub.s32 7, %v4122
    %v4124 = vrot.slane %v4091, %v4123
    %v4133 = vmul.f32 %v4083, %v4096
    %v4134 = vmul.f32 %v4084, %v4100
    %v4135 = vmul.f32 %v4085, %v4104
    %v4136 = vmul.f32 %v4086, %v4108
    %v4137 = vmul.f32 %v4087, %v4112
    %v4138 = vmul.f32 %v4088, %v4116
    %v4139 = vmul.f32 %v4089, %v4120
    %v4140 = vmul.f32 %v4090, %v4124
    %v4141 = vld [vmem:[#allocation7] sm:$0xff]
    %v4143 = vlaneseq
    %v4144 = vshrl.u32 %v4143, 7
    %v4145 = vsub.s32 0, %v4144
    %v4146 = vrot.slane %v4141, %v4145
    %v4147 = vlaneseq
    %v4148 = vshrl.u32 %v4147, 7
    %v4149 = vsub.s32 1, %v4148
    %v4150 = vrot.slane %v4141, %v4149
    %v4151 = vlaneseq
    %v4152 = vshrl.u32 %v4151, 7
    %v4153 = vsub.s32 2, %v4152
    %v4154 = vrot.slane %v4141, %v4153
    %v4155 = vlaneseq
    %v4156 = vshrl.u32 %v4155, 7
    %v4157 = vsub.s32 3, %v4156
    %v4158 = vrot.slane %v4141, %v4157
    %v4159 = vlaneseq
    %v4160 = vshrl.u32 %v4159, 7
    %v4161 = vsub.s32 4, %v4160
    %v4162 = vrot.slane %v4141, %v4161
    %v4163 = vlaneseq
    %v4164 = vshrl.u32 %v4163, 7
    %v4165 = vsub.s32 5, %v4164
    %v4166 = vrot.slane %v4141, %v4165
    %v4167 = vlaneseq
    %v4168 = vshrl.u32 %v4167, 7
    %v4169 = vsub.s32 6, %v4168
    %v4170 = vrot.slane %v4141, %v4169
    %v4171 = vlaneseq
    %v4172 = vshrl.u32 %v4171, 7
    %v4173 = vsub.s32 7, %v4172
    %v4174 = vrot.slane %v4141, %v4173
    %v4183 = vadd.f32 %v4133, %v4146
    %v4184 = vadd.f32 %v4134, %v4150
    %v4185 = vadd.f32 %v4135, %v4154
    %v4186 = vadd.f32 %v4136, %v4158
    %v4187 = vadd.f32 %v4137, %v4162
    %v4188 = vadd.f32 %v4138, %v4166
    %v4189 = vadd.f32 %v4139, %v4170
    %v4190 = vadd.f32 %v4140, %v4174
    %v4191 = vpack.c.bf16 %v4183, %v4183
    %v4192 = vpack.c.bf16 %v4184, %v4184
    %v4193 = vpack.c.bf16 %v4185, %v4185
    %v4194 = vpack.c.bf16 %v4186, %v4186
    %v4195 = vpack.c.bf16 %v4187, %v4187
    %v4196 = vpack.c.bf16 %v4188, %v4188
    %v4197 = vpack.c.bf16 %v4189, %v4189
    %v4198 = vpack.c.bf16 %v4190, %v4190
    %v4199 = vld [vmem:[#allocation9] sm:$0xff]
    %v4200 = vld [vmem:[#allocation9 + $0x8] sm:$0xff]
    %v4201 = vld [vmem:[#allocation9 + $0x10] sm:$0xff]
    %v4202 = vld [vmem:[#allocation9 + $0x18] sm:$0xff]
    %v4203 = vld [vmem:[#allocation9 + $0x20] sm:$0xff]
    %v4204 = vld [vmem:[#allocation9 + $0x28] sm:$0xff]
    %v4205 = vld [vmem:[#allocation9 + $0x30] sm:$0xff]
    %v4206 = vld [vmem:[#allocation9 + $0x38] sm:$0xff]
    %v4207 = vld [vmem:[#allocation9 + $0x40] sm:$0xff]
    %v4208 = vld [vmem:[#allocation9 + $0x48] sm:$0xff]
    %v4209 = vld [vmem:[#allocation9 + $0x50] sm:$0xff]
    %v4210 = vld [vmem:[#allocation9 + $0x58] sm:$0xff]
    %v4211 = vld [vmem:[#allocation9 + $0x60] sm:$0xff]
    %v4212 = vld [vmem:[#allocation9 + $0x68] sm:$0xff]
    %v4213 = vld [vmem:[#allocation9 + $0x70] sm:$0xff]
    %v4214 = vld [vmem:[#allocation9 + $0x78] sm:$0xff]
    %v4215 = vld [vmem:[#allocation9 + $0x80] sm:$0xff]
    %v4216 = vld [vmem:[#allocation9 + $0x88] sm:$0xff]
    %v4217 = vld [vmem:[#allocation9 + $0x90] sm:$0xff]
    %v4218 = vld [vmem:[#allocation9 + $0x98] sm:$0xff]
    %v4219 = vld [vmem:[#allocation9 + $0xa0] sm:$0xff]
    %v4220 = vld [vmem:[#allocation9 + $0xa8] sm:$0xff]
    %v4221 = vld [vmem:[#allocation9 + $0xb0] sm:$0xff]
    %v4222 = vld [vmem:[#allocation9 + $0xb8] sm:$0xff]
    %v4223 = vld [vmem:[#allocation9 + $0xc0] sm:$0xff]
    %v4224 = vld [vmem:[#allocation9 + $0xc8] sm:$0xff]
    %v4225 = vld [vmem:[#allocation9 + $0xd0] sm:$0xff]
    %v4226 = vld [vmem:[#allocation9 + $0xd8] sm:$0xff]
    %v4227 = vld [vmem:[#allocation9 + $0xe0] sm:$0xff]
    %v4228 = vld [vmem:[#allocation9 + $0xe8] sm:$0xff]
    %v4229 = vld [vmem:[#allocation9 + $0xf0] sm:$0xff]
    %v4230 = vld [vmem:[#allocation9 + $0xf8] sm:$0xff]
    %v4231 = vld [vmem:[#allocation9 + $0x100] sm:$0xff]
    %v4232 = vld [vmem:[#allocation9 + $0x108] sm:$0xff]
    %v4233 = vld [vmem:[#allocation9 + $0x110] sm:$0xff]
    %v4234 = vld [vmem:[#allocation9 + $0x118] sm:$0xff]
    %v4235 = vld [vmem:[#allocation9 + $0x120] sm:$0xff]
    %v4236 = vld [vmem:[#allocation9 + $0x128] sm:$0xff]
    %v4237 = vld [vmem:[#allocation9 + $0x130] sm:$0xff]
    %v4238 = vld [vmem:[#allocation9 + $0x138] sm:$0xff]
    %v4239 = vld [vmem:[#allocation9 + $0x140] sm:$0xff]
    %v4240 = vld [vmem:[#allocation9 + $0x148] sm:$0xff]
    %v4241 = vld [vmem:[#allocation9 + $0x150] sm:$0xff]
    %v4242 = vld [vmem:[#allocation9 + $0x158] sm:$0xff]
    %v4243 = vld [vmem:[#allocation9 + $0x160] sm:$0xff]
    %v4244 = vld [vmem:[#allocation9 + $0x168] sm:$0xff]
    %v4245 = vld [vmem:[#allocation9 + $0x170] sm:$0xff]
    %v4246 = vld [vmem:[#allocation9 + $0x178] sm:$0xff]
    %v4247 = vld [vmem:[#allocation9 + $0x180] sm:$0xff]
    %v4248 = vld [vmem:[#allocation9 + $0x188] sm:$0xff]
    %v4249 = vld [vmem:[#allocation9 + $0x190] sm:$0xff]
    %v4250 = vld [vmem:[#allocation9 + $0x198] sm:$0xff]
    %v4251 = vld [vmem:[#allocation9 + $0x1a0] sm:$0xff]
    %v4252 = vld [vmem:[#allocation9 + $0x1a8] sm:$0xff]
    %v4253 = vld [vmem:[#allocation9 + $0x1b0] sm:$0xff]
    %v4254 = vld [vmem:[#allocation9 + $0x1b8] sm:$0xff]
    %v4255 = vld [vmem:[#allocation9 + $0x1c0] sm:$0xff]
    %v4256 = vld [vmem:[#allocation9 + $0x1c8] sm:$0xff]
    %v4257 = vld [vmem:[#allocation9 + $0x1d0] sm:$0xff]
    %v4258 = vld [vmem:[#allocation9 + $0x1d8] sm:$0xff]
    %v4259 = vld [vmem:[#allocation9 + $0x1e0] sm:$0xff]
    %v4260 = vld [vmem:[#allocation9 + $0x1e8] sm:$0xff]
    %v4261 = vld [vmem:[#allocation9 + $0x1f0] sm:$0xff]
    %v4262 = vld [vmem:[#allocation9 + $0x1f8] sm:$0xff]
    %v4263 = vld [vmem:[#allocation9 + $0x200] sm:$0xff]
    %v4264 = vld [vmem:[#allocation9 + $0x208] sm:$0xff]
    %v4265 = vld [vmem:[#allocation9 + $0x210] sm:$0xff]
    %v4266 = vld [vmem:[#allocation9 + $0x218] sm:$0xff]
    %v4267 = vld [vmem:[#allocation9 + $0x220] sm:$0xff]
    %v4268 = vld [vmem:[#allocation9 + $0x228] sm:$0xff]
    %v4269 = vld [vmem:[#allocation9 + $0x230] sm:$0xff]
    %v4270 = vld [vmem:[#allocation9 + $0x238] sm:$0xff]
    %v4271 = vld [vmem:[#allocation9 + $0x240] sm:$0xff]
    %v4272 = vld [vmem:[#allocation9 + $0x248] sm:$0xff]
    %v4273 = vld [vmem:[#allocation9 + $0x250] sm:$0xff]
    %v4274 = vld [vmem:[#allocation9 + $0x258] sm:$0xff]
    %v4275 = vld [vmem:[#allocation9 + $0x260] sm:$0xff]
    %v4276 = vld [vmem:[#allocation9 + $0x268] sm:$0xff]
    %v4277 = vld [vmem:[#allocation9 + $0x270] sm:$0xff]
    %v4278 = vld [vmem:[#allocation9 + $0x278] sm:$0xff]
    %v4279 = vld [vmem:[#allocation9 + $0x280] sm:$0xff]
    %v4280 = vld [vmem:[#allocation9 + $0x288] sm:$0xff]
    %v4281 = vld [vmem:[#allocation9 + $0x290] sm:$0xff]
    %v4282 = vld [vmem:[#allocation9 + $0x298] sm:$0xff]
    %v4283 = vld [vmem:[#allocation9 + $0x2a0] sm:$0xff]
    %v4284 = vld [vmem:[#allocation9 + $0x2a8] sm:$0xff]
    %v4285 = vld [vmem:[#allocation9 + $0x2b0] sm:$0xff]
    %v4286 = vld [vmem:[#allocation9 + $0x2b8] sm:$0xff]
    %v4287 = vld [vmem:[#allocation9 + $0x2c0] sm:$0xff]
    %v4288 = vld [vmem:[#allocation9 + $0x2c8] sm:$0xff]
    %v4289 = vld [vmem:[#allocation9 + $0x2d0] sm:$0xff]
    %v4290 = vld [vmem:[#allocation9 + $0x2d8] sm:$0xff]
    %v4291 = vld [vmem:[#allocation9 + $0x2e0] sm:$0xff]
    %v4292 = vld [vmem:[#allocation9 + $0x2e8] sm:$0xff]
    %v4293 = vld [vmem:[#allocation9 + $0x2f0] sm:$0xff]
    %v4294 = vld [vmem:[#allocation9 + $0x2f8] sm:$0xff]
    %v4295 = vld [vmem:[#allocation9 + $0x300] sm:$0xff]
    %v4296 = vld [vmem:[#allocation9 + $0x308] sm:$0xff]
    %v4297 = vld [vmem:[#allocation9 + $0x310] sm:$0xff]
    %v4298 = vld [vmem:[#allocation9 + $0x318] sm:$0xff]
    %v4299 = vld [vmem:[#allocation9 + $0x320] sm:$0xff]
    %v4300 = vld [vmem:[#allocation9 + $0x328] sm:$0xff]
    %v4301 = vld [vmem:[#allocation9 + $0x330] sm:$0xff]
    %v4302 = vld [vmem:[#allocation9 + $0x338] sm:$0xff]
    %v4303 = vld [vmem:[#allocation9 + $0x340] sm:$0xff]
    %v4304 = vld [vmem:[#allocation9 + $0x348] sm:$0xff]
    %v4305 = vld [vmem:[#allocation9 + $0x350] sm:$0xff]
    %v4306 = vld [vmem:[#allocation9 + $0x358] sm:$0xff]
    %v4307 = vld [vmem:[#allocation9 + $0x360] sm:$0xff]
    %v4308 = vld [vmem:[#allocation9 + $0x368] sm:$0xff]
    %v4309 = vld [vmem:[#allocation9 + $0x370] sm:$0xff]
    %v4310 = vld [vmem:[#allocation9 + $0x378] sm:$0xff]
    %v4311 = vld [vmem:[#allocation9 + $0x380] sm:$0xff]
    %v4312 = vld [vmem:[#allocation9 + $0x388] sm:$0xff]
    %v4313 = vld [vmem:[#allocation9 + $0x390] sm:$0xff]
    %v4314 = vld [vmem:[#allocation9 + $0x398] sm:$0xff]
    %v4315 = vld [vmem:[#allocation9 + $0x3a0] sm:$0xff]
    %v4316 = vld [vmem:[#allocation9 + $0x3a8] sm:$0xff]
    %v4317 = vld [vmem:[#allocation9 + $0x3b0] sm:$0xff]
    %v4318 = vld [vmem:[#allocation9 + $0x3b8] sm:$0xff]
    %v4319 = vld [vmem:[#allocation9 + $0x3c0] sm:$0xff]
    %v4320 = vld [vmem:[#allocation9 + $0x3c8] sm:$0xff]
    %v4321 = vld [vmem:[#allocation9 + $0x3d0] sm:$0xff]
    %v4322 = vld [vmem:[#allocation9 + $0x3d8] sm:$0xff]
    %v4323 = vld [vmem:[#allocation9 + $0x3e0] sm:$0xff]
    %v4324 = vld [vmem:[#allocation9 + $0x3e8] sm:$0xff]
    %v4325 = vld [vmem:[#allocation9 + $0x3f0] sm:$0xff]
    %v4326 = vld [vmem:[#allocation9 + $0x3f8] sm:$0xff]
    %v4327 = vld [vmem:[#allocation9 + $0x400] sm:$0xff]
    %v4328 = vld [vmem:[#allocation9 + $0x408] sm:$0xff]
    %v4329 = vld [vmem:[#allocation9 + $0x410] sm:$0xff]
    %v4330 = vld [vmem:[#allocation9 + $0x418] sm:$0xff]
    %v4331 = vld [vmem:[#allocation9 + $0x420] sm:$0xff]
    %v4332 = vld [vmem:[#allocation9 + $0x428] sm:$0xff]
    %v4333 = vld [vmem:[#allocation9 + $0x430] sm:$0xff]
    %v4334 = vld [vmem:[#allocation9 + $0x438] sm:$0xff]
    %v4335 = vld [vmem:[#allocation9 + $0x440] sm:$0xff]
    %v4336 = vld [vmem:[#allocation9 + $0x448] sm:$0xff]
    %v4337 = vld [vmem:[#allocation9 + $0x450] sm:$0xff]
    %v4338 = vld [vmem:[#allocation9 + $0x458] sm:$0xff]
    %v4339 = vld [vmem:[#allocation9 + $0x460] sm:$0xff]
    %v4340 = vld [vmem:[#allocation9 + $0x468] sm:$0xff]
    %v4341 = vld [vmem:[#allocation9 + $0x470] sm:$0xff]
    %v4342 = vld [vmem:[#allocation9 + $0x478] sm:$0xff]
    %v4343 = vld [vmem:[#allocation9 + $0x480] sm:$0xff]
    %v4344 = vld [vmem:[#allocation9 + $0x488] sm:$0xff]
    %v4345 = vld [vmem:[#allocation9 + $0x490] sm:$0xff]
    %v4346 = vld [vmem:[#allocation9 + $0x498] sm:$0xff]
    %v4347 = vld [vmem:[#allocation9 + $0x4a0] sm:$0xff]
    %v4348 = vld [vmem:[#allocation9 + $0x4a8] sm:$0xff]
    %v4349 = vld [vmem:[#allocation9 + $0x4b0] sm:$0xff]
    %v4350 = vld [vmem:[#allocation9 + $0x4b8] sm:$0xff]
    %v4351 = vld [vmem:[#allocation9 + $0x4c0] sm:$0xff]
    %v4352 = vld [vmem:[#allocation9 + $0x4c8] sm:$0xff]
    %v4353 = vld [vmem:[#allocation9 + $0x4d0] sm:$0xff]
    %v4354 = vld [vmem:[#allocation9 + $0x4d8] sm:$0xff]
    %v4355 = vld [vmem:[#allocation9 + $0x4e0] sm:$0xff]
    %v4356 = vld [vmem:[#allocation9 + $0x4e8] sm:$0xff]
    %v4357 = vld [vmem:[#allocation9 + $0x4f0] sm:$0xff]
    %v4358 = vld [vmem:[#allocation9 + $0x4f8] sm:$0xff]
    %v4359 = vld [vmem:[#allocation9 + $0x500] sm:$0xff]
    %v4360 = vld [vmem:[#allocation9 + $0x508] sm:$0xff]
    %v4361 = vld [vmem:[#allocation9 + $0x510] sm:$0xff]
    %v4362 = vld [vmem:[#allocation9 + $0x518] sm:$0xff]
    %v4363 = vld [vmem:[#allocation9 + $0x520] sm:$0xff]
    %v4364 = vld [vmem:[#allocation9 + $0x528] sm:$0xff]
    %v4365 = vld [vmem:[#allocation9 + $0x530] sm:$0xff]
    %v4366 = vld [vmem:[#allocation9 + $0x538] sm:$0xff]
    %v4367 = vld [vmem:[#allocation9 + $0x540] sm:$0xff]
    %v4368 = vld [vmem:[#allocation9 + $0x548] sm:$0xff]
    %v4369 = vld [vmem:[#allocation9 + $0x550] sm:$0xff]
    %v4370 = vld [vmem:[#allocation9 + $0x558] sm:$0xff]
    %v4371 = vld [vmem:[#allocation9 + $0x560] sm:$0xff]
    %v4372 = vld [vmem:[#allocation9 + $0x568] sm:$0xff]
    %v4373 = vld [vmem:[#allocation9 + $0x570] sm:$0xff]
    %v4374 = vld [vmem:[#allocation9 + $0x578] sm:$0xff]
    %v4375 = vld [vmem:[#allocation9 + $0x580] sm:$0xff]
    %v4376 = vld [vmem:[#allocation9 + $0x588] sm:$0xff]
    %v4377 = vld [vmem:[#allocation9 + $0x590] sm:$0xff]
    %v4378 = vld [vmem:[#allocation9 + $0x598] sm:$0xff]
    %v4379 = vld [vmem:[#allocation9 + $0x5a0] sm:$0xff]
    %v4380 = vld [vmem:[#allocation9 + $0x5a8] sm:$0xff]
    %v4381 = vld [vmem:[#allocation9 + $0x5b0] sm:$0xff]
    %v4382 = vld [vmem:[#allocation9 + $0x5b8] sm:$0xff]
    %v4383 = vld [vmem:[#allocation9 + $0x5c0] sm:$0xff]
    %v4384 = vld [vmem:[#allocation9 + $0x5c8] sm:$0xff]
    %v4385 = vld [vmem:[#allocation9 + $0x5d0] sm:$0xff]
    %v4386 = vld [vmem:[#allocation9 + $0x5d8] sm:$0xff]
    %v4387 = vld [vmem:[#allocation9 + $0x5e0] sm:$0xff]
    %v4388 = vld [vmem:[#allocation9 + $0x5e8] sm:$0xff]
    %v4389 = vld [vmem:[#allocation9 + $0x5f0] sm:$0xff]
    %v4390 = vld [vmem:[#allocation9 + $0x5f8] sm:$0xff]
    %v4391 = vld [vmem:[#allocation9 + $0x600] sm:$0xff]
    %v4392 = vld [vmem:[#allocation9 + $0x608] sm:$0xff]
    %v4393 = vld [vmem:[#allocation9 + $0x610] sm:$0xff]
    %v4394 = vld [vmem:[#allocation9 + $0x618] sm:$0xff]
    %v4395 = vld [vmem:[#allocation9 + $0x620] sm:$0xff]
    %v4396 = vld [vmem:[#allocation9 + $0x628] sm:$0xff]
    %v4397 = vld [vmem:[#allocation9 + $0x630] sm:$0xff]
    %v4398 = vld [vmem:[#allocation9 + $0x638] sm:$0xff]
    %v4399 = vld [vmem:[#allocation9 + $0x640] sm:$0xff]
    %v4400 = vld [vmem:[#allocation9 + $0x648] sm:$0xff]
    %v4401 = vld [vmem:[#allocation9 + $0x650] sm:$0xff]
    %v4402 = vld [vmem:[#allocation9 + $0x658] sm:$0xff]
    %v4403 = vld [vmem:[#allocation9 + $0x660] sm:$0xff]
    %v4404 = vld [vmem:[#allocation9 + $0x668] sm:$0xff]
    %v4405 = vld [vmem:[#allocation9 + $0x670] sm:$0xff]
    %v4406 = vld [vmem:[#allocation9 + $0x678] sm:$0xff]
    %v4407 = vld [vmem:[#allocation9 + $0x680] sm:$0xff]
    %v4408 = vld [vmem:[#allocation9 + $0x688] sm:$0xff]
    %v4409 = vld [vmem:[#allocation9 + $0x690] sm:$0xff]
    %v4410 = vld [vmem:[#allocation9 + $0x698] sm:$0xff]
    %v4411 = vld [vmem:[#allocation9 + $0x6a0] sm:$0xff]
    %v4412 = vld [vmem:[#allocation9 + $0x6a8] sm:$0xff]
    %v4413 = vld [vmem:[#allocation9 + $0x6b0] sm:$0xff]
    %v4414 = vld [vmem:[#allocation9 + $0x6b8] sm:$0xff]
    %v4415 = vld [vmem:[#allocation9 + $0x6c0] sm:$0xff]
    %v4416 = vld [vmem:[#allocation9 + $0x6c8] sm:$0xff]
    %v4417 = vld [vmem:[#allocation9 + $0x6d0] sm:$0xff]
    %v4418 = vld [vmem:[#allocation9 + $0x6d8] sm:$0xff]
    %v4419 = vld [vmem:[#allocation9 + $0x6e0] sm:$0xff]
    %v4420 = vld [vmem:[#allocation9 + $0x6e8] sm:$0xff]
    %v4421 = vld [vmem:[#allocation9 + $0x6f0] sm:$0xff]
    %v4422 = vld [vmem:[#allocation9 + $0x6f8] sm:$0xff]
    %v4423 = vld [vmem:[#allocation9 + $0x700] sm:$0xff]
    %v4424 = vld [vmem:[#allocation9 + $0x708] sm:$0xff]
    %v4425 = vld [vmem:[#allocation9 + $0x710] sm:$0xff]
    %v4426 = vld [vmem:[#allocation9 + $0x718] sm:$0xff]
    %v4427 = vld [vmem:[#allocation9 + $0x720] sm:$0xff]
    %v4428 = vld [vmem:[#allocation9 + $0x728] sm:$0xff]
    %v4429 = vld [vmem:[#allocation9 + $0x730] sm:$0xff]
    %v4430 = vld [vmem:[#allocation9 + $0x738] sm:$0xff]
    %v4431 = vld [vmem:[#allocation9 + $0x740] sm:$0xff]
    %v4432 = vld [vmem:[#allocation9 + $0x748] sm:$0xff]
    %v4433 = vld [vmem:[#allocation9 + $0x750] sm:$0xff]
    %v4434 = vld [vmem:[#allocation9 + $0x758] sm:$0xff]
    %v4435 = vld [vmem:[#allocation9 + $0x760] sm:$0xff]
    %v4436 = vld [vmem:[#allocation9 + $0x768] sm:$0xff]
    %v4437 = vld [vmem:[#allocation9 + $0x770] sm:$0xff]
    %v4438 = vld [vmem:[#allocation9 + $0x778] sm:$0xff]
    %v4439 = vld [vmem:[#allocation9 + $0x780] sm:$0xff]
    %v4440 = vld [vmem:[#allocation9 + $0x788] sm:$0xff]
    %v4441 = vld [vmem:[#allocation9 + $0x790] sm:$0xff]
    %v4442 = vld [vmem:[#allocation9 + $0x798] sm:$0xff]
    %v4443 = vld [vmem:[#allocation9 + $0x7a0] sm:$0xff]
    %v4444 = vld [vmem:[#allocation9 + $0x7a8] sm:$0xff]
    %v4445 = vld [vmem:[#allocation9 + $0x7b0] sm:$0xff]
    %v4446 = vld [vmem:[#allocation9 + $0x7b8] sm:$0xff]
    %v4447 = vld [vmem:[#allocation9 + $0x7c0] sm:$0xff]
    %v4448 = vld [vmem:[#allocation9 + $0x7c8] sm:$0xff]
    %v4449 = vld [vmem:[#allocation9 + $0x7d0] sm:$0xff]
    %v4450 = vld [vmem:[#allocation9 + $0x7d8] sm:$0xff]
    %v4451 = vld [vmem:[#allocation9 + $0x7e0] sm:$0xff]
    %v4452 = vld [vmem:[#allocation9 + $0x7e8] sm:$0xff]
    %v4453 = vld [vmem:[#allocation9 + $0x7f0] sm:$0xff]
    %v4454 = vld [vmem:[#allocation9 + $0x7f8] sm:$0xff]
    %v4455 = vld [vmem:[#allocation10] sm:$0xf]
    %v4457 = vlaneseq
    %v4458 = vshrl.u32 %v4457, 7
    %v4459 = vsub.s32 0, %v4458
    %v4460 = vrot.slane %v4455, %v4459
    %v4461 = vlaneseq
    %v4462 = vshrl.u32 %v4461, 7
    %v4463 = vsub.s32 1, %v4462
    %v4464 = vrot.slane %v4455, %v4463
    %v4465 = vlaneseq
    %v4466 = vshrl.u32 %v4465, 7
    %v4467 = vsub.s32 2, %v4466
    %v4468 = vrot.slane %v4455, %v4467
    %v4469 = vlaneseq
    %v4470 = vshrl.u32 %v4469, 7
    %v4471 = vsub.s32 3, %v4470
    %v4472 = vrot.slane %v4455, %v4471
    %v4733 = vunpack.c.l.b16 %v4199
    %v4734 = vunpack.c.h.b16 %v4199
    %v4735 = vunpack.c.l.b16 %v4200
    %v4736 = vunpack.c.h.b16 %v4200
    %v4737 = vunpack.c.l.b16 %v4201
    %v4738 = vunpack.c.h.b16 %v4201
    %v4739 = vunpack.c.l.b16 %v4202
    %v4740 = vunpack.c.h.b16 %v4202
    %v4741 = vunpack.c.l.b16 %v4203
    %v4742 = vunpack.c.h.b16 %v4203
    %v4743 = vunpack.c.l.b16 %v4204
    %v4744 = vunpack.c.h.b16 %v4204
    %v4745 = vunpack.c.l.b16 %v4205
    %v4746 = vunpack.c.h.b16 %v4205
    %v4747 = vunpack.c.l.b16 %v4206
    %v4748 = vunpack.c.h.b16 %v4206
    %v4749 = vunpack.c.l.b16 %v4207
    %v4750 = vunpack.c.h.b16 %v4207
    %v4751 = vunpack.c.l.b16 %v4208
    %v4752 = vunpack.c.h.b16 %v4208
    %v4753 = vunpack.c.l.b16 %v4209
    %v4754 = vunpack.c.h.b16 %v4209
    %v4755 = vunpack.c.l.b16 %v4210
    %v4756 = vunpack.c.h.b16 %v4210
    %v4757 = vunpack.c.l.b16 %v4211
    %v4758 = vunpack.c.h.b16 %v4211
    %v4759 = vunpack.c.l.b16 %v4212
    %v4760 = vunpack.c.h.b16 %v4212
    %v4761 = vunpack.c.l.b16 %v4213
    %v4762 = vunpack.c.h.b16 %v4213
    %v4763 = vunpack.c.l.b16 %v4214
    %v4764 = vunpack.c.h.b16 %v4214
    %v4765 = vunpack.c.l.b16 %v4215
    %v4766 = vunpack.c.h.b16 %v4215
    %v4767 = vunpack.c.l.b16 %v4216
    %v4768 = vunpack.c.h.b16 %v4216
    %v4769 = vunpack.c.l.b16 %v4217
    %v4770 = vunpack.c.h.b16 %v4217
    %v4771 = vunpack.c.l.b16 %v4218
    %v4772 = vunpack.c.h.b16 %v4218
    %v4773 = vunpack.c.l.b16 %v4219
    %v4774 = vunpack.c.h.b16 %v4219
    %v4775 = vunpack.c.l.b16 %v4220
    %v4776 = vunpack.c.h.b16 %v4220
    %v4777 = vunpack.c.l.b16 %v4221
    %v4778 = vunpack.c.h.b16 %v4221
    %v4779 = vunpack.c.l.b16 %v4222
    %v4780 = vunpack.c.h.b16 %v4222
    %v4781 = vunpack.c.l.b16 %v4223
    %v4782 = vunpack.c.h.b16 %v4223
    %v4783 = vunpack.c.l.b16 %v4224
    %v4784 = vunpack.c.h.b16 %v4224
    %v4785 = vunpack.c.l.b16 %v4225
    %v4786 = vunpack.c.h.b16 %v4225
    %v4787 = vunpack.c.l.b16 %v4226
    %v4788 = vunpack.c.h.b16 %v4226
    %v4789 = vunpack.c.l.b16 %v4227
    %v4790 = vunpack.c.h.b16 %v4227
    %v4791 = vunpack.c.l.b16 %v4228
    %v4792 = vunpack.c.h.b16 %v4228
    %v4793 = vunpack.c.l.b16 %v4229
    %v4794 = vunpack.c.h.b16 %v4229
    %v4795 = vunpack.c.l.b16 %v4230
    %v4796 = vunpack.c.h.b16 %v4230
    %v4797 = vunpack.c.l.b16 %v4231
    %v4798 = vunpack.c.h.b16 %v4231
    %v4799 = vunpack.c.l.b16 %v4232
    %v4800 = vunpack.c.h.b16 %v4232
    %v4801 = vunpack.c.l.b16 %v4233
    %v4802 = vunpack.c.h.b16 %v4233
    %v4803 = vunpack.c.l.b16 %v4234
    %v4804 = vunpack.c.h.b16 %v4234
    %v4805 = vunpack.c.l.b16 %v4235
    %v4806 = vunpack.c.h.b16 %v4235
    %v4807 = vunpack.c.l.b16 %v4236
    %v4808 = vunpack.c.h.b16 %v4236
    %v4809 = vunpack.c.l.b16 %v4237
    %v4810 = vunpack.c.h.b16 %v4237
    %v4811 = vunpack.c.l.b16 %v4238
    %v4812 = vunpack.c.h.b16 %v4238
    %v4813 = vunpack.c.l.b16 %v4239
    %v4814 = vunpack.c.h.b16 %v4239
    %v4815 = vunpack.c.l.b16 %v4240
    %v4816 = vunpack.c.h.b16 %v4240
    %v4817 = vunpack.c.l.b16 %v4241
    %v4818 = vunpack.c.h.b16 %v4241
    %v4819 = vunpack.c.l.b16 %v4242
    %v4820 = vunpack.c.h.b16 %v4242
    %v4821 = vunpack.c.l.b16 %v4243
    %v4822 = vunpack.c.h.b16 %v4243
    %v4823 = vunpack.c.l.b16 %v4244
    %v4824 = vunpack.c.h.b16 %v4244
    %v4825 = vunpack.c.l.b16 %v4245
    %v4826 = vunpack.c.h.b16 %v4245
    %v4827 = vunpack.c.l.b16 %v4246
    %v4828 = vunpack.c.h.b16 %v4246
    %v4829 = vunpack.c.l.b16 %v4247
    %v4830 = vunpack.c.h.b16 %v4247
    %v4831 = vunpack.c.l.b16 %v4248
    %v4832 = vunpack.c.h.b16 %v4248
    %v4833 = vunpack.c.l.b16 %v4249
    %v4834 = vunpack.c.h.b16 %v4249
    %v4835 = vunpack.c.l.b16 %v4250
    %v4836 = vunpack.c.h.b16 %v4250
    %v4837 = vunpack.c.l.b16 %v4251
    %v4838 = vunpack.c.h.b16 %v4251
    %v4839 = vunpack.c.l.b16 %v4252
    %v4840 = vunpack.c.h.b16 %v4252
    %v4841 = vunpack.c.l.b16 %v4253
    %v4842 = vunpack.c.h.b16 %v4253
    %v4843 = vunpack.c.l.b16 %v4254
    %v4844 = vunpack.c.h.b16 %v4254
    %v4845 = vunpack.c.l.b16 %v4255
    %v4846 = vunpack.c.h.b16 %v4255
    %v4847 = vunpack.c.l.b16 %v4256
    %v4848 = vunpack.c.h.b16 %v4256
    %v4849 = vunpack.c.l.b16 %v4257
    %v4850 = vunpack.c.h.b16 %v4257
    %v4851 = vunpack.c.l.b16 %v4258
    %v4852 = vunpack.c.h.b16 %v4258
    %v4853 = vunpack.c.l.b16 %v4259
    %v4854 = vunpack.c.h.b16 %v4259
    %v4855 = vunpack.c.l.b16 %v4260
    %v4856 = vunpack.c.h.b16 %v4260
    %v4857 = vunpack.c.l.b16 %v4261
    %v4858 = vunpack.c.h.b16 %v4261
    %v4859 = vunpack.c.l.b16 %v4262
    %v4860 = vunpack.c.h.b16 %v4262
    %v4861 = vunpack.c.l.b16 %v4263
    %v4862 = vunpack.c.h.b16 %v4263
    %v4863 = vunpack.c.l.b16 %v4264
    %v4864 = vunpack.c.h.b16 %v4264
    %v4865 = vunpack.c.l.b16 %v4265
    %v4866 = vunpack.c.h.b16 %v4265
    %v4867 = vunpack.c.l.b16 %v4266
    %v4868 = vunpack.c.h.b16 %v4266
    %v4869 = vunpack.c.l.b16 %v4267
    %v4870 = vunpack.c.h.b16 %v4267
    %v4871 = vunpack.c.l.b16 %v4268
    %v4872 = vunpack.c.h.b16 %v4268
    %v4873 = vunpack.c.l.b16 %v4269
    %v4874 = vunpack.c.h.b16 %v4269
    %v4875 = vunpack.c.l.b16 %v4270
    %v4876 = vunpack.c.h.b16 %v4270
    %v4877 = vunpack.c.l.b16 %v4271
    %v4878 = vunpack.c.h.b16 %v4271
    %v4879 = vunpack.c.l.b16 %v4272
    %v4880 = vunpack.c.h.b16 %v4272
    %v4881 = vunpack.c.l.b16 %v4273
    %v4882 = vunpack.c.h.b16 %v4273
    %v4883 = vunpack.c.l.b16 %v4274
    %v4884 = vunpack.c.h.b16 %v4274
    %v4885 = vunpack.c.l.b16 %v4275
    %v4886 = vunpack.c.h.b16 %v4275
    %v4887 = vunpack.c.l.b16 %v4276
    %v4888 = vunpack.c.h.b16 %v4276
    %v4889 = vunpack.c.l.b16 %v4277
    %v4890 = vunpack.c.h.b16 %v4277
    %v4891 = vunpack.c.l.b16 %v4278
    %v4892 = vunpack.c.h.b16 %v4278
    %v4893 = vunpack.c.l.b16 %v4279
    %v4894 = vunpack.c.h.b16 %v4279
    %v4895 = vunpack.c.l.b16 %v4280
    %v4896 = vunpack.c.h.b16 %v4280
    %v4897 = vunpack.c.l.b16 %v4281
    %v4898 = vunpack.c.h.b16 %v4281
    %v4899 = vunpack.c.l.b16 %v4282
    %v4900 = vunpack.c.h.b16 %v4282
    %v4901 = vunpack.c.l.b16 %v4283
    %v4902 = vunpack.c.h.b16 %v4283
    %v4903 = vunpack.c.l.b16 %v4284
    %v4904 = vunpack.c.h.b16 %v4284
    %v4905 = vunpack.c.l.b16 %v4285
    %v4906 = vunpack.c.h.b16 %v4285
    %v4907 = vunpack.c.l.b16 %v4286
    %v4908 = vunpack.c.h.b16 %v4286
    %v4909 = vunpack.c.l.b16 %v4287
    %v4910 = vunpack.c.h.b16 %v4287
    %v4911 = vunpack.c.l.b16 %v4288
    %v4912 = vunpack.c.h.b16 %v4288
    %v4913 = vunpack.c.l.b16 %v4289
    %v4914 = vunpack.c.h.b16 %v4289
    %v4915 = vunpack.c.l.b16 %v4290
    %v4916 = vunpack.c.h.b16 %v4290
    %v4917 = vunpack.c.l.b16 %v4291
    %v4918 = vunpack.c.h.b16 %v4291
    %v4919 = vunpack.c.l.b16 %v4292
    %v4920 = vunpack.c.h.b16 %v4292
    %v4921 = vunpack.c.l.b16 %v4293
    %v4922 = vunpack.c.h.b16 %v4293
    %v4923 = vunpack.c.l.b16 %v4294
    %v4924 = vunpack.c.h.b16 %v4294
    %v4925 = vunpack.c.l.b16 %v4295
    %v4926 = vunpack.c.h.b16 %v4295
    %v4927 = vunpack.c.l.b16 %v4296
    %v4928 = vunpack.c.h.b16 %v4296
    %v4929 = vunpack.c.l.b16 %v4297
    %v4930 = vunpack.c.h.b16 %v4297
    %v4931 = vunpack.c.l.b16 %v4298
    %v4932 = vunpack.c.h.b16 %v4298
    %v4933 = vunpack.c.l.b16 %v4299
    %v4934 = vunpack.c.h.b16 %v4299
    %v4935 = vunpack.c.l.b16 %v4300
    %v4936 = vunpack.c.h.b16 %v4300
    %v4937 = vunpack.c.l.b16 %v4301
    %v4938 = vunpack.c.h.b16 %v4301
    %v4939 = vunpack.c.l.b16 %v4302
    %v4940 = vunpack.c.h.b16 %v4302
    %v4941 = vunpack.c.l.b16 %v4303
    %v4942 = vunpack.c.h.b16 %v4303
    %v4943 = vunpack.c.l.b16 %v4304
    %v4944 = vunpack.c.h.b16 %v4304
    %v4945 = vunpack.c.l.b16 %v4305
    %v4946 = vunpack.c.h.b16 %v4305
    %v4947 = vunpack.c.l.b16 %v4306
    %v4948 = vunpack.c.h.b16 %v4306
    %v4949 = vunpack.c.l.b16 %v4307
    %v4950 = vunpack.c.h.b16 %v4307
    %v4951 = vunpack.c.l.b16 %v4308
    %v4952 = vunpack.c.h.b16 %v4308
    %v4953 = vunpack.c.l.b16 %v4309
    %v4954 = vunpack.c.h.b16 %v4309
    %v4955 = vunpack.c.l.b16 %v4310
    %v4956 = vunpack.c.h.b16 %v4310
    %v4957 = vunpack.c.l.b16 %v4311
    %v4958 = vunpack.c.h.b16 %v4311
    %v4959 = vunpack.c.l.b16 %v4312
    %v4960 = vunpack.c.h.b16 %v4312
    %v4961 = vunpack.c.l.b16 %v4313
    %v4962 = vunpack.c.h.b16 %v4313
    %v4963 = vunpack.c.l.b16 %v4314
    %v4964 = vunpack.c.h.b16 %v4314
    %v4965 = vunpack.c.l.b16 %v4315
    %v4966 = vunpack.c.h.b16 %v4315
    %v4967 = vunpack.c.l.b16 %v4316
    %v4968 = vunpack.c.h.b16 %v4316
    %v4969 = vunpack.c.l.b16 %v4317
    %v4970 = vunpack.c.h.b16 %v4317
    %v4971 = vunpack.c.l.b16 %v4318
    %v4972 = vunpack.c.h.b16 %v4318
    %v4973 = vunpack.c.l.b16 %v4319
    %v4974 = vunpack.c.h.b16 %v4319
    %v4975 = vunpack.c.l.b16 %v4320
    %v4976 = vunpack.c.h.b16 %v4320
    %v4977 = vunpack.c.l.b16 %v4321
    %v4978 = vunpack.c.h.b16 %v4321
    %v4979 = vunpack.c.l.b16 %v4322
    %v4980 = vunpack.c.h.b16 %v4322
    %v4981 = vunpack.c.l.b16 %v4323
    %v4982 = vunpack.c.h.b16 %v4323
    %v4983 = vunpack.c.l.b16 %v4324
    %v4984 = vunpack.c.h.b16 %v4324
    %v4985 = vunpack.c.l.b16 %v4325
    %v4986 = vunpack.c.h.b16 %v4325
    %v4987 = vunpack.c.l.b16 %v4326
    %v4988 = vunpack.c.h.b16 %v4326
    %v4989 = vunpack.c.l.b16 %v4327
    %v4990 = vunpack.c.h.b16 %v4327
    %v4991 = vunpack.c.l.b16 %v4328
    %v4992 = vunpack.c.h.b16 %v4328
    %v4993 = vunpack.c.l.b16 %v4329
    %v4994 = vunpack.c.h.b16 %v4329
    %v4995 = vunpack.c.l.b16 %v4330
    %v4996 = vunpack.c.h.b16 %v4330
    %v4997 = vunpack.c.l.b16 %v4331
    %v4998 = vunpack.c.h.b16 %v4331
    %v4999 = vunpack.c.l.b16 %v4332
    %v5000 = vunpack.c.h.b16 %v4332
    %v5001 = vunpack.c.l.b16 %v4333
    %v5002 = vunpack.c.h.b16 %v4333
    %v5003 = vunpack.c.l.b16 %v4334
    %v5004 = vunpack.c.h.b16 %v4334
    %v5005 = vunpack.c.l.b16 %v4335
    %v5006 = vunpack.c.h.b16 %v4335
    %v5007 = vunpack.c.l.b16 %v4336
    %v5008 = vunpack.c.h.b16 %v4336
    %v5009 = vunpack.c.l.b16 %v4337
    %v5010 = vunpack.c.h.b16 %v4337
    %v5011 = vunpack.c.l.b16 %v4338
    %v5012 = vunpack.c.h.b16 %v4338
    %v5013 = vunpack.c.l.b16 %v4339
    %v5014 = vunpack.c.h.b16 %v4339
    %v5015 = vunpack.c.l.b16 %v4340
    %v5016 = vunpack.c.h.b16 %v4340
    %v5017 = vunpack.c.l.b16 %v4341
    %v5018 = vunpack.c.h.b16 %v4341
    %v5019 = vunpack.c.l.b16 %v4342
    %v5020 = vunpack.c.h.b16 %v4342
    %v5021 = vunpack.c.l.b16 %v4343
    %v5022 = vunpack.c.h.b16 %v4343
    %v5023 = vunpack.c.l.b16 %v4344
    %v5024 = vunpack.c.h.b16 %v4344
    %v5025 = vunpack.c.l.b16 %v4345
    %v5026 = vunpack.c.h.b16 %v4345
    %v5027 = vunpack.c.l.b16 %v4346
    %v5028 = vunpack.c.h.b16 %v4346
    %v5029 = vunpack.c.l.b16 %v4347
    %v5030 = vunpack.c.h.b16 %v4347
    %v5031 = vunpack.c.l.b16 %v4348
    %v5032 = vunpack.c.h.b16 %v4348
    %v5033 = vunpack.c.l.b16 %v4349
    %v5034 = vunpack.c.h.b16 %v4349
    %v5035 = vunpack.c.l.b16 %v4350
    %v5036 = vunpack.c.h.b16 %v4350
    %v5037 = vunpack.c.l.b16 %v4351
    %v5038 = vunpack.c.h.b16 %v4351
    %v5039 = vunpack.c.l.b16 %v4352
    %v5040 = vunpack.c.h.b16 %v4352
    %v5041 = vunpack.c.l.b16 %v4353
    %v5042 = vunpack.c.h.b16 %v4353
    %v5043 = vunpack.c.l.b16 %v4354
    %v5044 = vunpack.c.h.b16 %v4354
    %v5045 = vunpack.c.l.b16 %v4355
    %v5046 = vunpack.c.h.b16 %v4355
    %v5047 = vunpack.c.l.b16 %v4356
    %v5048 = vunpack.c.h.b16 %v4356
    %v5049 = vunpack.c.l.b16 %v4357
    %v5050 = vunpack.c.h.b16 %v4357
    %v5051 = vunpack.c.l.b16 %v4358
    %v5052 = vunpack.c.h.b16 %v4358
    %v5053 = vunpack.c.l.b16 %v4359
    %v5054 = vunpack.c.h.b16 %v4359
    %v5055 = vunpack.c.l.b16 %v4360
    %v5056 = vunpack.c.h.b16 %v4360
    %v5057 = vunpack.c.l.b16 %v4361
    %v5058 = vunpack.c.h.b16 %v4361
    %v5059 = vunpack.c.l.b16 %v4362
    %v5060 = vunpack.c.h.b16 %v4362
    %v5061 = vunpack.c.l.b16 %v4363
    %v5062 = vunpack.c.h.b16 %v4363
    %v5063 = vunpack.c.l.b16 %v4364
    %v5064 = vunpack.c.h.b16 %v4364
    %v5065 = vunpack.c.l.b16 %v4365
    %v5066 = vunpack.c.h.b16 %v4365
    %v5067 = vunpack.c.l.b16 %v4366
    %v5068 = vunpack.c.h.b16 %v4366
    %v5069 = vunpack.c.l.b16 %v4367
    %v5070 = vunpack.c.h.b16 %v4367
    %v5071 = vunpack.c.l.b16 %v4368
    %v5072 = vunpack.c.h.b16 %v4368
    %v5073 = vunpack.c.l.b16 %v4369
    %v5074 = vunpack.c.h.b16 %v4369
    %v5075 = vunpack.c.l.b16 %v4370
    %v5076 = vunpack.c.h.b16 %v4370
    %v5077 = vunpack.c.l.b16 %v4371
    %v5078 = vunpack.c.h.b16 %v4371
    %v5079 = vunpack.c.l.b16 %v4372
    %v5080 = vunpack.c.h.b16 %v4372
    %v5081 = vunpack.c.l.b16 %v4373
    %v5082 = vunpack.c.h.b16 %v4373
    %v5083 = vunpack.c.l.b16 %v4374
    %v5084 = vunpack.c.h.b16 %v4374
    %v5085 = vunpack.c.l.b16 %v4375
    %v5086 = vunpack.c.h.b16 %v4375
    %v5087 = vunpack.c.l.b16 %v4376
    %v5088 = vunpack.c.h.b16 %v4376
    %v5089 = vunpack.c.l.b16 %v4377
    %v5090 = vunpack.c.h.b16 %v4377
    %v5091 = vunpack.c.l.b16 %v4378
    %v5092 = vunpack.c.h.b16 %v4378
    %v5093 = vunpack.c.l.b16 %v4379
    %v5094 = vunpack.c.h.b16 %v4379
    %v5095 = vunpack.c.l.b16 %v4380
    %v5096 = vunpack.c.h.b16 %v4380
    %v5097 = vunpack.c.l.b16 %v4381
    %v5098 = vunpack.c.h.b16 %v4381
    %v5099 = vunpack.c.l.b16 %v4382
    %v5100 = vunpack.c.h.b16 %v4382
    %v5101 = vunpack.c.l.b16 %v4383
    %v5102 = vunpack.c.h.b16 %v4383
    %v5103 = vunpack.c.l.b16 %v4384
    %v5104 = vunpack.c.h.b16 %v4384
    %v5105 = vunpack.c.l.b16 %v4385
    %v5106 = vunpack.c.h.b16 %v4385
    %v5107 = vunpack.c.l.b16 %v4386
    %v5108 = vunpack.c.h.b16 %v4386
    %v5109 = vunpack.c.l.b16 %v4387
    %v5110 = vunpack.c.h.b16 %v4387
    %v5111 = vunpack.c.l.b16 %v4388
    %v5112 = vunpack.c.h.b16 %v4388
    %v5113 = vunpack.c.l.b16 %v4389
    %v5114 = vunpack.c.h.b16 %v4389
    %v5115 = vunpack.c.l.b16 %v4390
    %v5116 = vunpack.c.h.b16 %v4390
    %v5117 = vunpack.c.l.b16 %v4391
    %v5118 = vunpack.c.h.b16 %v4391
    %v5119 = vunpack.c.l.b16 %v4392
    %v5120 = vunpack.c.h.b16 %v4392
    %v5121 = vunpack.c.l.b16 %v4393
    %v5122 = vunpack.c.h.b16 %v4393
    %v5123 = vunpack.c.l.b16 %v4394
    %v5124 = vunpack.c.h.b16 %v4394
    %v5125 = vunpack.c.l.b16 %v4395
    %v5126 = vunpack.c.h.b16 %v4395
    %v5127 = vunpack.c.l.b16 %v4396
    %v5128 = vunpack.c.h.b16 %v4396
    %v5129 = vunpack.c.l.b16 %v4397
    %v5130 = vunpack.c.h.b16 %v4397
    %v5131 = vunpack.c.l.b16 %v4398
    %v5132 = vunpack.c.h.b16 %v4398
    %v5133 = vunpack.c.l.b16 %v4399
    %v5134 = vunpack.c.h.b16 %v4399
    %v5135 = vunpack.c.l.b16 %v4400
    %v5136 = vunpack.c.h.b16 %v4400
    %v5137 = vunpack.c.l.b16 %v4401
    %v5138 = vunpack.c.h.b16 %v4401
    %v5139 = vunpack.c.l.b16 %v4402
    %v5140 = vunpack.c.h.b16 %v4402
    %v5141 = vunpack.c.l.b16 %v4403
    %v5142 = vunpack.c.h.b16 %v4403
    %v5143 = vunpack.c.l.b16 %v4404
    %v5144 = vunpack.c.h.b16 %v4404
    %v5145 = vunpack.c.l.b16 %v4405
    %v5146 = vunpack.c.h.b16 %v4405
    %v5147 = vunpack.c.l.b16 %v4406
    %v5148 = vunpack.c.h.b16 %v4406
    %v5149 = vunpack.c.l.b16 %v4407
    %v5150 = vunpack.c.h.b16 %v4407
    %v5151 = vunpack.c.l.b16 %v4408
    %v5152 = vunpack.c.h.b16 %v4408
    %v5153 = vunpack.c.l.b16 %v4409
    %v5154 = vunpack.c.h.b16 %v4409
    %v5155 = vunpack.c.l.b16 %v4410
    %v5156 = vunpack.c.h.b16 %v4410
    %v5157 = vunpack.c.l.b16 %v4411
    %v5158 = vunpack.c.h.b16 %v4411
    %v5159 = vunpack.c.l.b16 %v4412
    %v5160 = vunpack.c.h.b16 %v4412
    %v5161 = vunpack.c.l.b16 %v4413
    %v5162 = vunpack.c.h.b16 %v4413
    %v5163 = vunpack.c.l.b16 %v4414
    %v5164 = vunpack.c.h.b16 %v4414
    %v5165 = vunpack.c.l.b16 %v4415
    %v5166 = vunpack.c.h.b16 %v4415
    %v5167 = vunpack.c.l.b16 %v4416
    %v5168 = vunpack.c.h.b16 %v4416
    %v5169 = vunpack.c.l.b16 %v4417
    %v5170 = vunpack.c.h.b16 %v4417
    %v5171 = vunpack.c.l.b16 %v4418
    %v5172 = vunpack.c.h.b16 %v4418
    %v5173 = vunpack.c.l.b16 %v4419
    %v5174 = vunpack.c.h.b16 %v4419
    %v5175 = vunpack.c.l.b16 %v4420
    %v5176 = vunpack.c.h.b16 %v4420
    %v5177 = vunpack.c.l.b16 %v4421
    %v5178 = vunpack.c.h.b16 %v4421
    %v5179 = vunpack.c.l.b16 %v4422
    %v5180 = vunpack.c.h.b16 %v4422
    %v5181 = vunpack.c.l.b16 %v4423
    %v5182 = vunpack.c.h.b16 %v4423
    %v5183 = vunpack.c.l.b16 %v4424
    %v5184 = vunpack.c.h.b16 %v4424
    %v5185 = vunpack.c.l.b16 %v4425
    %v5186 = vunpack.c.h.b16 %v4425
    %v5187 = vunpack.c.l.b16 %v4426
    %v5188 = vunpack.c.h.b16 %v4426
    %v5189 = vunpack.c.l.b16 %v4427
    %v5190 = vunpack.c.h.b16 %v4427
    %v5191 = vunpack.c.l.b16 %v4428
    %v5192 = vunpack.c.h.b16 %v4428
    %v5193 = vunpack.c.l.b16 %v4429
    %v5194 = vunpack.c.h.b16 %v4429
    %v5195 = vunpack.c.l.b16 %v4430
    %v5196 = vunpack.c.h.b16 %v4430
    %v5197 = vunpack.c.l.b16 %v4431
    %v5198 = vunpack.c.h.b16 %v4431
    %v5199 = vunpack.c.l.b16 %v4432
    %v5200 = vunpack.c.h.b16 %v4432
    %v5201 = vunpack.c.l.b16 %v4433
    %v5202 = vunpack.c.h.b16 %v4433
    %v5203 = vunpack.c.l.b16 %v4434
    %v5204 = vunpack.c.h.b16 %v4434
    %v5205 = vunpack.c.l.b16 %v4435
    %v5206 = vunpack.c.h.b16 %v4435
    %v5207 = vunpack.c.l.b16 %v4436
    %v5208 = vunpack.c.h.b16 %v4436
    %v5209 = vunpack.c.l.b16 %v4437
    %v5210 = vunpack.c.h.b16 %v4437
    %v5211 = vunpack.c.l.b16 %v4438
    %v5212 = vunpack.c.h.b16 %v4438
    %v5213 = vunpack.c.l.b16 %v4439
    %v5214 = vunpack.c.h.b16 %v4439
    %v5215 = vunpack.c.l.b16 %v4440
    %v5216 = vunpack.c.h.b16 %v4440
    %v5217 = vunpack.c.l.b16 %v4441
    %v5218 = vunpack.c.h.b16 %v4441
    %v5219 = vunpack.c.l.b16 %v4442
    %v5220 = vunpack.c.h.b16 %v4442
    %v5221 = vunpack.c.l.b16 %v4443
    %v5222 = vunpack.c.h.b16 %v4443
    %v5223 = vunpack.c.l.b16 %v4444
    %v5224 = vunpack.c.h.b16 %v4444
    %v5225 = vunpack.c.l.b16 %v4445
    %v5226 = vunpack.c.h.b16 %v4445
    %v5227 = vunpack.c.l.b16 %v4446
    %v5228 = vunpack.c.h.b16 %v4446
    %v5229 = vunpack.c.l.b16 %v4447
    %v5230 = vunpack.c.h.b16 %v4447
    %v5231 = vunpack.c.l.b16 %v4448
    %v5232 = vunpack.c.h.b16 %v4448
    %v5233 = vunpack.c.l.b16 %v4449
    %v5234 = vunpack.c.h.b16 %v4449
    %v5235 = vunpack.c.l.b16 %v4450
    %v5236 = vunpack.c.h.b16 %v4450
    %v5237 = vunpack.c.l.b16 %v4451
    %v5238 = vunpack.c.h.b16 %v4451
    %v5239 = vunpack.c.l.b16 %v4452
    %v5240 = vunpack.c.h.b16 %v4452
    %v5241 = vunpack.c.l.b16 %v4453
    %v5242 = vunpack.c.h.b16 %v4453
    %v5243 = vunpack.c.l.b16 %v4454
    %v5244 = vunpack.c.h.b16 %v4454
    %v5245 = vpack.c.b16 %v4737, %v4733
    %v5246 = vpack.c.b16 %v4738, %v4734
    %v5247 = vpack.c.b16 %v4739, %v4735
    %v5248 = vpack.c.b16 %v4740, %v4736
    %v5249 = vpack.c.b16 %v4745, %v4741
    %v5250 = vpack.c.b16 %v4746, %v4742
    %v5251 = vpack.c.b16 %v4747, %v4743
    %v5252 = vpack.c.b16 %v4748, %v4744
    %v5253 = vpack.c.b16 %v4753, %v4749
    %v5254 = vpack.c.b16 %v4754, %v4750
    %v5255 = vpack.c.b16 %v4755, %v4751
    %v5256 = vpack.c.b16 %v4756, %v4752
    %v5257 = vpack.c.b16 %v4761, %v4757
    %v5258 = vpack.c.b16 %v4762, %v4758
    %v5259 = vpack.c.b16 %v4763, %v4759
    %v5260 = vpack.c.b16 %v4764, %v4760
    %v5261 = vpack.c.b16 %v4769, %v4765
    %v5262 = vpack.c.b16 %v4770, %v4766
    %v5263 = vpack.c.b16 %v4771, %v4767
    %v5264 = vpack.c.b16 %v4772, %v4768
    %v5265 = vpack.c.b16 %v4777, %v4773
    %v5266 = vpack.c.b16 %v4778, %v4774
    %v5267 = vpack.c.b16 %v4779, %v4775
    %v5268 = vpack.c.b16 %v4780, %v4776
    %v5269 = vpack.c.b16 %v4785, %v4781
    %v5270 = vpack.c.b16 %v4786, %v4782
    %v5271 = vpack.c.b16 %v4787, %v4783
    %v5272 = vpack.c.b16 %v4788, %v4784
    %v5273 = vpack.c.b16 %v4793, %v4789
    %v5274 = vpack.c.b16 %v4794, %v4790
    %v5275 = vpack.c.b16 %v4795, %v4791
    %v5276 = vpack.c.b16 %v4796, %v4792
    %v5277 = vpack.c.b16 %v4801, %v4797
    %v5278 = vpack.c.b16 %v4802, %v4798
    %v5279 = vpack.c.b16 %v4803, %v4799
    %v5280 = vpack.c.b16 %v4804, %v4800
    %v5281 = vpack.c.b16 %v4809, %v4805
    %v5282 = vpack.c.b16 %v4810, %v4806
    %v5283 = vpack.c.b16 %v4811, %v4807
    %v5284 = vpack.c.b16 %v4812, %v4808
    %v5285 = vpack.c.b16 %v4817, %v4813
    %v5286 = vpack.c.b16 %v4818, %v4814
    %v5287 = vpack.c.b16 %v4819, %v4815
    %v5288 = vpack.c.b16 %v4820, %v4816
    %v5289 = vpack.c.b16 %v4825, %v4821
    %v5290 = vpack.c.b16 %v4826, %v4822
    %v5291 = vpack.c.b16 %v4827, %v4823
    %v5292 = vpack.c.b16 %v4828, %v4824
    %v5293 = vpack.c.b16 %v4833, %v4829
    %v5294 = vpack.c.b16 %v4834, %v4830
    %v5295 = vpack.c.b16 %v4835, %v4831
    %v5296 = vpack.c.b16 %v4836, %v4832
    %v5297 = vpack.c.b16 %v4841, %v4837
    %v5298 = vpack.c.b16 %v4842, %v4838
    %v5299 = vpack.c.b16 %v4843, %v4839
    %v5300 = vpack.c.b16 %v4844, %v4840
    %v5301 = vpack.c.b16 %v4849, %v4845
    %v5302 = vpack.c.b16 %v4850, %v4846
    %v5303 = vpack.c.b16 %v4851, %v4847
    %v5304 = vpack.c.b16 %v4852, %v4848
    %v5305 = vpack.c.b16 %v4857, %v4853
    %v5306 = vpack.c.b16 %v4858, %v4854
    %v5307 = vpack.c.b16 %v4859, %v4855
    %v5308 = vpack.c.b16 %v4860, %v4856
    %v5309 = vpack.c.b16 %v4865, %v4861
    %v5310 = vpack.c.b16 %v4866, %v4862
    %v5311 = vpack.c.b16 %v4867, %v4863
    %v5312 = vpack.c.b16 %v4868, %v4864
    %v5313 = vpack.c.b16 %v4873, %v4869
    %v5314 = vpack.c.b16 %v4874, %v4870
    %v5315 = vpack.c.b16 %v4875, %v4871
    %v5316 = vpack.c.b16 %v4876, %v4872
    %v5317 = vpack.c.b16 %v4881, %v4877
    %v5318 = vpack.c.b16 %v4882, %v4878
    %v5319 = vpack.c.b16 %v4883, %v4879
    %v5320 = vpack.c.b16 %v4884, %v4880
    %v5321 = vpack.c.b16 %v4889, %v4885
    %v5322 = vpack.c.b16 %v4890, %v4886
    %v5323 = vpack.c.b16 %v4891, %v4887
    %v5324 = vpack.c.b16 %v4892, %v4888
    %v5325 = vpack.c.b16 %v4897, %v4893
    %v5326 = vpack.c.b16 %v4898, %v4894
    %v5327 = vpack.c.b16 %v4899, %v4895
    %v5328 = vpack.c.b16 %v4900, %v4896
    %v5329 = vpack.c.b16 %v4905, %v4901
    %v5330 = vpack.c.b16 %v4906, %v4902
    %v5331 = vpack.c.b16 %v4907, %v4903
    %v5332 = vpack.c.b16 %v4908, %v4904
    %v5333 = vpack.c.b16 %v4913, %v4909
    %v5334 = vpack.c.b16 %v4914, %v4910
    %v5335 = vpack.c.b16 %v4915, %v4911
    %v5336 = vpack.c.b16 %v4916, %v4912
    %v5337 = vpack.c.b16 %v4921, %v4917
    %v5338 = vpack.c.b16 %v4922, %v4918
    %v5339 = vpack.c.b16 %v4923, %v4919
    %v5340 = vpack.c.b16 %v4924, %v4920
    %v5341 = vpack.c.b16 %v4929, %v4925
    %v5342 = vpack.c.b16 %v4930, %v4926
    %v5343 = vpack.c.b16 %v4931, %v4927
    %v5344 = vpack.c.b16 %v4932, %v4928
    %v5345 = vpack.c.b16 %v4937, %v4933
    %v5346 = vpack.c.b16 %v4938, %v4934
    %v5347 = vpack.c.b16 %v4939, %v4935
    %v5348 = vpack.c.b16 %v4940, %v4936
    %v5349 = vpack.c.b16 %v4945, %v4941
    %v5350 = vpack.c.b16 %v4946, %v4942
    %v5351 = vpack.c.b16 %v4947, %v4943
    %v5352 = vpack.c.b16 %v4948, %v4944
    %v5353 = vpack.c.b16 %v4953, %v4949
    %v5354 = vpack.c.b16 %v4954, %v4950
    %v5355 = vpack.c.b16 %v4955, %v4951
    %v5356 = vpack.c.b16 %v4956, %v4952
    %v5357 = vpack.c.b16 %v4961, %v4957
    %v5358 = vpack.c.b16 %v4962, %v4958
    %v5359 = vpack.c.b16 %v4963, %v4959
    %v5360 = vpack.c.b16 %v4964, %v4960
    %v5361 = vpack.c.b16 %v4969, %v4965
    %v5362 = vpack.c.b16 %v4970, %v4966
    %v5363 = vpack.c.b16 %v4971, %v4967
    %v5364 = vpack.c.b16 %v4972, %v4968
    %v5365 = vpack.c.b16 %v4977, %v4973
    %v5366 = vpack.c.b16 %v4978, %v4974
    %v5367 = vpack.c.b16 %v4979, %v4975
    %v5368 = vpack.c.b16 %v4980, %v4976
    %v5369 = vpack.c.b16 %v4985, %v4981
    %v5370 = vpack.c.b16 %v4986, %v4982
    %v5371 = vpack.c.b16 %v4987, %v4983
    %v5372 = vpack.c.b16 %v4988, %v4984
    %v5373 = vpack.c.b16 %v4993, %v4989
    %v5374 = vpack.c.b16 %v4994, %v4990
    %v5375 = vpack.c.b16 %v4995, %v4991
    %v5376 = vpack.c.b16 %v4996, %v4992
    %v5377 = vpack.c.b16 %v5001, %v4997
    %v5378 = vpack.c.b16 %v5002, %v4998
    %v5379 = vpack.c.b16 %v5003, %v4999
    %v5380 = vpack.c.b16 %v5004, %v5000
    %v5381 = vpack.c.b16 %v5009, %v5005
    %v5382 = vpack.c.b16 %v5010, %v5006
    %v5383 = vpack.c.b16 %v5011, %v5007
    %v5384 = vpack.c.b16 %v5012, %v5008
    %v5385 = vpack.c.b16 %v5017, %v5013
    %v5386 = vpack.c.b16 %v5018, %v5014
    %v5387 = vpack.c.b16 %v5019, %v5015
    %v5388 = vpack.c.b16 %v5020, %v5016
    %v5389 = vpack.c.b16 %v5025, %v5021
    %v5390 = vpack.c.b16 %v5026, %v5022
    %v5391 = vpack.c.b16 %v5027, %v5023
    %v5392 = vpack.c.b16 %v5028, %v5024
    %v5393 = vpack.c.b16 %v5033, %v5029
    %v5394 = vpack.c.b16 %v5034, %v5030
    %v5395 = vpack.c.b16 %v5035, %v5031
    %v5396 = vpack.c.b16 %v5036, %v5032
    %v5397 = vpack.c.b16 %v5041, %v5037
    %v5398 = vpack.c.b16 %v5042, %v5038
    %v5399 = vpack.c.b16 %v5043, %v5039
    %v5400 = vpack.c.b16 %v5044, %v5040
    %v5401 = vpack.c.b16 %v5049, %v5045
    %v5402 = vpack.c.b16 %v5050, %v5046
    %v5403 = vpack.c.b16 %v5051, %v5047
    %v5404 = vpack.c.b16 %v5052, %v5048
    %v5405 = vpack.c.b16 %v5057, %v5053
    %v5406 = vpack.c.b16 %v5058, %v5054
    %v5407 = vpack.c.b16 %v5059, %v5055
    %v5408 = vpack.c.b16 %v5060, %v5056
    %v5409 = vpack.c.b16 %v5065, %v5061
    %v5410 = vpack.c.b16 %v5066, %v5062
    %v5411 = vpack.c.b16 %v5067, %v5063
    %v5412 = vpack.c.b16 %v5068, %v5064
    %v5413 = vpack.c.b16 %v5073, %v5069
    %v5414 = vpack.c.b16 %v5074, %v5070
    %v5415 = vpack.c.b16 %v5075, %v5071
    %v5416 = vpack.c.b16 %v5076, %v5072
    %v5417 = vpack.c.b16 %v5081, %v5077
    %v5418 = vpack.c.b16 %v5082, %v5078
    %v5419 = vpack.c.b16 %v5083, %v5079
    %v5420 = vpack.c.b16 %v5084, %v5080
    %v5421 = vpack.c.b16 %v5089, %v5085
    %v5422 = vpack.c.b16 %v5090, %v5086
    %v5423 = vpack.c.b16 %v5091, %v5087
    %v5424 = vpack.c.b16 %v5092, %v5088
    %v5425 = vpack.c.b16 %v5097, %v5093
    %v5426 = vpack.c.b16 %v5098, %v5094
    %v5427 = vpack.c.b16 %v5099, %v5095
    %v5428 = vpack.c.b16 %v5100, %v5096
    %v5429 = vpack.c.b16 %v5105, %v5101
    %v5430 = vpack.c.b16 %v5106, %v5102
    %v5431 = vpack.c.b16 %v5107, %v5103
    %v5432 = vpack.c.b16 %v5108, %v5104
    %v5433 = vpack.c.b16 %v5113, %v5109
    %v5434 = vpack.c.b16 %v5114, %v5110
    %v5435 = vpack.c.b16 %v5115, %v5111
    %v5436 = vpack.c.b16 %v5116, %v5112
    %v5437 = vpack.c.b16 %v5121, %v5117
    %v5438 = vpack.c.b16 %v5122, %v5118
    %v5439 = vpack.c.b16 %v5123, %v5119
    %v5440 = vpack.c.b16 %v5124, %v5120
    %v5441 = vpack.c.b16 %v5129, %v5125
    %v5442 = vpack.c.b16 %v5130, %v5126
    %v5443 = vpack.c.b16 %v5131, %v5127
    %v5444 = vpack.c.b16 %v5132, %v5128
    %v5445 = vpack.c.b16 %v5137, %v5133
    %v5446 = vpack.c.b16 %v5138, %v5134
    %v5447 = vpack.c.b16 %v5139, %v5135
    %v5448 = vpack.c.b16 %v5140, %v5136
    %v5449 = vpack.c.b16 %v5145, %v5141
    %v5450 = vpack.c.b16 %v5146, %v5142
    %v5451 = vpack.c.b16 %v5147, %v5143
    %v5452 = vpack.c.b16 %v5148, %v5144
    %v5453 = vpack.c.b16 %v5153, %v5149
    %v5454 = vpack.c.b16 %v5154, %v5150
    %v5455 = vpack.c.b16 %v5155, %v5151
    %v5456 = vpack.c.b16 %v5156, %v5152
    %v5457 = vpack.c.b16 %v5161, %v5157
    %v5458 = vpack.c.b16 %v5162, %v5158
    %v5459 = vpack.c.b16 %v5163, %v5159
    %v5460 = vpack.c.b16 %v5164, %v5160
    %v5461 = vpack.c.b16 %v5169, %v5165
    %v5462 = vpack.c.b16 %v5170, %v5166
    %v5463 = vpack.c.b16 %v5171, %v5167
    %v5464 = vpack.c.b16 %v5172, %v5168
    %v5465 = vpack.c.b16 %v5177, %v5173
    %v5466 = vpack.c.b16 %v5178, %v5174
    %v5467 = vpack.c.b16 %v5179, %v5175
    %v5468 = vpack.c.b16 %v5180, %v5176
    %v5469 = vpack.c.b16 %v5185, %v5181
    %v5470 = vpack.c.b16 %v5186, %v5182
    %v5471 = vpack.c.b16 %v5187, %v5183
    %v5472 = vpack.c.b16 %v5188, %v5184
    %v5473 = vpack.c.b16 %v5193, %v5189
    %v5474 = vpack.c.b16 %v5194, %v5190
    %v5475 = vpack.c.b16 %v5195, %v5191
    %v5476 = vpack.c.b16 %v5196, %v5192
    %v5477 = vpack.c.b16 %v5201, %v5197
    %v5478 = vpack.c.b16 %v5202, %v5198
    %v5479 = vpack.c.b16 %v5203, %v5199
    %v5480 = vpack.c.b16 %v5204, %v5200
    %v5481 = vpack.c.b16 %v5209, %v5205
    %v5482 = vpack.c.b16 %v5210, %v5206
    %v5483 = vpack.c.b16 %v5211, %v5207
    %v5484 = vpack.c.b16 %v5212, %v5208
    %v5485 = vpack.c.b16 %v5217, %v5213
    %v5486 = vpack.c.b16 %v5218, %v5214
    %v5487 = vpack.c.b16 %v5219, %v5215
    %v5488 = vpack.c.b16 %v5220, %v5216
    %v5489 = vpack.c.b16 %v5225, %v5221
    %v5490 = vpack.c.b16 %v5226, %v5222
    %v5491 = vpack.c.b16 %v5227, %v5223
    %v5492 = vpack.c.b16 %v5228, %v5224
    %v5493 = vpack.c.b16 %v5233, %v5229
    %v5494 = vpack.c.b16 %v5234, %v5230
    %v5495 = vpack.c.b16 %v5235, %v5231
    %v5496 = vpack.c.b16 %v5236, %v5232
    %v5497 = vpack.c.b16 %v5241, %v5237
    %v5498 = vpack.c.b16 %v5242, %v5238
    %v5499 = vpack.c.b16 %v5243, %v5239
    %v5500 = vpack.c.b16 %v5244, %v5240
    %5757 = vmatprep.subr.bf16.mxu0 %v5246
    %5758 = vmatpush1.bf16.msra.mxu0 %v5245
    %5759 = vmatprep.subr.bf16.mxu0 %v5250
    %5760 = vmatpush1.bf16.msra.mxu0 %v5249
    %5761 = vmatprep.subr.bf16.mxu0 %v5254
    %5762 = vmatpush1.bf16.msra.mxu0 %v5253
    %5763 = vmatprep.subr.bf16.mxu0 %v5258
    %5764 = vmatpush1.bf16.msra.mxu0 %v5257
    %5765 = vmatprep.subr.bf16.mxu0 %v5262
    %5766 = vmatpush1.bf16.msra.mxu0 %v5261
    %5767 = vmatprep.subr.bf16.mxu0 %v5266
    %5768 = vmatpush1.bf16.msra.mxu0 %v5265
    %5769 = vmatprep.subr.bf16.mxu0 %v5270
    %5770 = vmatpush1.bf16.msra.mxu0 %v5269
    %5771 = vmatprep.subr.bf16.mxu0 %v5274
    %5772 = vmatpush1.bf16.msra.mxu0 %v5273
    %5773 = vmatprep.subr.bf16.mxu0 %v5278
    %5774 = vmatpush1.bf16.msra.mxu0 %v5277
    %5775 = vmatprep.subr.bf16.mxu0 %v5282
    %5776 = vmatpush1.bf16.msra.mxu0 %v5281
    %5777 = vmatprep.subr.bf16.mxu0 %v5286
    %5778 = vmatpush1.bf16.msra.mxu0 %v5285
    %5779 = vmatprep.subr.bf16.mxu0 %v5290
    %5780 = vmatpush1.bf16.msra.mxu0 %v5289
    %5781 = vmatprep.subr.bf16.mxu0 %v5294
    %5782 = vmatpush1.bf16.msra.mxu0 %v5293
    %5783 = vmatprep.subr.bf16.mxu0 %v5298
    %5784 = vmatpush1.bf16.msra.mxu0 %v5297
    %5785 = vmatprep.subr.bf16.mxu0 %v5302
    %5786 = vmatpush1.bf16.msra.mxu0 %v5301
    %5787 = vmatprep.subr.bf16.mxu0 %v5306
    %5788 = vmatpush1.bf16.msra.mxu0 %v5305
    %5789 = vmatprep.mubr.bf16.mxu0 %v4192
    %5790 = vmatmul.mubr.bf16.gmra.mrb[0].mxu0 %v4191
    %v5791 = vpop.f32.mrb[0].mxu0
    %v5792 = vadd.f32 %v4460, %v5791
    %v5793 = vpop.f32.mrb[0].mxu0
    %v5794 = vadd.f32 %v4464, %v5793
    %v5795 = vpop.f32.mrb[0].mxu0
    %v5796 = vpop.f32.mrb[0].mxu0
    %5797 = vdwg.mxu0
    %5798 = vmatprep.subr.bf16.mxu0 %v5310
    %5799 = vmatpush1.bf16.msra.mxu0 %v5309
    %5800 = vmatprep.subr.bf16.mxu0 %v5314
    %5801 = vmatpush1.bf16.msra.mxu0 %v5313
    %5802 = vmatprep.subr.bf16.mxu0 %v5318
    %5803 = vmatpush1.bf16.msra.mxu0 %v5317
    %5804 = vmatprep.subr.bf16.mxu0 %v5322
    %5805 = vmatpush1.bf16.msra.mxu0 %v5321
    %5806 = vmatprep.subr.bf16.mxu0 %v5326
    %5807 = vmatpush1.bf16.msra.mxu0 %v5325
    %5808 = vmatprep.subr.bf16.mxu0 %v5330
    %5809 = vmatpush1.bf16.msra.mxu0 %v5329
    %5810 = vmatprep.subr.bf16.mxu0 %v5334
    %5811 = vmatpush1.bf16.msra.mxu0 %v5333
    %5812 = vmatprep.subr.bf16.mxu0 %v5338
    %5813 = vmatpush1.bf16.msra.mxu0 %v5337
    %5814 = vmatprep.subr.bf16.mxu0 %v5342
    %5815 = vmatpush1.bf16.msra.mxu0 %v5341
    %5816 = vmatprep.subr.bf16.mxu0 %v5346
    %5817 = vmatpush1.bf16.msra.mxu0 %v5345
    %5818 = vmatprep.subr.bf16.mxu0 %v5350
    %5819 = vmatpush1.bf16.msra.mxu0 %v5349
    %5820 = vmatprep.subr.bf16.mxu0 %v5354
    %5821 = vmatpush1.bf16.msra.mxu0 %v5353
    %5822 = vmatprep.subr.bf16.mxu0 %v5358
    %5823 = vmatpush1.bf16.msra.mxu0 %v5357
    %5824 = vmatprep.subr.bf16.mxu0 %v5362
    %5825 = vmatpush1.bf16.msra.mxu0 %v5361
    %5826 = vmatprep.subr.bf16.mxu0 %v5366
    %5827 = vmatpush1.bf16.msra.mxu0 %v5365
    %5828 = vmatprep.subr.bf16.mxu0 %v5370
    %5829 = vmatpush1.bf16.msra.mxu0 %v5369
    %5830 = vmatprep.mubr.bf16.mxu0 %v4194
    %5831 = vmatmul.mubr.bf16.gmra.mrb[0].mxu0 %v4193
    %v5832 = vpop.f32.mrb[0].mxu0
    %v5833 = vadd.f32 %v5792, %v5832
    %v5834 = vpop.f32.mrb[0].mxu0
    %v5835 = vadd.f32 %v5794, %v5834
    %v5836 = vpop.f32.mrb[0].mxu0
    %v5837 = vpop.f32.mrb[0].mxu0
    %5838 = vdwg.mxu0
    %5839 = vmatprep.subr.bf16.mxu0 %v5374
    %5840 = vmatpush1.bf16.msra.mxu0 %v5373
    %5841 = vmatprep.subr.bf16.mxu0 %v5378
    %5842 = vmatpush1.bf16.msra.mxu0 %v5377
    %5843 = vmatprep.subr.bf16.mxu0 %v5382
    %5844 = vmatpush1.bf16.msra.mxu0 %v5381
    %5845 = vmatprep.subr.bf16.mxu0 %v5386
    %5846 = vmatpush1.bf16.msra.mxu0 %v5385
    %5847 = vmatprep.subr.bf16.mxu0 %v5390
    %5848 = vmatpush1.bf16.msra.mxu0 %v5389
    %5849 = vmatprep.subr.bf16.mxu0 %v5394
    %5850 = vmatpush1.bf16.msra.mxu0 %v5393
    %5851 = vmatprep.subr.bf16.mxu0 %v5398
    %5852 = vmatpush1.bf16.msra.mxu0 %v5397
    %5853 = vmatprep.subr.bf16.mxu0 %v5402
    %5854 = vmatpush1.bf16.msra.mxu0 %v5401
    %5855 = vmatprep.subr.bf16.mxu0 %v5406
    %5856 = vmatpush1.bf16.msra.mxu0 %v5405
    %5857 = vmatprep.subr.bf16.mxu0 %v5410
    %5858 = vmatpush1.bf16.msra.mxu0 %v5409
    %5859 = vmatprep.subr.bf16.mxu0 %v5414
    %5860 = vmatpush1.bf16.msra.mxu0 %v5413
    %5861 = vmatprep.subr.bf16.mxu0 %v5418
    %5862 = vmatpush1.bf16.msra.mxu0 %v5417
    %5863 = vmatprep.subr.bf16.mxu0 %v5422
    %5864 = vmatpush1.bf16.msra.mxu0 %v5421
    %5865 = vmatprep.subr.bf16.mxu0 %v5426
    %5866 = vmatpush1.bf16.msra.mxu0 %v5425
    %5867 = vmatprep.subr.bf16.mxu0 %v5430
    %5868 = vmatpush1.bf16.msra.mxu0 %v5429
    %5869 = vmatprep.subr.bf16.mxu0 %v5434
    %5870 = vmatpush1.bf16.msra.mxu0 %v5433
    %5871 = vmatprep.mubr.bf16.mxu0 %v4196
    %5872 = vmatmul.mubr.bf16.gmra.mrb[0].mxu0 %v4195
    %v5873 = vpop.f32.mrb[0].mxu0
    %v5874 = vadd.f32 %v5833, %v5873
    %v5875 = vpop.f32.mrb[0].mxu0
    %v5876 = vadd.f32 %v5835, %v5875
    %v5877 = vpop.f32.mrb[0].mxu0
    %v5878 = vpop.f32.mrb[0].mxu0
    %5879 = vdwg.mxu0
    %5880 = vmatprep.subr.bf16.mxu0 %v5438
    %5881 = vmatpush1.bf16.msra.mxu0 %v5437
    %5882 = vmatprep.subr.bf16.mxu0 %v5442
    %5883 = vmatpush1.bf16.msra.mxu0 %v5441
    %5884 = vmatprep.subr.bf16.mxu0 %v5446
    %5885 = vmatpush1.bf16.msra.mxu0 %v5445
    %5886 = vmatprep.subr.bf16.mxu0 %v5450
    %5887 = vmatpush1.bf16.msra.mxu0 %v5449
    %5888 = vmatprep.subr.bf16.mxu0 %v5454
    %5889 = vmatpush1.bf16.msra.mxu0 %v5453
    %5890 = vmatprep.subr.bf16.mxu0 %v5458
    %5891 = vmatpush1.bf16.msra.mxu0 %v5457
    %5892 = vmatprep.subr.bf16.mxu0 %v5462
    %5893 = vmatpush1.bf16.msra.mxu0 %v5461
    %5894 = vmatprep.subr.bf16.mxu0 %v5466
    %5895 = vmatpush1.bf16.msra.mxu0 %v5465
    %5896 = vmatprep.subr.bf16.mxu0 %v5470
    %5897 = vmatpush1.bf16.msra.mxu0 %v5469
    %5898 = vmatprep.subr.bf16.mxu0 %v5474
    %5899 = vmatpush1.bf16.msra.mxu0 %v5473
    %5900 = vmatprep.subr.bf16.mxu0 %v5478
    %5901 = vmatpush1.bf16.msra.mxu0 %v5477
    %5902 = vmatprep.subr.bf16.mxu0 %v5482
    %5903 = vmatpush1.bf16.msra.mxu0 %v5481
    %5904 = vmatprep.subr.bf16.mxu0 %v5486
    %5905 = vmatpush1.bf16.msra.mxu0 %v5485
    %5906 = vmatprep.subr.bf16.mxu0 %v5490
    %5907 = vmatpush1.bf16.msra.mxu0 %v5489
    %5908 = vmatprep.subr.bf16.mxu0 %v5494
    %5909 = vmatpush1.bf16.msra.mxu0 %v5493
    %5910 = vmatprep.subr.bf16.mxu0 %v5498
    %5911 = vmatpush1.bf16.msra.mxu0 %v5497
    %5912 = vmatprep.mubr.bf16.mxu0 %v4198
    %5913 = vmatmul.mubr.bf16.gmra.mrb[0].mxu0 %v4197
    %v5914 = vpop.f32.mrb[0].mxu0
    %v5915 = vadd.f32 %v5874, %v5914
    %v5916 = vpop.f32.mrb[0].mxu0
    %v5917 = vadd.f32 %v5876, %v5916
    %v5918 = vpop.f32.mrb[0].mxu0
    %v5919 = vpop.f32.mrb[0].mxu0
    %5920 = vdwg.mxu0
    %5921 = vmatprep.subr.bf16.mxu0 %v5248
    %5922 = vmatpush1.bf16.msra.mxu0 %v5247
    %5923 = vmatprep.subr.bf16.mxu0 %v5252
    %5924 = vmatpush1.bf16.msra.mxu0 %v5251
    %5925 = vmatprep.subr.bf16.mxu0 %v5256
    %5926 = vmatpush1.bf16.msra.mxu0 %v5255
    %5927 = vmatprep.subr.bf16.mxu0 %v5260
    %5928 = vmatpush1.bf16.msra.mxu0 %v5259
    %5929 = vmatprep.subr.bf16.mxu0 %v5264
    %5930 = vmatpush1.bf16.msra.mxu0 %v5263
    %5931 = vmatprep.subr.bf16.mxu0 %v5268
    %5932 = vmatpush1.bf16.msra.mxu0 %v5267
    %5933 = vmatprep.subr.bf16.mxu0 %v5272
    %5934 = vmatpush1.bf16.msra.mxu0 %v5271
    %5935 = vmatprep.subr.bf16.mxu0 %v5276
    %5936 = vmatpush1.bf16.msra.mxu0 %v5275
    %5937 = vmatprep.subr.bf16.mxu0 %v5280
    %5938 = vmatpush1.bf16.msra.mxu0 %v5279
    %5939 = vmatprep.subr.bf16.mxu0 %v5284
    %5940 = vmatpush1.bf16.msra.mxu0 %v5283
    %5941 = vmatprep.subr.bf16.mxu0 %v5288
    %5942 = vmatpush1.bf16.msra.mxu0 %v5287
    %5943 = vmatprep.subr.bf16.mxu0 %v5292
    %5944 = vmatpush1.bf16.msra.mxu0 %v5291
    %5945 = vmatprep.subr.bf16.mxu0 %v5296
    %5946 = vmatpush1.bf16.msra.mxu0 %v5295
    %5947 = vmatprep.subr.bf16.mxu0 %v5300
    %5948 = vmatpush1.bf16.msra.mxu0 %v5299
    %5949 = vmatprep.subr.bf16.mxu0 %v5304
    %5950 = vmatpush1.bf16.msra.mxu0 %v5303
    %5951 = vmatprep.subr.bf16.mxu0 %v5308
    %5952 = vmatpush1.bf16.msra.mxu0 %v5307
    %5953 = vmatprep.mubr.bf16.mxu0 %v4192
    %5954 = vmatmul.mubr.bf16.gmra.mrb[0].mxu0 %v4191
    %v5955 = vpop.f32.mrb[0].mxu0
    %v5956 = vadd.f32 %v4468, %v5955
    %v5957 = vpop.f32.mrb[0].mxu0
    %v5958 = vadd.f32 %v4472, %v5957
    %v5959 = vpop.f32.mrb[0].mxu0
    %v5960 = vpop.f32.mrb[0].mxu0
    %5961 = vdwg.mxu0
    %5962 = vmatprep.subr.bf16.mxu0 %v5312
    %5963 = vmatpush1.bf16.msra.mxu0 %v5311
    %5964 = vmatprep.subr.bf16.mxu0 %v5316
    %5965 = vmatpush1.bf16.msra.mxu0 %v5315
    %5966 = vmatprep.subr.bf16.mxu0 %v5320
    %5967 = vmatpush1.bf16.msra.mxu0 %v5319
    %5968 = vmatprep.subr.bf16.mxu0 %v5324
    %5969 = vmatpush1.bf16.msra.mxu0 %v5323
    %5970 = vmatprep.subr.bf16.mxu0 %v5328
    %5971 = vmatpush1.bf16.msra.mxu0 %v5327
    %5972 = vmatprep.subr.bf16.mxu0 %v5332
    %5973 = vmatpush1.bf16.msra.mxu0 %v5331
    %5974 = vmatprep.subr.bf16.mxu0 %v5336
    %5975 = vmatpush1.bf16.msra.mxu0 %v5335
    %5976 = vmatprep.subr.bf16.mxu0 %v5340
    %5977 = vmatpush1.bf16.msra.mxu0 %v5339
    %5978 = vmatprep.subr.bf16.mxu0 %v5344
    %5979 = vmatpush1.bf16.msra.mxu0 %v5343
    %5980 = vmatprep.subr.bf16.mxu0 %v5348
    %5981 = vmatpush1.bf16.msra.mxu0 %v5347
    %5982 = vmatprep.subr.bf16.mxu0 %v5352
    %5983 = vmatpush1.bf16.msra.mxu0 %v5351
    %5984 = vmatprep.subr.bf16.mxu0 %v5356
    %5985 = vmatpush1.bf16.msra.mxu0 %v5355
    %5986 = vmatprep.subr.bf16.mxu0 %v5360
    %5987 = vmatpush1.bf16.msra.mxu0 %v5359
    %5988 = vmatprep.subr.bf16.mxu0 %v5364
    %5989 = vmatpush1.bf16.msra.mxu0 %v5363
    %5990 = vmatprep.subr.bf16.mxu0 %v5368
    %5991 = vmatpush1.bf16.msra.mxu0 %v5367
    %5992 = vmatprep.subr.bf16.mxu0 %v5372
    %5993 = vmatpush1.bf16.msra.mxu0 %v5371
    %5994 = vmatprep.mubr.bf16.mxu0 %v4194
    %5995 = vmatmul.mubr.bf16.gmra.mrb[0].mxu0 %v4193
    %v5996 = vpop.f32.mrb[0].mxu0
    %v5997 = vadd.f32 %v5956, %v5996
    %v5998 = vpop.f32.mrb[0].mxu0
    %v5999 = vadd.f32 %v5958, %v5998
    %v6000 = vpop.f32.mrb[0].mxu0
    %v6001 = vpop.f32.mrb[0].mxu0
    %6002 = vdwg.mxu0
    %6003 = vmatprep.subr.bf16.mxu0 %v5376
    %6004 = vmatpush1.bf16.msra.mxu0 %v5375
    %6005 = vmatprep.subr.bf16.mxu0 %v5380
    %6006 = vmatpush1.bf16.msra.mxu0 %v5379
    %6007 = vmatprep.subr.bf16.mxu0 %v5384
    %6008 = vmatpush1.bf16.msra.mxu0 %v5383
    %6009 = vmatprep.subr.bf16.mxu0 %v5388
    %6010 = vmatpush1.bf16.msra.mxu0 %v5387
    %6011 = vmatprep.subr.bf16.mxu0 %v5392
    %6012 = vmatpush1.bf16.msra.mxu0 %v5391
    %6013 = vmatprep.subr.bf16.mxu0 %v5396
    %6014 = vmatpush1.bf16.msra.mxu0 %v5395
    %6015 = vmatprep.subr.bf16.mxu0 %v5400
    %6016 = vmatpush1.bf16.msra.mxu0 %v5399
    %6017 = vmatprep.subr.bf16.mxu0 %v5404
    %6018 = vmatpush1.bf16.msra.mxu0 %v5403
    %6019 = vmatprep.subr.bf16.mxu0 %v5408
    %6020 = vmatpush1.bf16.msra.mxu0 %v5407
    %6021 = vmatprep.subr.bf16.mxu0 %v5412
    %6022 = vmatpush1.bf16.msra.mxu0 %v5411
    %6023 = vmatprep.subr.bf16.mxu0 %v5416
    %6024 = vmatpush1.bf16.msra.mxu0 %v5415
    %6025 = vmatprep.subr.bf16.mxu0 %v5420
    %6026 = vmatpush1.bf16.msra.mxu0 %v5419
    %6027 = vmatprep.subr.bf16.mxu0 %v5424
    %6028 = vmatpush1.bf16.msra.mxu0 %v5423
    %6029 = vmatprep.subr.bf16.mxu0 %v5428
    %6030 = vmatpush1.bf16.msra.mxu0 %v5427
    %6031 = vmatprep.subr.bf16.mxu0 %v5432
    %6032 = vmatpush1.bf16.msra.mxu0 %v5431
    %6033 = vmatprep.subr.bf16.mxu0 %v5436
    %6034 = vmatpush1.bf16.msra.mxu0 %v5435
    %6035 = vmatprep.mubr.bf16.mxu0 %v4196
    %6036 = vmatmul.mubr.bf16.gmra.mrb[0].mxu0 %v4195
    %v6037 = vpop.f32.mrb[0].mxu0
    %v6038 = vadd.f32 %v5997, %v6037
    %v6039 = vpop.f32.mrb[0].mxu0
    %v6040 = vadd.f32 %v5999, %v6039
    %v6041 = vpop.f32.mrb[0].mxu0
    %v6042 = vpop.f32.mrb[0].mxu0
    %6043 = vdwg.mxu0
    %6044 = vmatprep.subr.bf16.mxu0 %v5440
    %6045 = vmatpush1.bf16.msra.mxu0 %v5439
    %6046 = vmatprep.subr.bf16.mxu0 %v5444
    %6047 = vmatpush1.bf16.msra.mxu0 %v5443
    %6048 = vmatprep.subr.bf16.mxu0 %v5448
    %6049 = vmatpush1.bf16.msra.mxu0 %v5447
    %6050 = vmatprep.subr.bf16.mxu0 %v5452
    %6051 = vmatpush1.bf16.msra.mxu0 %v5451
    %6052 = vmatprep.subr.bf16.mxu0 %v5456
    %6053 = vmatpush1.bf16.msra.mxu0 %v5455
    %6054 = vmatprep.subr.bf16.mxu0 %v5460
    %6055 = vmatpush1.bf16.msra.mxu0 %v5459
    %6056 = vmatprep.subr.bf16.mxu0 %v5464
    %6057 = vmatpush1.bf16.msra.mxu0 %v5463
    %6058 = vmatprep.subr.bf16.mxu0 %v5468
    %6059 = vmatpush1.bf16.msra.mxu0 %v5467
    %6060 = vmatprep.subr.bf16.mxu0 %v5472
    %6061 = vmatpush1.bf16.msra.mxu0 %v5471
    %6062 = vmatprep.subr.bf16.mxu0 %v5476
    %6063 = vmatpush1.bf16.msra.mxu0 %v5475
    %6064 = vmatprep.subr.bf16.mxu0 %v5480
    %6065 = vmatpush1.bf16.msra.mxu0 %v5479
    %6066 = vmatprep.subr.bf16.mxu0 %v5484
    %6067 = vmatpush1.bf16.msra.mxu0 %v5483
    %6068 = vmatprep.subr.bf16.mxu0 %v5488
    %6069 = vmatpush1.bf16.msra.mxu0 %v5487
    %6070 = vmatprep.subr.bf16.mxu0 %v5492
    %6071 = vmatpush1.bf16.msra.mxu0 %v5491
    %6072 = vmatprep.subr.bf16.mxu0 %v5496
    %6073 = vmatpush1.bf16.msra.mxu0 %v5495
    %6074 = vmatprep.subr.bf16.mxu0 %v5500
    %6075 = vmatpush1.bf16.msra.mxu0 %v5499
    %6076 = vmatprep.mubr.bf16.mxu0 %v4198
    %6077 = vmatmul.mubr.bf16.gmra.mrb[0].mxu0 %v4197
    %v6078 = vpop.f32.mrb[0].mxu0
    %v6079 = vadd.f32 %v6038, %v6078
    %v6080 = vpop.f32.mrb[0].mxu0
    %v6081 = vadd.f32 %v6040, %v6080
    %v6082 = vpop.f32.mrb[0].mxu0
    %v6083 = vpop.f32.mrb[0].mxu0
    %6084 = vdwg.mxu0
    %vm6085 = vcmp.ge.f32.partialorder %v5915, 0.0
    %vm6086 = vcmp.ge.f32.partialorder %v5917, 0.0
    %vm6087 = vcmp.ge.f32.partialorder %v6079, 0.0
    %vm6088 = vcmp.ge.f32.partialorder %v6081, 0.0
    %v6089 = vmul.f32 %v5915, 0.2
    %v6090 = vmul.f32 %v5917, 0.2
    %v6091 = vmul.f32 %v6079, 0.2
    %v6092 = vmul.f32 %v6081, 0.2
    %v6093 = vsel %vm6085, %v5915, %v6089
    %v6094 = vsel %vm6086, %v5917, %v6090
    %v6095 = vsel %vm6087, %v6079, %v6091
    %v6096 = vsel %vm6088, %v6081, %v6092
    %v6097 = vld [vmem:[#allocation12] sm:$0xf]
    %v6099 = vlaneseq
    %v6100 = vshrl.u32 %v6099, 7
    %v6101 = vsub.s32 0, %v6100
    %v6102 = vrot.slane %v6097, %v6101
    %v6103 = vlaneseq
    %v6104 = vshrl.u32 %v6103, 7
    %v6105 = vsub.s32 1, %v6104
    %v6106 = vrot.slane %v6097, %v6105
    %v6107 = vlaneseq
    %v6108 = vshrl.u32 %v6107, 7
    %v6109 = vsub.s32 2, %v6108
    %v6110 = vrot.slane %v6097, %v6109
    %v6111 = vlaneseq
    %v6112 = vshrl.u32 %v6111, 7
    %v6113 = vsub.s32 3, %v6112
    %v6114 = vrot.slane %v6097, %v6113
    %v6119 = vmul.f32 %v6093, %v6102
    %v6120 = vmul.f32 %v6094, %v6106
    %v6121 = vmul.f32 %v6095, %v6110
    %v6122 = vmul.f32 %v6096, %v6114
    %v6123 = vld [vmem:[#allocation13] sm:$0xf]
    %v6125 = vlaneseq
    %v6126 = vshrl.u32 %v6125, 7
    %v6127 = vsub.s32 0, %v6126
    %v6128 = vrot.slane %v6123, %v6127
    %v6129 = vlaneseq
    %v6130 = vshrl.u32 %v6129, 7
    %v6131 = vsub.s32 1, %v6130
    %v6132 = vrot.slane %v6123, %v6131
    %v6133 = vlaneseq
    %v6134 = vshrl.u32 %v6133, 7
    %v6135 = vsub.s32 2, %v6134
    %v6136 = vrot.slane %v6123, %v6135
    %v6137 = vlaneseq
    %v6138 = vshrl.u32 %v6137, 7
    %v6139 = vsub.s32 3, %v6138
    %v6140 = vrot.slane %v6123, %v6139
    %v6145 = vadd.f32 %v6119, %v6128
    %v6146 = vadd.f32 %v6120, %v6132
    %v6147 = vadd.f32 %v6121, %v6136
    %v6148 = vadd.f32 %v6122, %v6140
    %v6149 = vpack.c.bf16 %v6145, %v6145
    %v6150 = vpack.c.bf16 %v6146, %v6146
    %v6151 = vpack.c.bf16 %v6147, %v6147
    %v6152 = vpack.c.bf16 %v6148, %v6148
    %v6153 = vld [vmem:[#allocation15] sm:$0xff]
    %v6154 = vld [vmem:[#allocation15 + $0x8] sm:$0xff]
    %v6155 = vld [vmem:[#allocation15 + $0x10] sm:$0xff]
    %v6156 = vld [vmem:[#allocation15 + $0x18] sm:$0xff]
    %v6157 = vld [vmem:[#allocation15 + $0x20] sm:$0xff]
    %v6158 = vld [vmem:[#allocation15 + $0x28] sm:$0xff]
    %v6159 = vld [vmem:[#allocation15 + $0x30] sm:$0xff]
    %v6160 = vld [vmem:[#allocation15 + $0x38] sm:$0xff]
    %v6161 = vld [vmem:[#allocation15 + $0x40] sm:$0xff]
    %v6162 = vld [vmem:[#allocation15 + $0x48] sm:$0xff]
    %v6163 = vld [vmem:[#allocation15 + $0x50] sm:$0xff]
    %v6164 = vld [vmem:[#allocation15 + $0x58] sm:$0xff]
    %v6165 = vld [vmem:[#allocation15 + $0x60] sm:$0xff]
    %v6166 = vld [vmem:[#allocation15 + $0x68] sm:$0xff]
    %v6167 = vld [vmem:[#allocation15 + $0x70] sm:$0xff]
    %v6168 = vld [vmem:[#allocation15 + $0x78] sm:$0xff]
    %v6169 = vld [vmem:[#allocation15 + $0x80] sm:$0xff]
    %v6170 = vld [vmem:[#allocation15 + $0x88] sm:$0xff]
    %v6171 = vld [vmem:[#allocation15 + $0x90] sm:$0xff]
    %v6172 = vld [vmem:[#allocation15 + $0x98] sm:$0xff]
    %v6173 = vld [vmem:[#allocation15 + $0xa0] sm:$0xff]
    %v6174 = vld [vmem:[#allocation15 + $0xa8] sm:$0xff]
    %v6175 = vld [vmem:[#allocation15 + $0xb0] sm:$0xff]
    %v6176 = vld [vmem:[#allocation15 + $0xb8] sm:$0xff]
    %v6177 = vld [vmem:[#allocation15 + $0xc0] sm:$0xff]
    %v6178 = vld [vmem:[#allocation15 + $0xc8] sm:$0xff]
    %v6179 = vld [vmem:[#allocation15 + $0xd0] sm:$0xff]
    %v6180 = vld [vmem:[#allocation15 + $0xd8] sm:$0xff]
    %v6181 = vld [vmem:[#allocation15 + $0xe0] sm:$0xff]
    %v6182 = vld [vmem:[#allocation15 + $0xe8] sm:$0xff]
    %v6183 = vld [vmem:[#allocation15 + $0xf0] sm:$0xff]
    %v6184 = vld [vmem:[#allocation15 + $0xf8] sm:$0xff]
    %v6185 = vld [vmem:[#allocation15 + $0x100] sm:$0xff]
    %v6186 = vld [vmem:[#allocation15 + $0x108] sm:$0xff]
    %v6187 = vld [vmem:[#allocation15 + $0x110] sm:$0xff]
    %v6188 = vld [vmem:[#allocation15 + $0x118] sm:$0xff]
    %v6189 = vld [vmem:[#allocation15 + $0x120] sm:$0xff]
    %v6190 = vld [vmem:[#allocation15 + $0x128] sm:$0xff]
    %v6191 = vld [vmem:[#allocation15 + $0x130] sm:$0xff]
    %v6192 = vld [vmem:[#allocation15 + $0x138] sm:$0xff]
    %v6193 = vld [vmem:[#allocation15 + $0x140] sm:$0xff]
    %v6194 = vld [vmem:[#allocation15 + $0x148] sm:$0xff]
    %v6195 = vld [vmem:[#allocation15 + $0x150] sm:$0xff]
    %v6196 = vld [vmem:[#allocation15 + $0x158] sm:$0xff]
    %v6197 = vld [vmem:[#allocation15 + $0x160] sm:$0xff]
    %v6198 = vld [vmem:[#allocation15 + $0x168] sm:$0xff]
    %v6199 = vld [vmem:[#allocation15 + $0x170] sm:$0xff]
    %v6200 = vld [vmem:[#allocation15 + $0x178] sm:$0xff]
    %v6201 = vld [vmem:[#allocation15 + $0x180] sm:$0xff]
    %v6202 = vld [vmem:[#allocation15 + $0x188] sm:$0xff]
    %v6203 = vld [vmem:[#allocation15 + $0x190] sm:$0xff]
    %v6204 = vld [vmem:[#allocation15 + $0x198] sm:$0xff]
    %v6205 = vld [vmem:[#allocation15 + $0x1a0] sm:$0xff]
    %v6206 = vld [vmem:[#allocation15 + $0x1a8] sm:$0xff]
    %v6207 = vld [vmem:[#allocation15 + $0x1b0] sm:$0xff]
    %v6208 = vld [vmem:[#allocation15 + $0x1b8] sm:$0xff]
    %v6209 = vld [vmem:[#allocation15 + $0x1c0] sm:$0xff]
    %v6210 = vld [vmem:[#allocation15 + $0x1c8] sm:$0xff]
    %v6211 = vld [vmem:[#allocation15 + $0x1d0] sm:$0xff]
    %v6212 = vld [vmem:[#allocation15 + $0x1d8] sm:$0xff]
    %v6213 = vld [vmem:[#allocation15 + $0x1e0] sm:$0xff]
    %v6214 = vld [vmem:[#allocation15 + $0x1e8] sm:$0xff]
    %v6215 = vld [vmem:[#allocation15 + $0x1f0] sm:$0xff]
    %v6216 = vld [vmem:[#allocation15 + $0x1f8] sm:$0xff]
    %v6217 = vld [vmem:[#allocation16] sm:$0x3]
    %v6219 = vlaneseq
    %v6220 = vshrl.u32 %v6219, 7
    %v6221 = vsub.s32 0, %v6220
    %v6222 = vrot.slane %v6217, %v6221
    %v6223 = vlaneseq
    %v6224 = vshrl.u32 %v6223, 7
    %v6225 = vsub.s32 1, %v6224
    %v6226 = vrot.slane %v6217, %v6225
    %v6293 = vunpack.c.l.b16 %v6153
    %v6294 = vunpack.c.h.b16 %v6153
    %v6295 = vunpack.c.l.b16 %v6154
    %v6296 = vunpack.c.h.b16 %v6154
    %v6297 = vunpack.c.l.b16 %v6155
    %v6298 = vunpack.c.h.b16 %v6155
    %v6299 = vunpack.c.l.b16 %v6156
    %v6300 = vunpack.c.h.b16 %v6156
    %v6301 = vunpack.c.l.b16 %v6157
    %v6302 = vunpack.c.h.b16 %v6157
    %v6303 = vunpack.c.l.b16 %v6158
    %v6304 = vunpack.c.h.b16 %v6158
    %v6305 = vunpack.c.l.b16 %v6159
    %v6306 = vunpack.c.h.b16 %v6159
    %v6307 = vunpack.c.l.b16 %v6160
    %v6308 = vunpack.c.h.b16 %v6160
    %v6309 = vunpack.c.l.b16 %v6161
    %v6310 = vunpack.c.h.b16 %v6161
    %v6311 = vunpack.c.l.b16 %v6162
    %v6312 = vunpack.c.h.b16 %v6162
    %v6313 = vunpack.c.l.b16 %v6163
    %v6314 = vunpack.c.h.b16 %v6163
    %v6315 = vunpack.c.l.b16 %v6164
    %v6316 = vunpack.c.h.b16 %v6164
    %v6317 = vunpack.c.l.b16 %v6165
    %v6318 = vunpack.c.h.b16 %v6165
    %v6319 = vunpack.c.l.b16 %v6166
    %v6320 = vunpack.c.h.b16 %v6166
    %v6321 = vunpack.c.l.b16 %v6167
    %v6322 = vunpack.c.h.b16 %v6167
    %v6323 = vunpack.c.l.b16 %v6168
    %v6324 = vunpack.c.h.b16 %v6168
    %v6325 = vunpack.c.l.b16 %v6169
    %v6326 = vunpack.c.h.b16 %v6169
    %v6327 = vunpack.c.l.b16 %v6170
    %v6328 = vunpack.c.h.b16 %v6170
    %v6329 = vunpack.c.l.b16 %v6171
    %v6330 = vunpack.c.h.b16 %v6171
    %v6331 = vunpack.c.l.b16 %v6172
    %v6332 = vunpack.c.h.b16 %v6172
    %v6333 = vunpack.c.l.b16 %v6173
    %v6334 = vunpack.c.h.b16 %v6173
    %v6335 = vunpack.c.l.b16 %v6174
    %v6336 = vunpack.c.h.b16 %v6174
    %v6337 = vunpack.c.l.b16 %v6175
    %v6338 = vunpack.c.h.b16 %v6175
    %v6339 = vunpack.c.l.b16 %v6176
    %v6340 = vunpack.c.h.b16 %v6176
    %v6341 = vunpack.c.l.b16 %v6177
    %v6342 = vunpack.c.h.b16 %v6177
    %v6343 = vunpack.c.l.b16 %v6178
    %v6344 = vunpack.c.h.b16 %v6178
    %v6345 = vunpack.c.l.b16 %v6179
    %v6346 = vunpack.c.h.b16 %v6179
    %v6347 = vunpack.c.l.b16 %v6180
    %v6348 = vunpack.c.h.b16 %v6180
    %v6349 = vunpack.c.l.b16 %v6181
    %v6350 = vunpack.c.h.b16 %v6181
    %v6351 = vunpack.c.l.b16 %v6182
    %v6352 = vunpack.c.h.b16 %v6182
    %v6353 = vunpack.c.l.b16 %v6183
    %v6354 = vunpack.c.h.b16 %v6183
    %v6355 = vunpack.c.l.b16 %v6184
    %v6356 = vunpack.c.h.b16 %v6184
    %v6357 = vunpack.c.l.b16 %v6185
    %v6358 = vunpack.c.h.b16 %v6185
    %v6359 = vunpack.c.l.b16 %v6186
    %v6360 = vunpack.c.h.b16 %v6186
    %v6361 = vunpack.c.l.b16 %v6187
    %v6362 = vunpack.c.h.b16 %v6187
    %v6363 = vunpack.c.l.b16 %v6188
    %v6364 = vunpack.c.h.b16 %v6188
    %v6365 = vunpack.c.l.b16 %v6189
    %v6366 = vunpack.c.h.b16 %v6189
    %v6367 = vunpack.c.l.b16 %v6190
    %v6368 = vunpack.c.h.b16 %v6190
    %v6369 = vunpack.c.l.b16 %v6191
    %v6370 = vunpack.c.h.b16 %v6191
    %v6371 = vunpack.c.l.b16 %v6192
    %v6372 = vunpack.c.h.b16 %v6192
    %v6373 = vunpack.c.l.b16 %v6193
    %v6374 = vunpack.c.h.b16 %v6193
    %v6375 = vunpack.c.l.b16 %v6194
    %v6376 = vunpack.c.h.b16 %v6194
    %v6377 = vunpack.c.l.b16 %v6195
    %v6378 = vunpack.c.h.b16 %v6195
    %v6379 = vunpack.c.l.b16 %v6196
    %v6380 = vunpack.c.h.b16 %v6196
    %v6381 = vunpack.c.l.b16 %v6197
    %v6382 = vunpack.c.h.b16 %v6197
    %v6383 = vunpack.c.l.b16 %v6198
    %v6384 = vunpack.c.h.b16 %v6198
    %v6385 = vunpack.c.l.b16 %v6199
    %v6386 = vunpack.c.h.b16 %v6199
    %v6387 = vunpack.c.l.b16 %v6200
    %v6388 = vunpack.c.h.b16 %v6200
    %v6389 = vunpack.c.l.b16 %v6201
    %v6390 = vunpack.c.h.b16 %v6201
    %v6391 = vunpack.c.l.b16 %v6202
    %v6392 = vunpack.c.h.b16 %v6202
    %v6393 = vunpack.c.l.b16 %v6203
    %v6394 = vunpack.c.h.b16 %v6203
    %v6395 = vunpack.c.l.b16 %v6204
    %v6396 = vunpack.c.h.b16 %v6204
    %v6397 = vunpack.c.l.b16 %v6205
    %v6398 = vunpack.c.h.b16 %v6205
    %v6399 = vunpack.c.l.b16 %v6206
    %v6400 = vunpack.c.h.b16 %v6206
    %v6401 = vunpack.c.l.b16 %v6207
    %v6402 = vunpack.c.h.b16 %v6207
    %v6403 = vunpack.c.l.b16 %v6208
    %v6404 = vunpack.c.h.b16 %v6208
    %v6405 = vunpack.c.l.b16 %v6209
    %v6406 = vunpack.c.h.b16 %v6209
    %v6407 = vunpack.c.l.b16 %v6210
    %v6408 = vunpack.c.h.b16 %v6210
    %v6409 = vunpack.c.l.b16 %v6211
    %v6410 = vunpack.c.h.b16 %v6211
    %v6411 = vunpack.c.l.b16 %v6212
    %v6412 = vunpack.c.h.b16 %v6212
    %v6413 = vunpack.c.l.b16 %v6213
    %v6414 = vunpack.c.h.b16 %v6213
    %v6415 = vunpack.c.l.b16 %v6214
    %v6416 = vunpack.c.h.b16 %v6214
    %v6417 = vunpack.c.l.b16 %v6215
    %v6418 = vunpack.c.h.b16 %v6215
    %v6419 = vunpack.c.l.b16 %v6216
    %v6420 = vunpack.c.h.b16 %v6216
    %v6421 = vpack.c.b16 %v6295, %v6293
    %v6422 = vpack.c.b16 %v6296, %v6294
    %v6423 = vpack.c.b16 %v6299, %v6297
    %v6424 = vpack.c.b16 %v6300, %v6298
    %v6425 = vpack.c.b16 %v6303, %v6301
    %v6426 = vpack.c.b16 %v6304, %v6302
    %v6427 = vpack.c.b16 %v6307, %v6305
    %v6428 = vpack.c.b16 %v6308, %v6306
    %v6429 = vpack.c.b16 %v6311, %v6309
    %v6430 = vpack.c.b16 %v6312, %v6310
    %v6431 = vpack.c.b16 %v6315, %v6313
    %v6432 = vpack.c.b16 %v6316, %v6314
    %v6433 = vpack.c.b16 %v6319, %v6317
    %v6434 = vpack.c.b16 %v6320, %v6318
    %v6435 = vpack.c.b16 %v6323, %v6321
    %v6436 = vpack.c.b16 %v6324, %v6322
    %v6437 = vpack.c.b16 %v6327, %v6325
    %v6438 = vpack.c.b16 %v6328, %v6326
    %v6439 = vpack.c.b16 %v6331, %v6329
    %v6440 = vpack.c.b16 %v6332, %v6330
    %v6441 = vpack.c.b16 %v6335, %v6333
    %v6442 = vpack.c.b16 %v6336, %v6334
    %v6443 = vpack.c.b16 %v6339, %v6337
    %v6444 = vpack.c.b16 %v6340, %v6338
    %v6445 = vpack.c.b16 %v6343, %v6341
    %v6446 = vpack.c.b16 %v6344, %v6342
    %v6447 = vpack.c.b16 %v6347, %v6345
    %v6448 = vpack.c.b16 %v6348, %v6346
    %v6449 = vpack.c.b16 %v6351, %v6349
    %v6450 = vpack.c.b16 %v6352, %v6350
    %v6451 = vpack.c.b16 %v6355, %v6353
    %v6452 = vpack.c.b16 %v6356, %v6354
    %v6453 = vpack.c.b16 %v6359, %v6357
    %v6454 = vpack.c.b16 %v6360, %v6358
    %v6455 = vpack.c.b16 %v6363, %v6361
    %v6456 = vpack.c.b16 %v6364, %v6362
    %v6457 = vpack.c.b16 %v6367, %v6365
    %v6458 = vpack.c.b16 %v6368, %v6366
    %v6459 = vpack.c.b16 %v6371, %v6369
    %v6460 = vpack.c.b16 %v6372, %v6370
    %v6461 = vpack.c.b16 %v6375, %v6373
    %v6462 = vpack.c.b16 %v6376, %v6374
    %v6463 = vpack.c.b16 %v6379, %v6377
    %v6464 = vpack.c.b16 %v6380, %v6378
    %v6465 = vpack.c.b16 %v6383, %v6381
    %v6466 = vpack.c.b16 %v6384, %v6382
    %v6467 = vpack.c.b16 %v6387, %v6385
    %v6468 = vpack.c.b16 %v6388, %v6386
    %v6469 = vpack.c.b16 %v6391, %v6389
    %v6470 = vpack.c.b16 %v6392, %v6390
    %v6471 = vpack.c.b16 %v6395, %v6393
    %v6472 = vpack.c.b16 %v6396, %v6394
    %v6473 = vpack.c.b16 %v6399, %v6397
    %v6474 = vpack.c.b16 %v6400, %v6398
    %v6475 = vpack.c.b16 %v6403, %v6401
    %v6476 = vpack.c.b16 %v6404, %v6402
    %v6477 = vpack.c.b16 %v6407, %v6405
    %v6478 = vpack.c.b16 %v6408, %v6406
    %v6479 = vpack.c.b16 %v6411, %v6409
    %v6480 = vpack.c.b16 %v6412, %v6410
    %v6481 = vpack.c.b16 %v6415, %v6413
    %v6482 = vpack.c.b16 %v6416, %v6414
    %v6483 = vpack.c.b16 %v6419, %v6417
    %v6484 = vpack.c.b16 %v6420, %v6418
    %6549 = vmatprep.subr.bf16.mxu0 %v6422
    %6550 = vmatpush1.bf16.msra.mxu0 %v6421
    %6551 = vmatprep.subr.bf16.mxu0 %v6424
    %6552 = vmatpush1.bf16.msra.mxu0 %v6423
    %6553 = vmatprep.subr.bf16.mxu0 %v6426
    %6554 = vmatpush1.bf16.msra.mxu0 %v6425
    %6555 = vmatprep.subr.bf16.mxu0 %v6428
    %6556 = vmatpush1.bf16.msra.mxu0 %v6427
    %6557 = vmatprep.subr.bf16.mxu0 %v6430
    %6558 = vmatpush1.bf16.msra.mxu0 %v6429
    %6559 = vmatprep.subr.bf16.mxu0 %v6432
    %6560 = vmatpush1.bf16.msra.mxu0 %v6431
    %6561 = vmatprep.subr.bf16.mxu0 %v6434
    %6562 = vmatpush1.bf16.msra.mxu0 %v6433
    %6563 = vmatprep.subr.bf16.mxu0 %v6436
    %6564 = vmatpush1.bf16.msra.mxu0 %v6435
    %6565 = vmatprep.subr.bf16.mxu0 %v6438
    %6566 = vmatpush1.bf16.msra.mxu0 %v6437
    %6567 = vmatprep.subr.bf16.mxu0 %v6440
    %6568 = vmatpush1.bf16.msra.mxu0 %v6439
    %6569 = vmatprep.subr.bf16.mxu0 %v6442
    %6570 = vmatpush1.bf16.msra.mxu0 %v6441
    %6571 = vmatprep.subr.bf16.mxu0 %v6444
    %6572 = vmatpush1.bf16.msra.mxu0 %v6443
    %6573 = vmatprep.subr.bf16.mxu0 %v6446
    %6574 = vmatpush1.bf16.msra.mxu0 %v6445
    %6575 = vmatprep.subr.bf16.mxu0 %v6448
    %6576 = vmatpush1.bf16.msra.mxu0 %v6447
    %6577 = vmatprep.subr.bf16.mxu0 %v6450
    %6578 = vmatpush1.bf16.msra.mxu0 %v6449
    %6579 = vmatprep.subr.bf16.mxu0 %v6452
    %6580 = vmatpush1.bf16.msra.mxu0 %v6451
    %6581 = vmatprep.mubr.bf16.mxu0 %v6150
    %6582 = vmatmul.mubr.bf16.gmra.mrb[0].mxu0 %v6149
    %v6583 = vpop.f32.mrb[0].mxu0
    %v6584 = vadd.f32 %v6222, %v6583
    %v6585 = vpop.f32.mrb[0].mxu0
    %v6586 = vadd.f32 %v6226, %v6585
    %v6587 = vpop.f32.mrb[0].mxu0
    %v6588 = vpop.f32.mrb[0].mxu0
    %6589 = vdwg.mxu0
    %6590 = vmatprep.subr.bf16.mxu0 %v6454
    %6591 = vmatpush1.bf16.msra.mxu0 %v6453
    %6592 = vmatprep.subr.bf16.mxu0 %v6456
    %6593 = vmatpush1.bf16.msra.mxu0 %v6455
    %6594 = vmatprep.subr.bf16.mxu0 %v6458
    %6595 = vmatpush1.bf16.msra.mxu0 %v6457
    %6596 = vmatprep.subr.bf16.mxu0 %v6460
    %6597 = vmatpush1.bf16.msra.mxu0 %v6459
    %6598 = vmatprep.subr.bf16.mxu0 %v6462
    %6599 = vmatpush1.bf16.msra.mxu0 %v6461
    %6600 = vmatprep.subr.bf16.mxu0 %v6464
    %6601 = vmatpush1.bf16.msra.mxu0 %v6463
    %6602 = vmatprep.subr.bf16.mxu0 %v6466
    %6603 = vmatpush1.bf16.msra.mxu0 %v6465
    %6604 = vmatprep.subr.bf16.mxu0 %v6468
    %6605 = vmatpush1.bf16.msra.mxu0 %v6467
    %6606 = vmatprep.subr.bf16.mxu0 %v6470
    %6607 = vmatpush1.bf16.msra.mxu0 %v6469
    %6608 = vmatprep.subr.bf16.mxu0 %v6472
    %6609 = vmatpush1.bf16.msra.mxu0 %v6471
    %6610 = vmatprep.subr.bf16.mxu0 %v6474
    %6611 = vmatpush1.bf16.msra.mxu0 %v6473
    %6612 = vmatprep.subr.bf16.mxu0 %v6476
    %6613 = vmatpush1.bf16.msra.mxu0 %v6475
    %6614 = vmatprep.subr.bf16.mxu0 %v6478
    %6615 = vmatpush1.bf16.msra.mxu0 %v6477
    %6616 = vmatprep.subr.bf16.mxu0 %v6480
    %6617 = vmatpush1.bf16.msra.mxu0 %v6479
    %6618 = vmatprep.subr.bf16.mxu0 %v6482
    %6619 = vmatpush1.bf16.msra.mxu0 %v6481
    %6620 = vmatprep.subr.bf16.mxu0 %v6484
    %6621 = vmatpush1.bf16.msra.mxu0 %v6483
    %6622 = vmatprep.mubr.bf16.mxu0 %v6152
    %6623 = vmatmul.mubr.bf16.gmra.mrb[0].mxu0 %v6151
    %v6624 = vpop.f32.mrb[0].mxu0
    %v6625 = vadd.f32 %v6584, %v6624
    %v6626 = vpop.f32.mrb[0].mxu0
    %v6627 = vadd.f32 %v6586, %v6626
    %v6628 = vpop.f32.mrb[0].mxu0
    %v6629 = vpop.f32.mrb[0].mxu0
    %6630 = vdwg.mxu0
    %vm6631 = vcmp.ge.f32.partialorder %v6625, 0.0
    %vm6632 = vcmp.ge.f32.partialorder %v6627, 0.0
    %v6633 = vmul.f32 %v6625, 0.2
    %v6634 = vmul.f32 %v6627, 0.2
    %v6635 = vsel %vm6631, %v6625, %v6633
    %v6636 = vsel %vm6632, %v6627, %v6634
    %v6637 = vld [vmem:[#allocation18] sm:$0x3]
    %v6639 = vlaneseq
    %v6640 = vshrl.u32 %v6639, 7
    %v6641 = vsub.s32 0, %v6640
    %v6642 = vrot.slane %v6637, %v6641
    %v6643 = vlaneseq
    %v6644 = vshrl.u32 %v6643, 7
    %v6645 = vsub.s32 1, %v6644
    %v6646 = vrot.slane %v6637, %v6645
    %v6649 = vmul.f32 %v6635, %v6642
    %v6650 = vmul.f32 %v6636, %v6646
    %v6651 = vld [vmem:[#allocation19] sm:$0x3]
    %v6653 = vlaneseq
    %v6654 = vshrl.u32 %v6653, 7
    %v6655 = vsub.s32 0, %v6654
    %v6656 = vrot.slane %v6651, %v6655
    %v6657 = vlaneseq
    %v6658 = vshrl.u32 %v6657, 7
    %v6659 = vsub.s32 1, %v6658
    %v6660 = vrot.slane %v6651, %v6659
    %v6663 = vadd.f32 %v6649, %v6656
    %v6664 = vadd.f32 %v6650, %v6660
    %v6665 = vpack.c.bf16 %v6663, %v6663
    %v6666 = vpack.c.bf16 %v6664, %v6664
    %v6667 = vld [vmem:[#allocation21] sm:$0xf]
    %v6668 = vld [vmem:[#allocation21 + $0x4] sm:$0xf]
    %v6669 = vld [vmem:[#allocation21 + $0x8] sm:$0xf]
    %v6670 = vld [vmem:[#allocation21 + $0xc] sm:$0xf]
    %v6671 = vld [vmem:[#allocation21 + $0x10] sm:$0xf]
    %v6672 = vld [vmem:[#allocation21 + $0x14] sm:$0xf]
    %v6673 = vld [vmem:[#allocation21 + $0x18] sm:$0xf]
    %v6674 = vld [vmem:[#allocation21 + $0x1c] sm:$0xf]
    %v6675 = vld [vmem:[#allocation21 + $0x20] sm:$0xf]
    %v6676 = vld [vmem:[#allocation21 + $0x24] sm:$0xf]
    %v6677 = vld [vmem:[#allocation21 + $0x28] sm:$0xf]
    %v6678 = vld [vmem:[#allocation21 + $0x2c] sm:$0xf]
    %v6679 = vld [vmem:[#allocation21 + $0x30] sm:$0xf]
    %v6680 = vld [vmem:[#allocation21 + $0x34] sm:$0xf]
    %v6681 = vld [vmem:[#allocation21 + $0x38] sm:$0xf]
    %v6682 = vld [vmem:[#allocation21 + $0x3c] sm:$0xf]
    %v6683 = vld [vmem:[#allocation21 + $0x40] sm:$0xf]
    %v6684 = vld [vmem:[#allocation21 + $0x44] sm:$0xf]
    %v6685 = vld [vmem:[#allocation21 + $0x48] sm:$0xf]
    %v6686 = vld [vmem:[#allocation21 + $0x4c] sm:$0xf]
    %v6687 = vld [vmem:[#allocation21 + $0x50] sm:$0xf]
    %v6688 = vld [vmem:[#allocation21 + $0x54] sm:$0xf]
    %v6689 = vld [vmem:[#allocation21 + $0x58] sm:$0xf]
    %v6690 = vld [vmem:[#allocation21 + $0x5c] sm:$0xf]
    %v6691 = vld [vmem:[#allocation21 + $0x60] sm:$0xf]
    %v6692 = vld [vmem:[#allocation21 + $0x64] sm:$0xf]
    %v6693 = vld [vmem:[#allocation21 + $0x68] sm:$0xf]
    %v6694 = vld [vmem:[#allocation21 + $0x6c] sm:$0xf]
    %v6695 = vld [vmem:[#allocation21 + $0x70] sm:$0xf]
    %v6696 = vld [vmem:[#allocation21 + $0x74] sm:$0xf]
    %v6697 = vld [vmem:[#allocation21 + $0x78] sm:$0xf]
    %v6698 = vld [vmem:[#allocation21 + $0x7c] sm:$0xf]
    %v6699 = vld [vmem:[#allocation22] sm:$0x1]
    %v6701 = vlaneseq
    %v6702 = vshrl.u32 %v6701, 7
    %v6703 = vsub.s32 0, %v6702
    %v6704 = vrot.slane %v6699, %v6703
    %v6738 = vunpack.c.l.b16 %v6667
    %v6739 = vunpack.c.l.b16 %v6668
    %v6740 = vunpack.c.l.b16 %v6669
    %v6741 = vunpack.c.l.b16 %v6670
    %v6742 = vunpack.c.l.b16 %v6671
    %v6743 = vunpack.c.l.b16 %v6672
    %v6744 = vunpack.c.l.b16 %v6673
    %v6745 = vunpack.c.l.b16 %v6674
    %v6746 = vunpack.c.l.b16 %v6675
    %v6747 = vunpack.c.l.b16 %v6676
    %v6748 = vunpack.c.l.b16 %v6677
    %v6749 = vunpack.c.l.b16 %v6678
    %v6750 = vunpack.c.l.b16 %v6679
    %v6751 = vunpack.c.l.b16 %v6680
    %v6752 = vunpack.c.l.b16 %v6681
    %v6753 = vunpack.c.l.b16 %v6682
    %v6754 = vunpack.c.l.b16 %v6683
    %v6755 = vunpack.c.l.b16 %v6684
    %v6756 = vunpack.c.l.b16 %v6685
    %v6757 = vunpack.c.l.b16 %v6686
    %v6758 = vunpack.c.l.b16 %v6687
    %v6759 = vunpack.c.l.b16 %v6688
    %v6760 = vunpack.c.l.b16 %v6689
    %v6761 = vunpack.c.l.b16 %v6690
    %v6762 = vunpack.c.l.b16 %v6691
    %v6763 = vunpack.c.l.b16 %v6692
    %v6764 = vunpack.c.l.b16 %v6693
    %v6765 = vunpack.c.l.b16 %v6694
    %v6766 = vunpack.c.l.b16 %v6695
    %v6767 = vunpack.c.l.b16 %v6696
    %v6768 = vunpack.c.l.b16 %v6697
    %v6769 = vunpack.c.l.b16 %v6698
    %v6770 = vpack.c.b16 %v6739, %v6738
    %v6771 = vpack.c.b16 %v6741, %v6740
    %v6772 = vpack.c.b16 %v6743, %v6742
    %v6773 = vpack.c.b16 %v6745, %v6744
    %v6774 = vpack.c.b16 %v6747, %v6746
    %v6775 = vpack.c.b16 %v6749, %v6748
    %v6776 = vpack.c.b16 %v6751, %v6750
    %v6777 = vpack.c.b16 %v6753, %v6752
    %v6778 = vpack.c.b16 %v6755, %v6754
    %v6779 = vpack.c.b16 %v6757, %v6756
    %v6780 = vpack.c.b16 %v6759, %v6758
    %v6781 = vpack.c.b16 %v6761, %v6760
    %v6782 = vpack.c.b16 %v6763, %v6762
    %v6783 = vpack.c.b16 %v6765, %v6764
    %v6784 = vpack.c.b16 %v6767, %v6766
    %v6785 = vpack.c.b16 %v6769, %v6768
    %6802 = vmatprep.subr.bf16.mxu0 0
    %6803 = vmatpush1.bf16.msra.mxu0 %v6770
    %6804 = vmatprep.subr.bf16.mxu0 0
    %6805 = vmatpush1.bf16.msra.mxu0 %v6771
    %6806 = vmatprep.subr.bf16.mxu0 0
    %6807 = vmatpush1.bf16.msra.mxu0 %v6772
    %6808 = vmatprep.subr.bf16.mxu0 0
    %6809 = vmatpush1.bf16.msra.mxu0 %v6773
    %6810 = vmatprep.subr.bf16.mxu0 0
    %6811 = vmatpush1.bf16.msra.mxu0 %v6774
    %6812 = vmatprep.subr.bf16.mxu0 0
    %6813 = vmatpush1.bf16.msra.mxu0 %v6775
    %6814 = vmatprep.subr.bf16.mxu0 0
    %6815 = vmatpush1.bf16.msra.mxu0 %v6776
    %6816 = vmatprep.subr.bf16.mxu0 0
    %6817 = vmatpush1.bf16.msra.mxu0 %v6777
    %6818 = vmatprep.subr.bf16.mxu0 0
    %6819 = vmatpush1.bf16.msra.mxu0 %v6778
    %6820 = vmatprep.subr.bf16.mxu0 0
    %6821 = vmatpush1.bf16.msra.mxu0 %v6779
    %6822 = vmatprep.subr.bf16.mxu0 0
    %6823 = vmatpush1.bf16.msra.mxu0 %v6780
    %6824 = vmatprep.subr.bf16.mxu0 0
    %6825 = vmatpush1.bf16.msra.mxu0 %v6781
    %6826 = vmatprep.subr.bf16.mxu0 0
    %6827 = vmatpush1.bf16.msra.mxu0 %v6782
    %6828 = vmatprep.subr.bf16.mxu0 0
    %6829 = vmatpush1.bf16.msra.mxu0 %v6783
    %6830 = vmatprep.subr.bf16.mxu0 0
    %6831 = vmatpush1.bf16.msra.mxu0 %v6784
    %6832 = vmatprep.subr.bf16.mxu0 0
    %6833 = vmatpush1.bf16.msra.mxu0 %v6785
    %6834 = vmatprep.mubr.bf16.mxu0 %v6666
    %6835 = vmatmul.mubr.bf16.gmra.mrb[0].mxu0 %v6665
    %v6836 = vpop.f32.mrb[0].mxu0
    %v6837 = vadd.f32 %v6704, %v6836
    %v6838 = vpop.f32.mrb[0].mxu0
    %v6839 = vpop.f32.mrb[0].mxu0
    %v6840 = vpop.f32.mrb[0].mxu0
    %6841 = vdwg.mxu0
    %vm6842 = vcmp.ge.f32.partialorder %v6837, 0.0
    %v6843 = vmul.f32 %v6837, 0.2
    %v6844 = vsel %vm6842, %v6837, %v6843
    %v6845 = vld [vmem:[#allocation24] sm:$0x1]
    %v6847 = vlaneseq
    %v6848 = vshrl.u32 %v6847, 7
    %v6849 = vsub.s32 0, %v6848
    %v6850 = vrot.slane %v6845, %v6849
    %v6852 = vmul.f32 %v6844, %v6850
    %v6853 = vld [vmem:[#allocation25] sm:$0x1]
    %v6855 = vlaneseq
    %v6856 = vshrl.u32 %v6855, 7
    %v6857 = vsub.s32 0, %v6856
    %v6858 = vrot.slane %v6853, %v6857
    %v6860 = vadd.f32 %v6852, %v6858
    %v6861 = vpack.c.bf16 %v6860, %v6860
    %v6862 = vld [vmem:[#allocation27] sm:$0xf]
    %v6863 = vld [vmem:[#allocation27 + $0x4] sm:$0xf]
    %v6864 = vld [vmem:[#allocation27 + $0x8] sm:$0xf]
    %v6865 = vld [vmem:[#allocation27 + $0xc] sm:$0xf]
    %v6866 = vld [vmem:[#allocation27 + $0x10] sm:$0xf]
    %v6867 = vld [vmem:[#allocation27 + $0x14] sm:$0xf]
    %v6868 = vld [vmem:[#allocation27 + $0x18] sm:$0xf]
    %v6869 = vld [vmem:[#allocation27 + $0x1c] sm:$0xf]
    %v6870 = vld [vmem:[#allocation27 + $0x20] sm:$0xf]
    %v6871 = vld [vmem:[#allocation27 + $0x24] sm:$0xf]
    %v6872 = vld [vmem:[#allocation27 + $0x28] sm:$0xf]
    %v6873 = vld [vmem:[#allocation27 + $0x2c] sm:$0xf]
    %v6874 = vld [vmem:[#allocation27 + $0x30] sm:$0xf]
    %v6875 = vld [vmem:[#allocation27 + $0x34] sm:$0xf]
    %v6876 = vld [vmem:[#allocation27 + $0x38] sm:$0xf]
    %v6877 = vld [vmem:[#allocation27 + $0x3c] sm:$0xf]
    %v6878 = vld [vmem:[#allocation28] sm:$0x1]
    %v6880 = vlaneseq
    %v6881 = vshrl.u32 %v6880, 7
    %v6882 = vsub.s32 0, %v6881
    %v6883 = vrot.slane %v6878, %v6882
    %v6901 = vunpack.c.l.b16 %v6862
    %v6902 = vunpack.c.l.b16 %v6863
    %v6903 = vunpack.c.l.b16 %v6864
    %v6904 = vunpack.c.l.b16 %v6865
    %v6905 = vunpack.c.l.b16 %v6866
    %v6906 = vunpack.c.l.b16 %v6867
    %v6907 = vunpack.c.l.b16 %v6868
    %v6908 = vunpack.c.l.b16 %v6869
    %v6909 = vunpack.c.l.b16 %v6870
    %v6910 = vunpack.c.l.b16 %v6871
    %v6911 = vunpack.c.l.b16 %v6872
    %v6912 = vunpack.c.l.b16 %v6873
    %v6913 = vunpack.c.l.b16 %v6874
    %v6914 = vunpack.c.l.b16 %v6875
    %v6915 = vunpack.c.l.b16 %v6876
    %v6916 = vunpack.c.l.b16 %v6877
    %v6917 = vpack.c.b16 %v6902, %v6901
    %v6918 = vpack.c.b16 %v6904, %v6903
    %v6919 = vpack.c.b16 %v6906, %v6905
    %v6920 = vpack.c.b16 %v6908, %v6907
    %v6921 = vpack.c.b16 %v6910, %v6909
    %v6922 = vpack.c.b16 %v6912, %v6911
    %v6923 = vpack.c.b16 %v6914, %v6913
    %v6924 = vpack.c.b16 %v6916, %v6915
    %6933 = vmatprep.subr.bf16.mxu0 0
    %6934 = vmatpush1.bf16.msra.mxu0 %v6917
    %6935 = vmatprep.subr.bf16.mxu0 0
    %6936 = vmatpush1.bf16.msra.mxu0 %v6918
    %6937 = vmatprep.subr.bf16.mxu0 0
    %6938 = vmatpush1.bf16.msra.mxu0 %v6919
    %6939 = vmatprep.subr.bf16.mxu0 0
    %6940 = vmatpush1.bf16.msra.mxu0 %v6920
    %6941 = vmatprep.subr.bf16.mxu0 0
    %6942 = vmatpush1.bf16.msra.mxu0 %v6921
    %6943 = vmatprep.subr.bf16.mxu0 0
    %6944 = vmatpush1.bf16.msra.mxu0 %v6922
    %6945 = vmatprep.subr.bf16.mxu0 0
    %6946 = vmatpush1.bf16.msra.mxu0 %v6923
    %6947 = vmatprep.subr.bf16.mxu0 0
    %6948 = vmatpush1.bf16.msra.mxu0 %v6924
    %6949 = vmatprep.subr.bf16.mxu0 0
    %6950 = vmatpush1.bf16.msra.mxu0 0
    %6951 = vmatprep.subr.bf16.mxu0 0
    %6952 = vmatpush1.bf16.msra.mxu0 0
    %6953 = vmatprep.subr.bf16.mxu0 0
    %6954 = vmatpush1.bf16.msra.mxu0 0
    %6955 = vmatprep.subr.bf16.mxu0 0
    %6956 = vmatpush1.bf16.msra.mxu0 0
    %6957 = vmatprep.subr.bf16.mxu0 0
    %6958 = vmatpush1.bf16.msra.mxu0 0
    %6959 = vmatprep.subr.bf16.mxu0 0
    %6960 = vmatpush1.bf16.msra.mxu0 0
    %6961 = vmatprep.subr.bf16.mxu0 0
    %6962 = vmatpush1.bf16.msra.mxu0 0
    %6963 = vmatprep.subr.bf16.mxu0 0
    %6964 = vmatpush1.bf16.msra.mxu0 0
    %6965 = vmatprep.mubr.bf16.mxu0 0
    %6966 = vmatmul.mubr.bf16.gmra.mrb[0].mxu0 %v6861
    %v6967 = vpop.f32.mrb[0].mxu0
    %v6968 = vadd.f32 %v6883, %v6967
    %v6969 = vpop.f32.mrb[0].mxu0
    %v6970 = vpop.f32.mrb[0].mxu0
    %v6971 = vpop.f32.mrb[0].mxu0
    %6972 = vdwg.mxu0
    %v6973 = vlaneseq
    %v6974 = vand.u32 %v6973, 127
    %vm6975 = vcmp.ge.s32.totalorder %v6974, 1
    %vm6976 = vcmp.le.s32.totalorder %v6974, 10
    %vm6977 = vmand %vm6975, %vm6976
    %v6978 = vsel %vm6977, %v6968, -inf
    %6979 = vmax.xlane.f32.xlu0 %v6978
    %v6980 = vpop.xlane.xlu0 %6979
    %v6981 = vsub.f32 %v6978, %v6980
    %v6982 = vmul.f32 %v6981, 1.442695
    %v6983 = vpow.pop %v6982
    %6984 = vadd.xlane.f32.xlu0 %v6983
    %v6985 = vpop.xlane.xlu0 %6984
    %v6986 = vrcp.pop %v6985
    %v6987 = vmul.f32 %v6983, %v6986
    %v6988 = vsub.f32 0.0, %v6968
    %v6989 = vmul.f32 %v6988, 1.442695
    %v6990 = vpow.pop %v6989
    %v6991 = vadd.f32 %v6990, 1.0
    %v6992 = vrcp.pop %v6991
    %v6993 = vmul.f32 1.0, %v6992
    %vm6994 = vcmp.eq.s32.totalorder %v6974, 0
    %v6995 = vsel %vm6994, %v6993, %v6987
    %6996 = vst [vmem:[%s19] sm:$0xff] %v6995
    // Predicated region
    $region150: #{ac_discriminator_forward.1} parent=1 // pred_check
      _
    $region151: #{ac_discriminator_forward.1} parent=1 // pred_check_branch
      %6998 = sbr.rel (0) target = $region153
    $region152: #{ac_discriminator_forward.1} parent=1 // pred_region
      _
    $region153: #{ac_discriminator_forward.1} parent=1 // pred_fallthru
      _
    // Predicated region
    $region154: #{ac_discriminator_forward.1} parent=1 // pred_check
      _
    $region155: #{ac_discriminator_forward.1} parent=1 // pred_check_branch
      %7000 = sbr.rel (0) target = $region157
    $region156: #{ac_discriminator_forward.1} parent=1 // pred_region
      _
    $region157: #{ac_discriminator_forward.1} parent=1 // pred_fallthru
      _
    %7001 = vsyncpa [#allocation3], 1
    %7002 = vsyncpa [#allocation5], 1
    %7003 = vsyncpa [#allocation8], 1
    %7004 = vsyncpa [#allocation11], 1
    %7005 = vsyncpa [#allocation14], 1
    %7006 = vsyncpa [#allocation17], 1
    %7007 = vsyncpa [#allocation20], 1
    %7008 = vsyncpa [#allocation23], 1
    %7009 = vsyncpa [#allocation26], 1
    %7010 = vsyncpa [#allocation29], 1

</llo_original>
